<compile_context>
chip_gen: v6e
topology: v6e:2x2x1
jax: 0.10.0
libtpu: 0.0.40
codegen_flags: <defaults>
</compile_context>

<pallas_src>
import math
import jax
import jax.numpy as jnp
from jax import lax
from jax.experimental import pallas as pl
from jax.experimental.pallas import tpu as pltpu


def _round_up(x, m):
    return ((x + m - 1) // m) * m


def _pick_row_tile(h):
    # Rows of output computed per grid step (must divide H for clean blocking).
    for t in (8, 4, 2, 1):
        if h % t == 0:
            return t
    return 1


# ----------------------------------------------------------------------------
# Pallas kernel: fused 3x3 conv (in-kernel tap expansion) + concat + bias
# ----------------------------------------------------------------------------
def _make_conv3x3_kernel(TH, W, C, Cout):
    nrow = TH + 2  # padded input rows needed for TH output rows

    def kernel(*refs):
        # refs = [x1 rows]*(TH+2) + [x2 rows]*(TH+2) + [weights, bias, out]
        x1_rows = refs[:nrow]
        x2_rows = refs[nrow:2 * nrow]
        w_ref = refs[2 * nrow]          # (18, C, Cout) bf16, VMEM-resident
        b_ref = refs[2 * nrow + 1]      # (1, Cout) f32
        o_ref = refs[2 * nrow + 2]      # (TH, W, Cout)

        acc = jnp.zeros((TH * W, Cout), jnp.float32)
        # Two input halves = the two halves of K (fused torch.cat).
        for m, rows in enumerate((x1_rows, x2_rows)):
            # (TH+2, W+2, C): all padded rows this step needs, kept in vregs.
            xs = jnp.stack([r[...] for r in rows], axis=0)
            for di in range(3):                       # row taps
                xdi = xs[di:di + TH]                  # (TH, W+2, C)
                for dj in range(3):                   # column taps
                    a = xdi[:, dj:dj + W, :].reshape(TH * W, C)
                    wk = w_ref[m * 9 + di * 3 + dj]   # (C, Cout)
                    acc = acc + jnp.dot(a, wk, preferred_element_type=jnp.float32)
        out = acc + b_ref[...]                        # fused bias epilogue
        o_ref[...] = out.reshape(TH, W, Cout).astype(o_ref.dtype)

    return kernel


def _conv3x3_nhwc_pallas(xp1, xp2, wmat, bias2d, H, W, C, Cout):
    """xp1/xp2: (N, H+2, W+2, C) bf16 spatially padded NHWC halves.
    wmat: (18, C, Cout) bf16 (rows = [x1 taps ; x2 taps], tap = di*3+dj).
    bias2d: (1, Cout) f32. Returns (N, H, W, Cout) f32."""
    N = xp1.shape[0]
    TH = _pick_row_tile(H)
    nrow = TH + 2
    grid = (N, H // TH)

    def row_spec(r):
        # One padded input row per ref; block index == element row index
        # (size-1 squeezed dims), so the +r halo shift is exact.
        return pl.BlockSpec((None, None, W + 2, C),
                            lambda n, rb, r=r: (n, rb * TH + r, 0, 0))

    in_specs = (
        [row_spec(r) for r in range(nrow)]            # x1 rows
        + [row_spec(r) for r in range(nrow)]          # x2 rows
        + [pl.BlockSpec((18, C, Cout), lambda n, rb: (0, 0, 0)),   # weights (resident)
           pl.BlockSpec((1, Cout), lambda n, rb: (0, 0))]          # bias
    )
    out_specs = pl.BlockSpec((None, TH, W, Cout), lambda n, rb: (n, rb, 0, 0))

    # VMEM budget from the real (lane-padded) working set, with headroom.
    c_l, co_l = _round_up(C, 128), _round_up(Cout, 128)
    row_blk = _round_up(W + 2, 8) * c_l * 2                 # one bf16 activation row
    act_bytes = 2 * (2 * nrow) * row_blk                    # halves x refs x dbl-buf
    w_bytes = 2 * 18 * _round_up(C, 8) * co_l * 2
    b_bytes = 2 * 8 * co_l * 4
    o_bytes = 2 * TH * _round_up(W, 8) * co_l * 4
    work = act_bytes + w_bytes + b_bytes + o_bytes
    vmem_limit = int(min(max(4 * work + (1 << 20), 8 << 20), 48 << 20))

    kernel = _make_conv3x3_kernel(TH, W, C, Cout)
    return pl.pallas_call(
        kernel,
        out_shape=jax.ShapeDtypeStruct((N, H, W, Cout), jnp.float32),
        grid=grid,
        in_specs=in_specs,
        out_specs=out_specs,
        compiler_params=pltpu.CompilerParams(
            dimension_semantics=("parallel", "parallel"),
            vmem_limit_bytes=vmem_limit),
    )(*([xp1] * nrow + [xp2] * nrow + [wmat, bias2d]))


# ----------------------------------------------------------------------------
# FAM module
# ----------------------------------------------------------------------------
def make_fam(key, channel):
    # BasicConv(channel*2, channel, k=3, stride=1, bias=True, norm=False, relu=False)
    cin, cout, k = channel * 2, channel, 3
    k1, k2 = jax.random.split(key)
    bound = 1.0 / math.sqrt(cin * k * k)   # PyTorch Conv2d default init range
    return {'w': jax.random.uniform(k1, (cout, cin, k, k), jnp.float32, -bound, bound),
            'b': jax.random.uniform(k2, (cout,), jnp.float32, -bound, bound)}


def _prep_weights(w, b, channel):
    # (Cout, 2C, 3, 3) -> (18, C, Cout): first 9 rows for x1's channels,
    # next 9 for x2's channels, tap index = di*3 + dj, matching the kernel.
    Cout = w.shape[0]
    C = channel
    wt = jnp.transpose(w, (2, 3, 1, 0))                 # (3, 3, 2C, Cout)
    w1 = wt[:, :, :C, :].reshape(9, C, Cout)
    w2 = wt[:, :, C:, :].reshape(9, C, Cout)
    wmat = jnp.concatenate([w1, w2], axis=0).astype(jnp.bfloat16)
    bias2d = b.astype(jnp.float32).reshape(1, Cout)
    return wmat, bias2d


@jax.jit
def fam_forward_nhwc(params, x1_nhwc, x2_nhwc):
    """Transpose-free NHWC entry point (preferred when the surrounding net is NHWC)."""
    N, H, W, C = x1_nhwc.shape
    Cout = params['w'].shape[0]
    wmat, bias2d = _prep_weights(params['w'], params['b'], C)

    def prep(x):  # bf16 cast BEFORE any expansion + single fused pad pass
        return jnp.pad(x.astype(jnp.bfloat16), ((0, 0), (1, 1), (1, 1), (0, 0)))

    return _conv3x3_nhwc_pallas(prep(x1_nhwc), prep(x2_nhwc), wmat, bias2d, H, W, C, Cout)


@jax.jit
def fam_forward(params, x1, x2):
    """PyTorch-parity interface: NCHW in / NCHW out (one boundary transpose each way)."""
    x1h = jnp.transpose(x1, (0, 2, 3, 1))
    x2h = jnp.transpose(x2, (0, 2, 3, 1))
    out = fam_forward_nhwc(params, x1h, x2h)
    return jnp.transpose(out, (0, 3, 1, 2))


# Pure-JAX reference (numerical sanity check of the Pallas path)
@jax.jit
def fam_reference(params, x1, x2):
    x = jnp.concatenate([x1, x2], axis=1)
    out = lax.conv_general_dilated(
        x, params['w'], window_strides=(1, 1), padding=((1, 1), (1, 1)),
        dimension_numbers=('NCHW', 'OIHW', 'NCHW'))
    return out + params['b'].reshape(1, -1, 1, 1)


# ----------------------------------------------------------------------------
if __name__ == "__main__":
    key = jax.random.PRNGKey(0)
    kp, k1, k2 = jax.random.split(key, 3)

    channel = 4
    params = make_fam(kp, channel)
    x1 = jax.random.normal(k1, (2, channel, 16, 16), dtype=jnp.float32)
    x2 = jax.random.normal(k2, (2, channel, 16, 16), dtype=jnp.float32)

    out = jax.block_until_ready(fam_forward(params, x1, x2))
    assert out.shape == (2, channel, 16, 16)
    assert bool(jnp.all(jnp.isfinite(out)))

    ref = jax.block_until_ready(fam_reference(params, x1, x2))
    # Note: activations/weights run through the MXU in bf16 (f32 accumulation),
    # so parity with PyTorch's f32 conv is within ~1e-2 relative.
    max_err = float(jnp.max(jnp.abs(out - ref)))
    assert max_err < 5e-2, f"max abs err vs reference: {max_err}"

    print("KERNEL_OK")
</pallas_src>

<mosaic_0001>
module attributes {stable_mosaic.version = 11 : i64} {
  func.func @kernel(%arg0: i32, %arg1: i32, %arg2: memref<1x1x18x4xbf16, #tpu.memory_space<vmem>>, %arg3: memref<1x1x18x4xbf16, #tpu.memory_space<vmem>>, %arg4: memref<1x1x18x4xbf16, #tpu.memory_space<vmem>>, %arg5: memref<1x1x18x4xbf16, #tpu.memory_space<vmem>>, %arg6: memref<1x1x18x4xbf16, #tpu.memory_space<vmem>>, %arg7: memref<1x1x18x4xbf16, #tpu.memory_space<vmem>>, %arg8: memref<1x1x18x4xbf16, #tpu.memory_space<vmem>>, %arg9: memref<1x1x18x4xbf16, #tpu.memory_space<vmem>>, %arg10: memref<1x1x18x4xbf16, #tpu.memory_space<vmem>>, %arg11: memref<1x1x18x4xbf16, #tpu.memory_space<vmem>>, %arg12: memref<1x1x18x4xbf16, #tpu.memory_space<vmem>>, %arg13: memref<1x1x18x4xbf16, #tpu.memory_space<vmem>>, %arg14: memref<1x1x18x4xbf16, #tpu.memory_space<vmem>>, %arg15: memref<1x1x18x4xbf16, #tpu.memory_space<vmem>>, %arg16: memref<1x1x18x4xbf16, #tpu.memory_space<vmem>>, %arg17: memref<1x1x18x4xbf16, #tpu.memory_space<vmem>>, %arg18: memref<1x1x18x4xbf16, #tpu.memory_space<vmem>>, %arg19: memref<1x1x18x4xbf16, #tpu.memory_space<vmem>>, %arg20: memref<1x1x18x4xbf16, #tpu.memory_space<vmem>>, %arg21: memref<1x1x18x4xbf16, #tpu.memory_space<vmem>>, %arg22: memref<18x4x4xbf16, #tpu.memory_space<vmem>>, %arg23: memref<1x4xf32, #tpu.memory_space<vmem>>, %arg24: memref<1x8x16x4xf32, #tpu.memory_space<vmem>>) attributes {dimension_semantics = [#tpu.dimension_semantics<parallel>, #tpu.dimension_semantics<parallel>], iteration_bounds = array<i64: 2, 2>, scalar_prefetch = 0 : i64, scratch_operands = 0 : i64, tpu.core_type = #tpu.core_type<tc>, window_params = [{transform_indices = @transform_0, window_bounds = array<i64: 1, 1, 18, 4>}, {transform_indices = @transform_1, window_bounds = array<i64: 1, 1, 18, 4>}, {transform_indices = @transform_2, window_bounds = array<i64: 1, 1, 18, 4>}, {transform_indices = @transform_3, window_bounds = array<i64: 1, 1, 18, 4>}, {transform_indices = @transform_4, window_bounds = array<i64: 1, 1, 18, 4>}, {transform_indices = @transform_5, window_bounds = array<i64: 1, 1, 18, 4>}, {transform_indices = @transform_6, window_bounds = array<i64: 1, 1, 18, 4>}, {transform_indices = @transform_7, window_bounds = array<i64: 1, 1, 18, 4>}, {transform_indices = @transform_8, window_bounds = array<i64: 1, 1, 18, 4>}, {transform_indices = @transform_9, window_bounds = array<i64: 1, 1, 18, 4>}, {transform_indices = @transform_10, window_bounds = array<i64: 1, 1, 18, 4>}, {transform_indices = @transform_11, window_bounds = array<i64: 1, 1, 18, 4>}, {transform_indices = @transform_12, window_bounds = array<i64: 1, 1, 18, 4>}, {transform_indices = @transform_13, window_bounds = array<i64: 1, 1, 18, 4>}, {transform_indices = @transform_14, window_bounds = array<i64: 1, 1, 18, 4>}, {transform_indices = @transform_15, window_bounds = array<i64: 1, 1, 18, 4>}, {transform_indices = @transform_16, window_bounds = array<i64: 1, 1, 18, 4>}, {transform_indices = @transform_17, window_bounds = array<i64: 1, 1, 18, 4>}, {transform_indices = @transform_18, window_bounds = array<i64: 1, 1, 18, 4>}, {transform_indices = @transform_19, window_bounds = array<i64: 1, 1, 18, 4>}, {pipeline_mode = #tpu.pipeline_mode<synchronous>, transform_indices = @transform_20, window_bounds = array<i64: 18, 4, 4>}, {pipeline_mode = #tpu.pipeline_mode<synchronous>, transform_indices = @transform_21, window_bounds = array<i64: 1, 4>}, {transform_indices = @transform_22, window_bounds = array<i64: 1, 8, 16, 4>}]} {
    %cst = arith.constant 0.000000e+00 : f32
    %0 = vector.broadcast %cst : f32 to vector<128x4xf32>
    %c0 = arith.constant 0 : index
    %c0_0 = arith.constant 0 : index
    %c0_1 = arith.constant 0 : index
    %c0_2 = arith.constant 0 : index
    %1 = vector.load %arg2[%c0, %c0_0, %c0_1, %c0_2] : memref<1x1x18x4xbf16, #tpu.memory_space<vmem>>, vector<1x1x18x4xbf16>
    %2 = vector.shape_cast %1 : vector<1x1x18x4xbf16> to vector<18x4xbf16>
    %c0_3 = arith.constant 0 : index
    %c0_4 = arith.constant 0 : index
    %c0_5 = arith.constant 0 : index
    %c0_6 = arith.constant 0 : index
    %3 = vector.load %arg3[%c0_3, %c0_4, %c0_5, %c0_6] : memref<1x1x18x4xbf16, #tpu.memory_space<vmem>>, vector<1x1x18x4xbf16>
    %4 = vector.shape_cast %3 : vector<1x1x18x4xbf16> to vector<18x4xbf16>
    %c0_7 = arith.constant 0 : index
    %c0_8 = arith.constant 0 : index
    %c0_9 = arith.constant 0 : index
    %c0_10 = arith.constant 0 : index
    %5 = vector.load %arg4[%c0_7, %c0_8, %c0_9, %c0_10] : memref<1x1x18x4xbf16, #tpu.memory_space<vmem>>, vector<1x1x18x4xbf16>
    %6 = vector.shape_cast %5 : vector<1x1x18x4xbf16> to vector<18x4xbf16>
    %c0_11 = arith.constant 0 : index
    %c0_12 = arith.constant 0 : index
    %c0_13 = arith.constant 0 : index
    %c0_14 = arith.constant 0 : index
    %7 = vector.load %arg5[%c0_11, %c0_12, %c0_13, %c0_14] : memref<1x1x18x4xbf16, #tpu.memory_space<vmem>>, vector<1x1x18x4xbf16>
    %8 = vector.shape_cast %7 : vector<1x1x18x4xbf16> to vector<18x4xbf16>
    %c0_15 = arith.constant 0 : index
    %c0_16 = arith.constant 0 : index
    %c0_17 = arith.constant 0 : index
    %c0_18 = arith.constant 0 : index
    %9 = vector.load %arg6[%c0_15, %c0_16, %c0_17, %c0_18] : memref<1x1x18x4xbf16, #tpu.memory_space<vmem>>, vector<1x1x18x4xbf16>
    %10 = vector.shape_cast %9 : vector<1x1x18x4xbf16> to vector<18x4xbf16>
    %c0_19 = arith.constant 0 : index
    %c0_20 = arith.constant 0 : index
    %c0_21 = arith.constant 0 : index
    %c0_22 = arith.constant 0 : index
    %11 = vector.load %arg7[%c0_19, %c0_20, %c0_21, %c0_22] : memref<1x1x18x4xbf16, #tpu.memory_space<vmem>>, vector<1x1x18x4xbf16>
    %12 = vector.shape_cast %11 : vector<1x1x18x4xbf16> to vector<18x4xbf16>
    %c0_23 = arith.constant 0 : index
    %c0_24 = arith.constant 0 : index
    %c0_25 = arith.constant 0 : index
    %c0_26 = arith.constant 0 : index
    %13 = vector.load %arg8[%c0_23, %c0_24, %c0_25, %c0_26] : memref<1x1x18x4xbf16, #tpu.memory_space<vmem>>, vector<1x1x18x4xbf16>
    %14 = vector.shape_cast %13 : vector<1x1x18x4xbf16> to vector<18x4xbf16>
    %c0_27 = arith.constant 0 : index
    %c0_28 = arith.constant 0 : index
    %c0_29 = arith.constant 0 : index
    %c0_30 = arith.constant 0 : index
    %15 = vector.load %arg9[%c0_27, %c0_28, %c0_29, %c0_30] : memref<1x1x18x4xbf16, #tpu.memory_space<vmem>>, vector<1x1x18x4xbf16>
    %16 = vector.shape_cast %15 : vector<1x1x18x4xbf16> to vector<18x4xbf16>
    %c0_31 = arith.constant 0 : index
    %c0_32 = arith.constant 0 : index
    %c0_33 = arith.constant 0 : index
    %c0_34 = arith.constant 0 : index
    %17 = vector.load %arg10[%c0_31, %c0_32, %c0_33, %c0_34] : memref<1x1x18x4xbf16, #tpu.memory_space<vmem>>, vector<1x1x18x4xbf16>
    %18 = vector.shape_cast %17 : vector<1x1x18x4xbf16> to vector<18x4xbf16>
    %c0_35 = arith.constant 0 : index
    %c0_36 = arith.constant 0 : index
    %c0_37 = arith.constant 0 : index
    %c0_38 = arith.constant 0 : index
    %19 = vector.load %arg11[%c0_35, %c0_36, %c0_37, %c0_38] : memref<1x1x18x4xbf16, #tpu.memory_space<vmem>>, vector<1x1x18x4xbf16>
    %20 = vector.shape_cast %19 : vector<1x1x18x4xbf16> to vector<18x4xbf16>
    %21 = vector.shape_cast %2 : vector<18x4xbf16> to vector<1x18x4xbf16>
    %22 = vector.shape_cast %4 : vector<18x4xbf16> to vector<1x18x4xbf16>
    %23 = vector.shape_cast %6 : vector<18x4xbf16> to vector<1x18x4xbf16>
    %24 = vector.shape_cast %8 : vector<18x4xbf16> to vector<1x18x4xbf16>
    %25 = vector.shape_cast %10 : vector<18x4xbf16> to vector<1x18x4xbf16>
    %26 = vector.shape_cast %12 : vector<18x4xbf16> to vector<1x18x4xbf16>
    %27 = vector.shape_cast %14 : vector<18x4xbf16> to vector<1x18x4xbf16>
    %28 = vector.shape_cast %16 : vector<18x4xbf16> to vector<1x18x4xbf16>
    %29 = vector.shape_cast %18 : vector<18x4xbf16> to vector<1x18x4xbf16>
    %30 = vector.shape_cast %20 : vector<18x4xbf16> to vector<1x18x4xbf16>
    %31 = tpu.concatenate %21, %22, %23, %24, %25, %26, %27, %28, %29, %30 in 0 : vector<1x18x4xbf16>, vector<1x18x4xbf16>, vector<1x18x4xbf16>, vector<1x18x4xbf16>, vector<1x18x4xbf16>, vector<1x18x4xbf16>, vector<1x18x4xbf16>, vector<1x18x4xbf16>, vector<1x18x4xbf16>, vector<1x18x4xbf16> -> vector<10x18x4xbf16>
    %32 = vector.extract_strided_slice %31 {offsets = [0, 0, 0], sizes = [8, 18, 4], strides = [1, 1, 1]} : vector<10x18x4xbf16> to vector<8x18x4xbf16>
    %33 = vector.extract_strided_slice %32 {offsets = [0, 0, 0], sizes = [8, 16, 4], strides = [1, 1, 1]} : vector<8x18x4xbf16> to vector<8x16x4xbf16>
    %34 = vector.shape_cast %33 : vector<8x16x4xbf16> to vector<128x4xbf16>
    %c0_39 = arith.constant 0 : index
    %c0_40 = arith.constant 0 : index
    %c0_41 = arith.constant 0 : index
    %35 = vector.load %arg22[%c0_39, %c0_40, %c0_41] : memref<18x4x4xbf16, #tpu.memory_space<vmem>>, vector<1x4x4xbf16>
    %36 = vector.shape_cast %35 : vector<1x4x4xbf16> to vector<4x4xbf16>
    %cst_42 = arith.constant dense<0.000000e+00> : vector<128x4xf32>
    %37 = tpu.matmul %34, %36, %cst_42 {dimension_numbers = #tpu.dot_dimension_numbers<[1], [0], [0], [1], [0, 0, 1, 1], [], []>} : vector<128x4xbf16>, vector<4x4xbf16>, vector<128x4xf32> -> vector<128x4xf32>
    %38 = arith.addf %0, %37 : vector<128x4xf32>
    %39 = vector.extract_strided_slice %32 {offsets = [0, 1, 0], sizes = [8, 16, 4], strides = [1, 1, 1]} : vector<8x18x4xbf16> to vector<8x16x4xbf16>
    %40 = vector.shape_cast %39 : vector<8x16x4xbf16> to vector<128x4xbf16>
    %c1 = arith.constant 1 : index
    %c0_43 = arith.constant 0 : index
    %c0_44 = arith.constant 0 : index
    %41 = vector.load %arg22[%c1, %c0_43, %c0_44] : memref<18x4x4xbf16, #tpu.memory_space<vmem>>, vector<1x4x4xbf16>
    %42 = vector.shape_cast %41 : vector<1x4x4xbf16> to vector<4x4xbf16>
    %cst_45 = arith.constant dense<0.000000e+00> : vector<128x4xf32>
    %43 = tpu.matmul %40, %42, %cst_45 {dimension_numbers = #tpu.dot_dimension_numbers<[1], [0], [0], [1], [0, 0, 1, 1], [], []>} : vector<128x4xbf16>, vector<4x4xbf16>, vector<128x4xf32> -> vector<128x4xf32>
    %44 = arith.addf %38, %43 : vector<128x4xf32>
    %45 = vector.extract_strided_slice %32 {offsets = [0, 2, 0], sizes = [8, 16, 4], strides = [1, 1, 1]} : vector<8x18x4xbf16> to vector<8x16x4xbf16>
    %46 = vector.shape_cast %45 : vector<8x16x4xbf16> to vector<128x4xbf16>
    %c2 = arith.constant 2 : index
    %c0_46 = arith.constant 0 : index
    %c0_47 = arith.constant 0 : index
    %47 = vector.load %arg22[%c2, %c0_46, %c0_47] : memref<18x4x4xbf16, #tpu.memory_space<vmem>>, vector<1x4x4xbf16>
    %48 = vector.shape_cast %47 : vector<1x4x4xbf16> to vector<4x4xbf16>
    %cst_48 = arith.constant dense<0.000000e+00> : vector<128x4xf32>
    %49 = tpu.matmul %46, %48, %cst_48 {dimension_numbers = #tpu.dot_dimension_numbers<[1], [0], [0], [1], [0, 0, 1, 1], [], []>} : vector<128x4xbf16>, vector<4x4xbf16>, vector<128x4xf32> -> vector<128x4xf32>
    %50 = arith.addf %44, %49 : vector<128x4xf32>
    %51 = vector.extract_strided_slice %31 {offsets = [1, 0, 0], sizes = [8, 18, 4], strides = [1, 1, 1]} : vector<10x18x4xbf16> to vector<8x18x4xbf16>
    %52 = vector.extract_strided_slice %51 {offsets = [0, 0, 0], sizes = [8, 16, 4], strides = [1, 1, 1]} : vector<8x18x4xbf16> to vector<8x16x4xbf16>
    %53 = vector.shape_cast %52 : vector<8x16x4xbf16> to vector<128x4xbf16>
    %c3 = arith.constant 3 : index
    %c0_49 = arith.constant 0 : index
    %c0_50 = arith.constant 0 : index
    %54 = vector.load %arg22[%c3, %c0_49, %c0_50] : memref<18x4x4xbf16, #tpu.memory_space<vmem>>, vector<1x4x4xbf16>
    %55 = vector.shape_cast %54 : vector<1x4x4xbf16> to vector<4x4xbf16>
    %cst_51 = arith.constant dense<0.000000e+00> : vector<128x4xf32>
    %56 = tpu.matmul %53, %55, %cst_51 {dimension_numbers = #tpu.dot_dimension_numbers<[1], [0], [0], [1], [0, 0, 1, 1], [], []>} : vector<128x4xbf16>, vector<4x4xbf16>, vector<128x4xf32> -> vector<128x4xf32>
    %57 = arith.addf %50, %56 : vector<128x4xf32>
    %58 = vector.extract_strided_slice %51 {offsets = [0, 1, 0], sizes = [8, 16, 4], strides = [1, 1, 1]} : vector<8x18x4xbf16> to vector<8x16x4xbf16>
    %59 = vector.shape_cast %58 : vector<8x16x4xbf16> to vector<128x4xbf16>
    %c4 = arith.constant 4 : index
    %c0_52 = arith.constant 0 : index
    %c0_53 = arith.constant 0 : index
    %60 = vector.load %arg22[%c4, %c0_52, %c0_53] : memref<18x4x4xbf16, #tpu.memory_space<vmem>>, vector<1x4x4xbf16>
    %61 = vector.shape_cast %60 : vector<1x4x4xbf16> to vector<4x4xbf16>
    %cst_54 = arith.constant dense<0.000000e+00> : vector<128x4xf32>
    %62 = tpu.matmul %59, %61, %cst_54 {dimension_numbers = #tpu.dot_dimension_numbers<[1], [0], [0], [1], [0, 0, 1, 1], [], []>} : vector<128x4xbf16>, vector<4x4xbf16>, vector<128x4xf32> -> vector<128x4xf32>
    %63 = arith.addf %57, %62 : vector<128x4xf32>
    %64 = vector.extract_strided_slice %51 {offsets = [0, 2, 0], sizes = [8, 16, 4], strides = [1, 1, 1]} : vector<8x18x4xbf16> to vector<8x16x4xbf16>
    %65 = vector.shape_cast %64 : vector<8x16x4xbf16> to vector<128x4xbf16>
    %c5 = arith.constant 5 : index
    %c0_55 = arith.constant 0 : index
    %c0_56 = arith.constant 0 : index
    %66 = vector.load %arg22[%c5, %c0_55, %c0_56] : memref<18x4x4xbf16, #tpu.memory_space<vmem>>, vector<1x4x4xbf16>
    %67 = vector.shape_cast %66 : vector<1x4x4xbf16> to vector<4x4xbf16>
    %cst_57 = arith.constant dense<0.000000e+00> : vector<128x4xf32>
    %68 = tpu.matmul %65, %67, %cst_57 {dimension_numbers = #tpu.dot_dimension_numbers<[1], [0], [0], [1], [0, 0, 1, 1], [], []>} : vector<128x4xbf16>, vector<4x4xbf16>, vector<128x4xf32> -> vector<128x4xf32>
    %69 = arith.addf %63, %68 : vector<128x4xf32>
    %70 = vector.extract_strided_slice %31 {offsets = [2, 0, 0], sizes = [8, 18, 4], strides = [1, 1, 1]} : vector<10x18x4xbf16> to vector<8x18x4xbf16>
    %71 = vector.extract_strided_slice %70 {offsets = [0, 0, 0], sizes = [8, 16, 4], strides = [1, 1, 1]} : vector<8x18x4xbf16> to vector<8x16x4xbf16>
    %72 = vector.shape_cast %71 : vector<8x16x4xbf16> to vector<128x4xbf16>
    %c6 = arith.constant 6 : index
    %c0_58 = arith.constant 0 : index
    %c0_59 = arith.constant 0 : index
    %73 = vector.load %arg22[%c6, %c0_58, %c0_59] : memref<18x4x4xbf16, #tpu.memory_space<vmem>>, vector<1x4x4xbf16>
    %74 = vector.shape_cast %73 : vector<1x4x4xbf16> to vector<4x4xbf16>
    %cst_60 = arith.constant dense<0.000000e+00> : vector<128x4xf32>
    %75 = tpu.matmul %72, %74, %cst_60 {dimension_numbers = #tpu.dot_dimension_numbers<[1], [0], [0], [1], [0, 0, 1, 1], [], []>} : vector<128x4xbf16>, vector<4x4xbf16>, vector<128x4xf32> -> vector<128x4xf32>
    %76 = arith.addf %69, %75 : vector<128x4xf32>
    %77 = vector.extract_strided_slice %70 {offsets = [0, 1, 0], sizes = [8, 16, 4], strides = [1, 1, 1]} : vector<8x18x4xbf16> to vector<8x16x4xbf16>
    %78 = vector.shape_cast %77 : vector<8x16x4xbf16> to vector<128x4xbf16>
    %c7 = arith.constant 7 : index
    %c0_61 = arith.constant 0 : index
    %c0_62 = arith.constant 0 : index
    %79 = vector.load %arg22[%c7, %c0_61, %c0_62] : memref<18x4x4xbf16, #tpu.memory_space<vmem>>, vector<1x4x4xbf16>
    %80 = vector.shape_cast %79 : vector<1x4x4xbf16> to vector<4x4xbf16>
    %cst_63 = arith.constant dense<0.000000e+00> : vector<128x4xf32>
    %81 = tpu.matmul %78, %80, %cst_63 {dimension_numbers = #tpu.dot_dimension_numbers<[1], [0], [0], [1], [0, 0, 1, 1], [], []>} : vector<128x4xbf16>, vector<4x4xbf16>, vector<128x4xf32> -> vector<128x4xf32>
    %82 = arith.addf %76, %81 : vector<128x4xf32>
    %83 = vector.extract_strided_slice %70 {offsets = [0, 2, 0], sizes = [8, 16, 4], strides = [1, 1, 1]} : vector<8x18x4xbf16> to vector<8x16x4xbf16>
    %84 = vector.shape_cast %83 : vector<8x16x4xbf16> to vector<128x4xbf16>
    %c8 = arith.constant 8 : index
    %c0_64 = arith.constant 0 : index
    %c0_65 = arith.constant 0 : index
    %85 = vector.load %arg22[%c8, %c0_64, %c0_65] : memref<18x4x4xbf16, #tpu.memory_space<vmem>>, vector<1x4x4xbf16>
    %86 = vector.shape_cast %85 : vector<1x4x4xbf16> to vector<4x4xbf16>
    %cst_66 = arith.constant dense<0.000000e+00> : vector<128x4xf32>
    %87 = tpu.matmul %84, %86, %cst_66 {dimension_numbers = #tpu.dot_dimension_numbers<[1], [0], [0], [1], [0, 0, 1, 1], [], []>} : vector<128x4xbf16>, vector<4x4xbf16>, vector<128x4xf32> -> vector<128x4xf32>
    %88 = arith.addf %82, %87 : vector<128x4xf32>
    %c0_67 = arith.constant 0 : index
    %c0_68 = arith.constant 0 : index
    %c0_69 = arith.constant 0 : index
    %c0_70 = arith.constant 0 : index
    %89 = vector.load %arg12[%c0_67, %c0_68, %c0_69, %c0_70] : memref<1x1x18x4xbf16, #tpu.memory_space<vmem>>, vector<1x1x18x4xbf16>
    %90 = vector.shape_cast %89 : vector<1x1x18x4xbf16> to vector<18x4xbf16>
    %c0_71 = arith.constant 0 : index
    %c0_72 = arith.constant 0 : index
    %c0_73 = arith.constant 0 : index
    %c0_74 = arith.constant 0 : index
    %91 = vector.load %arg13[%c0_71, %c0_72, %c0_73, %c0_74] : memref<1x1x18x4xbf16, #tpu.memory_space<vmem>>, vector<1x1x18x4xbf16>
    %92 = vector.shape_cast %91 : vector<1x1x18x4xbf16> to vector<18x4xbf16>
    %c0_75 = arith.constant 0 : index
    %c0_76 = arith.constant 0 : index
    %c0_77 = arith.constant 0 : index
    %c0_78 = arith.constant 0 : index
    %93 = vector.load %arg14[%c0_75, %c0_76, %c0_77, %c0_78] : memref<1x1x18x4xbf16, #tpu.memory_space<vmem>>, vector<1x1x18x4xbf16>
    %94 = vector.shape_cast %93 : vector<1x1x18x4xbf16> to vector<18x4xbf16>
    %c0_79 = arith.constant 0 : index
    %c0_80 = arith.constant 0 : index
    %c0_81 = arith.constant 0 : index
    %c0_82 = arith.constant 0 : index
    %95 = vector.load %arg15[%c0_79, %c0_80, %c0_81, %c0_82] : memref<1x1x18x4xbf16, #tpu.memory_space<vmem>>, vector<1x1x18x4xbf16>
    %96 = vector.shape_cast %95 : vector<1x1x18x4xbf16> to vector<18x4xbf16>
    %c0_83 = arith.constant 0 : index
    %c0_84 = arith.constant 0 : index
    %c0_85 = arith.constant 0 : index
    %c0_86 = arith.constant 0 : index
    %97 = vector.load %arg16[%c0_83, %c0_84, %c0_85, %c0_86] : memref<1x1x18x4xbf16, #tpu.memory_space<vmem>>, vector<1x1x18x4xbf16>
    %98 = vector.shape_cast %97 : vector<1x1x18x4xbf16> to vector<18x4xbf16>
    %c0_87 = arith.constant 0 : index
    %c0_88 = arith.constant 0 : index
    %c0_89 = arith.constant 0 : index
    %c0_90 = arith.constant 0 : index
    %99 = vector.load %arg17[%c0_87, %c0_88, %c0_89, %c0_90] : memref<1x1x18x4xbf16, #tpu.memory_space<vmem>>, vector<1x1x18x4xbf16>
    %100 = vector.shape_cast %99 : vector<1x1x18x4xbf16> to vector<18x4xbf16>
    %c0_91 = arith.constant 0 : index
    %c0_92 = arith.constant 0 : index
    %c0_93 = arith.constant 0 : index
    %c0_94 = arith.constant 0 : index
    %101 = vector.load %arg18[%c0_91, %c0_92, %c0_93, %c0_94] : memref<1x1x18x4xbf16, #tpu.memory_space<vmem>>, vector<1x1x18x4xbf16>
    %102 = vector.shape_cast %101 : vector<1x1x18x4xbf16> to vector<18x4xbf16>
    %c0_95 = arith.constant 0 : index
    %c0_96 = arith.constant 0 : index
    %c0_97 = arith.constant 0 : index
    %c0_98 = arith.constant 0 : index
    %103 = vector.load %arg19[%c0_95, %c0_96, %c0_97, %c0_98] : memref<1x1x18x4xbf16, #tpu.memory_space<vmem>>, vector<1x1x18x4xbf16>
    %104 = vector.shape_cast %103 : vector<1x1x18x4xbf16> to vector<18x4xbf16>
    %c0_99 = arith.constant 0 : index
    %c0_100 = arith.constant 0 : index
    %c0_101 = arith.constant 0 : index
    %c0_102 = arith.constant 0 : index
    %105 = vector.load %arg20[%c0_99, %c0_100, %c0_101, %c0_102] : memref<1x1x18x4xbf16, #tpu.memory_space<vmem>>, vector<1x1x18x4xbf16>
    %106 = vector.shape_cast %105 : vector<1x1x18x4xbf16> to vector<18x4xbf16>
    %c0_103 = arith.constant 0 : index
    %c0_104 = arith.constant 0 : index
    %c0_105 = arith.constant 0 : index
    %c0_106 = arith.constant 0 : index
    %107 = vector.load %arg21[%c0_103, %c0_104, %c0_105, %c0_106] : memref<1x1x18x4xbf16, #tpu.memory_space<vmem>>, vector<1x1x18x4xbf16>
    %108 = vector.shape_cast %107 : vector<1x1x18x4xbf16> to vector<18x4xbf16>
    %109 = vector.shape_cast %90 : vector<18x4xbf16> to vector<1x18x4xbf16>
    %110 = vector.shape_cast %92 : vector<18x4xbf16> to vector<1x18x4xbf16>
    %111 = vector.shape_cast %94 : vector<18x4xbf16> to vector<1x18x4xbf16>
    %112 = vector.shape_cast %96 : vector<18x4xbf16> to vector<1x18x4xbf16>
    %113 = vector.shape_cast %98 : vector<18x4xbf16> to vector<1x18x4xbf16>
    %114 = vector.shape_cast %100 : vector<18x4xbf16> to vector<1x18x4xbf16>
    %115 = vector.shape_cast %102 : vector<18x4xbf16> to vector<1x18x4xbf16>
    %116 = vector.shape_cast %104 : vector<18x4xbf16> to vector<1x18x4xbf16>
    %117 = vector.shape_cast %106 : vector<18x4xbf16> to vector<1x18x4xbf16>
    %118 = vector.shape_cast %108 : vector<18x4xbf16> to vector<1x18x4xbf16>
    %119 = tpu.concatenate %109, %110, %111, %112, %113, %114, %115, %116, %117, %118 in 0 : vector<1x18x4xbf16>, vector<1x18x4xbf16>, vector<1x18x4xbf16>, vector<1x18x4xbf16>, vector<1x18x4xbf16>, vector<1x18x4xbf16>, vector<1x18x4xbf16>, vector<1x18x4xbf16>, vector<1x18x4xbf16>, vector<1x18x4xbf16> -> vector<10x18x4xbf16>
    %120 = vector.extract_strided_slice %119 {offsets = [0, 0, 0], sizes = [8, 18, 4], strides = [1, 1, 1]} : vector<10x18x4xbf16> to vector<8x18x4xbf16>
    %121 = vector.extract_strided_slice %120 {offsets = [0, 0, 0], sizes = [8, 16, 4], strides = [1, 1, 1]} : vector<8x18x4xbf16> to vector<8x16x4xbf16>
    %122 = vector.shape_cast %121 : vector<8x16x4xbf16> to vector<128x4xbf16>
    %c9 = arith.constant 9 : index
    %c0_107 = arith.constant 0 : index
    %c0_108 = arith.constant 0 : index
    %123 = vector.load %arg22[%c9, %c0_107, %c0_108] : memref<18x4x4xbf16, #tpu.memory_space<vmem>>, vector<1x4x4xbf16>
    %124 = vector.shape_cast %123 : vector<1x4x4xbf16> to vector<4x4xbf16>
    %cst_109 = arith.constant dense<0.000000e+00> : vector<128x4xf32>
    %125 = tpu.matmul %122, %124, %cst_109 {dimension_numbers = #tpu.dot_dimension_numbers<[1], [0], [0], [1], [0, 0, 1, 1], [], []>} : vector<128x4xbf16>, vector<4x4xbf16>, vector<128x4xf32> -> vector<128x4xf32>
    %126 = arith.addf %88, %125 : vector<128x4xf32>
    %127 = vector.extract_strided_slice %120 {offsets = [0, 1, 0], sizes = [8, 16, 4], strides = [1, 1, 1]} : vector<8x18x4xbf16> to vector<8x16x4xbf16>
    %128 = vector.shape_cast %127 : vector<8x16x4xbf16> to vector<128x4xbf16>
    %c10 = arith.constant 10 : index
    %c0_110 = arith.constant 0 : index
    %c0_111 = arith.constant 0 : index
    %129 = vector.load %arg22[%c10, %c0_110, %c0_111] : memref<18x4x4xbf16, #tpu.memory_space<vmem>>, vector<1x4x4xbf16>
    %130 = vector.shape_cast %129 : vector<1x4x4xbf16> to vector<4x4xbf16>
    %cst_112 = arith.constant dense<0.000000e+00> : vector<128x4xf32>
    %131 = tpu.matmul %128, %130, %cst_112 {dimension_numbers = #tpu.dot_dimension_numbers<[1], [0], [0], [1], [0, 0, 1, 1], [], []>} : vector<128x4xbf16>, vector<4x4xbf16>, vector<128x4xf32> -> vector<128x4xf32>
    %132 = arith.addf %126, %131 : vector<128x4xf32>
    %133 = vector.extract_strided_slice %120 {offsets = [0, 2, 0], sizes = [8, 16, 4], strides = [1, 1, 1]} : vector<8x18x4xbf16> to vector<8x16x4xbf16>
    %134 = vector.shape_cast %133 : vector<8x16x4xbf16> to vector<128x4xbf16>
    %c11 = arith.constant 11 : index
    %c0_113 = arith.constant 0 : index
    %c0_114 = arith.constant 0 : index
    %135 = vector.load %arg22[%c11, %c0_113, %c0_114] : memref<18x4x4xbf16, #tpu.memory_space<vmem>>, vector<1x4x4xbf16>
    %136 = vector.shape_cast %135 : vector<1x4x4xbf16> to vector<4x4xbf16>
    %cst_115 = arith.constant dense<0.000000e+00> : vector<128x4xf32>
    %137 = tpu.matmul %134, %136, %cst_115 {dimension_numbers = #tpu.dot_dimension_numbers<[1], [0], [0], [1], [0, 0, 1, 1], [], []>} : vector<128x4xbf16>, vector<4x4xbf16>, vector<128x4xf32> -> vector<128x4xf32>
    %138 = arith.addf %132, %137 : vector<128x4xf32>
    %139 = vector.extract_strided_slice %119 {offsets = [1, 0, 0], sizes = [8, 18, 4], strides = [1, 1, 1]} : vector<10x18x4xbf16> to vector<8x18x4xbf16>
    %140 = vector.extract_strided_slice %139 {offsets = [0, 0, 0], sizes = [8, 16, 4], strides = [1, 1, 1]} : vector<8x18x4xbf16> to vector<8x16x4xbf16>
    %141 = vector.shape_cast %140 : vector<8x16x4xbf16> to vector<128x4xbf16>
    %c12 = arith.constant 12 : index
    %c0_116 = arith.constant 0 : index
    %c0_117 = arith.constant 0 : index
    %142 = vector.load %arg22[%c12, %c0_116, %c0_117] : memref<18x4x4xbf16, #tpu.memory_space<vmem>>, vector<1x4x4xbf16>
    %143 = vector.shape_cast %142 : vector<1x4x4xbf16> to vector<4x4xbf16>
    %cst_118 = arith.constant dense<0.000000e+00> : vector<128x4xf32>
    %144 = tpu.matmul %141, %143, %cst_118 {dimension_numbers = #tpu.dot_dimension_numbers<[1], [0], [0], [1], [0, 0, 1, 1], [], []>} : vector<128x4xbf16>, vector<4x4xbf16>, vector<128x4xf32> -> vector<128x4xf32>
    %145 = arith.addf %138, %144 : vector<128x4xf32>
    %146 = vector.extract_strided_slice %139 {offsets = [0, 1, 0], sizes = [8, 16, 4], strides = [1, 1, 1]} : vector<8x18x4xbf16> to vector<8x16x4xbf16>
    %147 = vector.shape_cast %146 : vector<8x16x4xbf16> to vector<128x4xbf16>
    %c13 = arith.constant 13 : index
    %c0_119 = arith.constant 0 : index
    %c0_120 = arith.constant 0 : index
    %148 = vector.load %arg22[%c13, %c0_119, %c0_120] : memref<18x4x4xbf16, #tpu.memory_space<vmem>>, vector<1x4x4xbf16>
    %149 = vector.shape_cast %148 : vector<1x4x4xbf16> to vector<4x4xbf16>
    %cst_121 = arith.constant dense<0.000000e+00> : vector<128x4xf32>
    %150 = tpu.matmul %147, %149, %cst_121 {dimension_numbers = #tpu.dot_dimension_numbers<[1], [0], [0], [1], [0, 0, 1, 1], [], []>} : vector<128x4xbf16>, vector<4x4xbf16>, vector<128x4xf32> -> vector<128x4xf32>
    %151 = arith.addf %145, %150 : vector<128x4xf32>
    %152 = vector.extract_strided_slice %139 {offsets = [0, 2, 0], sizes = [8, 16, 4], strides = [1, 1, 1]} : vector<8x18x4xbf16> to vector<8x16x4xbf16>
    %153 = vector.shape_cast %152 : vector<8x16x4xbf16> to vector<128x4xbf16>
    %c14 = arith.constant 14 : index
    %c0_122 = arith.constant 0 : index
    %c0_123 = arith.constant 0 : index
    %154 = vector.load %arg22[%c14, %c0_122, %c0_123] : memref<18x4x4xbf16, #tpu.memory_space<vmem>>, vector<1x4x4xbf16>
    %155 = vector.shape_cast %154 : vector<1x4x4xbf16> to vector<4x4xbf16>
    %cst_124 = arith.constant dense<0.000000e+00> : vector<128x4xf32>
    %156 = tpu.matmul %153, %155, %cst_124 {dimension_numbers = #tpu.dot_dimension_numbers<[1], [0], [0], [1], [0, 0, 1, 1], [], []>} : vector<128x4xbf16>, vector<4x4xbf16>, vector<128x4xf32> -> vector<128x4xf32>
    %157 = arith.addf %151, %156 : vector<128x4xf32>
    %158 = vector.extract_strided_slice %119 {offsets = [2, 0, 0], sizes = [8, 18, 4], strides = [1, 1, 1]} : vector<10x18x4xbf16> to vector<8x18x4xbf16>
    %159 = vector.extract_strided_slice %158 {offsets = [0, 0, 0], sizes = [8, 16, 4], strides = [1, 1, 1]} : vector<8x18x4xbf16> to vector<8x16x4xbf16>
    %160 = vector.shape_cast %159 : vector<8x16x4xbf16> to vector<128x4xbf16>
    %c15 = arith.constant 15 : index
    %c0_125 = arith.constant 0 : index
    %c0_126 = arith.constant 0 : index
    %161 = vector.load %arg22[%c15, %c0_125, %c0_126] : memref<18x4x4xbf16, #tpu.memory_space<vmem>>, vector<1x4x4xbf16>
    %162 = vector.shape_cast %161 : vector<1x4x4xbf16> to vector<4x4xbf16>
    %cst_127 = arith.constant dense<0.000000e+00> : vector<128x4xf32>
    %163 = tpu.matmul %160, %162, %cst_127 {dimension_numbers = #tpu.dot_dimension_numbers<[1], [0], [0], [1], [0, 0, 1, 1], [], []>} : vector<128x4xbf16>, vector<4x4xbf16>, vector<128x4xf32> -> vector<128x4xf32>
    %164 = arith.addf %157, %163 : vector<128x4xf32>
    %165 = vector.extract_strided_slice %158 {offsets = [0, 1, 0], sizes = [8, 16, 4], strides = [1, 1, 1]} : vector<8x18x4xbf16> to vector<8x16x4xbf16>
    %166 = vector.shape_cast %165 : vector<8x16x4xbf16> to vector<128x4xbf16>
    %c16 = arith.constant 16 : index
    %c0_128 = arith.constant 0 : index
    %c0_129 = arith.constant 0 : index
    %167 = vector.load %arg22[%c16, %c0_128, %c0_129] : memref<18x4x4xbf16, #tpu.memory_space<vmem>>, vector<1x4x4xbf16>
    %168 = vector.shape_cast %167 : vector<1x4x4xbf16> to vector<4x4xbf16>
    %cst_130 = arith.constant dense<0.000000e+00> : vector<128x4xf32>
    %169 = tpu.matmul %166, %168, %cst_130 {dimension_numbers = #tpu.dot_dimension_numbers<[1], [0], [0], [1], [0, 0, 1, 1], [], []>} : vector<128x4xbf16>, vector<4x4xbf16>, vector<128x4xf32> -> vector<128x4xf32>
    %170 = arith.addf %164, %169 : vector<128x4xf32>
    %171 = vector.extract_strided_slice %158 {offsets = [0, 2, 0], sizes = [8, 16, 4], strides = [1, 1, 1]} : vector<8x18x4xbf16> to vector<8x16x4xbf16>
    %172 = vector.shape_cast %171 : vector<8x16x4xbf16> to vector<128x4xbf16>
    %c17 = arith.constant 17 : index
    %c0_131 = arith.constant 0 : index
    %c0_132 = arith.constant 0 : index
    %173 = vector.load %arg22[%c17, %c0_131, %c0_132] : memref<18x4x4xbf16, #tpu.memory_space<vmem>>, vector<1x4x4xbf16>
    %174 = vector.shape_cast %173 : vector<1x4x4xbf16> to vector<4x4xbf16>
    %cst_133 = arith.constant dense<0.000000e+00> : vector<128x4xf32>
    %175 = tpu.matmul %172, %174, %cst_133 {dimension_numbers = #tpu.dot_dimension_numbers<[1], [0], [0], [1], [0, 0, 1, 1], [], []>} : vector<128x4xbf16>, vector<4x4xbf16>, vector<128x4xf32> -> vector<128x4xf32>
    %176 = arith.addf %170, %175 : vector<128x4xf32>
    %c0_134 = arith.constant 0 : index
    %c0_135 = arith.constant 0 : index
    %177 = vector.load %arg23[%c0_134, %c0_135] : memref<1x4xf32, #tpu.memory_space<vmem>>, vector<1x4xf32>
    %178 = vector.broadcast %177 : vector<1x4xf32> to vector<128x4xf32>
    %179 = arith.addf %176, %178 : vector<128x4xf32>
    %180 = vector.shape_cast %179 : vector<128x4xf32> to vector<8x16x4xf32>
    %c0_136 = arith.constant 0 : index
    %c0_137 = arith.constant 0 : index
    %c0_138 = arith.constant 0 : index
    %c0_139 = arith.constant 0 : index
    %181 = vector.load %arg24[%c0_136, %c0_137, %c0_138, %c0_139] : memref<1x8x16x4xf32, #tpu.memory_space<vmem>>, vector<1x8x16x4xf32>
    %182 = vector.shape_cast %181 : vector<1x8x16x4xf32> to vector<8x16x4xf32>
    %183 = vector.shape_cast %180 : vector<8x16x4xf32> to vector<1x8x16x4xf32>
    tpu.vector_store %arg24[%c0_136, %c0_137, %c0_138, %c0_139], %183 {strides = array<i32>} : memref<1x8x16x4xf32, #tpu.memory_space<vmem>>, vector<1x8x16x4xf32>,
    return
  }
  func.func @transform_0(%arg0: i32, %arg1: i32) -> (i32, i32, i32, i32) {
    %c8_i32 = arith.constant 8 : i32
    %0 = arith.muli %arg1, %c8_i32 : i32
    %c0_i32 = arith.constant 0 : i32
    %1 = arith.addi %0, %c0_i32 : i32
    %c0_i32_0 = arith.constant 0 : i32
    %c0_i32_1 = arith.constant 0 : i32
    %c0_i32_2 = arith.constant 0 : i32
    return %arg0, %1, %c0_i32_0, %c0_i32_1 : i32, i32, i32, i32
  }
  func.func @transform_1(%arg0: i32, %arg1: i32) -> (i32, i32, i32, i32) {
    %c8_i32 = arith.constant 8 : i32
    %0 = arith.muli %arg1, %c8_i32 : i32
    %c1_i32 = arith.constant 1 : i32
    %1 = arith.addi %0, %c1_i32 : i32
    %c0_i32 = arith.constant 0 : i32
    %c0_i32_0 = arith.constant 0 : i32
    %c0_i32_1 = arith.constant 0 : i32
    return %arg0, %1, %c0_i32, %c0_i32_0 : i32, i32, i32, i32
  }
  func.func @transform_2(%arg0: i32, %arg1: i32) -> (i32, i32, i32, i32) {
    %c8_i32 = arith.constant 8 : i32
    %0 = arith.muli %arg1, %c8_i32 : i32
    %c2_i32 = arith.constant 2 : i32
    %1 = arith.addi %0, %c2_i32 : i32
    %c0_i32 = arith.constant 0 : i32
    %c0_i32_0 = arith.constant 0 : i32
    %c0_i32_1 = arith.constant 0 : i32
    return %arg0, %1, %c0_i32, %c0_i32_0 : i32, i32, i32, i32
  }
  func.func @transform_3(%arg0: i32, %arg1: i32) -> (i32, i32, i32, i32) {
    %c8_i32 = arith.constant 8 : i32
    %0 = arith.muli %arg1, %c8_i32 : i32
    %c3_i32 = arith.constant 3 : i32
    %1 = arith.addi %0, %c3_i32 : i32
    %c0_i32 = arith.constant 0 : i32
    %c0_i32_0 = arith.constant 0 : i32
    %c0_i32_1 = arith.constant 0 : i32
    return %arg0, %1, %c0_i32, %c0_i32_0 : i32, i32, i32, i32
  }
  func.func @transform_4(%arg0: i32, %arg1: i32) -> (i32, i32, i32, i32) {
    %c8_i32 = arith.constant 8 : i32
    %0 = arith.muli %arg1, %c8_i32 : i32
    %c4_i32 = arith.constant 4 : i32
    %1 = arith.addi %0, %c4_i32 : i32
    %c0_i32 = arith.constant 0 : i32
    %c0_i32_0 = arith.constant 0 : i32
    %c0_i32_1 = arith.constant 0 : i32
    return %arg0, %1, %c0_i32, %c0_i32_0 : i32, i32, i32, i32
  }
  func.func @transform_5(%arg0: i32, %arg1: i32) -> (i32, i32, i32, i32) {
    %c8_i32 = arith.constant 8 : i32
    %0 = arith.muli %arg1, %c8_i32 : i32
    %c5_i32 = arith.constant 5 : i32
    %1 = arith.addi %0, %c5_i32 : i32
    %c0_i32 = arith.constant 0 : i32
    %c0_i32_0 = arith.constant 0 : i32
    %c0_i32_1 = arith.constant 0 : i32
    return %arg0, %1, %c0_i32, %c0_i32_0 : i32, i32, i32, i32
  }
  func.func @transform_6(%arg0: i32, %arg1: i32) -> (i32, i32, i32, i32) {
    %c8_i32 = arith.constant 8 : i32
    %0 = arith.muli %arg1, %c8_i32 : i32
    %c6_i32 = arith.constant 6 : i32
    %1 = arith.addi %0, %c6_i32 : i32
    %c0_i32 = arith.constant 0 : i32
    %c0_i32_0 = arith.constant 0 : i32
    %c0_i32_1 = arith.constant 0 : i32
    return %arg0, %1, %c0_i32, %c0_i32_0 : i32, i32, i32, i32
  }
  func.func @transform_7(%arg0: i32, %arg1: i32) -> (i32, i32, i32, i32) {
    %c8_i32 = arith.constant 8 : i32
    %0 = arith.muli %arg1, %c8_i32 : i32
    %c7_i32 = arith.constant 7 : i32
    %1 = arith.addi %0, %c7_i32 : i32
    %c0_i32 = arith.constant 0 : i32
    %c0_i32_0 = arith.constant 0 : i32
    %c0_i32_1 = arith.constant 0 : i32
    return %arg0, %1, %c0_i32, %c0_i32_0 : i32, i32, i32, i32
  }
  func.func @transform_8(%arg0: i32, %arg1: i32) -> (i32, i32, i32, i32) {
    %c8_i32 = arith.constant 8 : i32
    %0 = arith.muli %arg1, %c8_i32 : i32
    %c8_i32_0 = arith.constant 8 : i32
    %1 = arith.addi %0, %c8_i32_0 : i32
    %c0_i32 = arith.constant 0 : i32
    %c0_i32_1 = arith.constant 0 : i32
    %c0_i32_2 = arith.constant 0 : i32
    return %arg0, %1, %c0_i32, %c0_i32_1 : i32, i32, i32, i32
  }
  func.func @transform_9(%arg0: i32, %arg1: i32) -> (i32, i32, i32, i32) {
    %c8_i32 = arith.constant 8 : i32
    %0 = arith.muli %arg1, %c8_i32 : i32
    %c9_i32 = arith.constant 9 : i32
    %1 = arith.addi %0, %c9_i32 : i32
    %c0_i32 = arith.constant 0 : i32
    %c0_i32_0 = arith.constant 0 : i32
    %c0_i32_1 = arith.constant 0 : i32
    return %arg0, %1, %c0_i32, %c0_i32_0 : i32, i32, i32, i32
  }
  func.func @transform_10(%arg0: i32, %arg1: i32) -> (i32, i32, i32, i32) {
    %c8_i32 = arith.constant 8 : i32
    %0 = arith.muli %arg1, %c8_i32 : i32
    %c0_i32 = arith.constant 0 : i32
    %1 = arith.addi %0, %c0_i32 : i32
    %c0_i32_0 = arith.constant 0 : i32
    %c0_i32_1 = arith.constant 0 : i32
    %c0_i32_2 = arith.constant 0 : i32
    return %arg0, %1, %c0_i32_0, %c0_i32_1 : i32, i32, i32, i32
  }
  func.func @transform_11(%arg0: i32, %arg1: i32) -> (i32, i32, i32, i32) {
    %c8_i32 = arith.constant 8 : i32
    %0 = arith.muli %arg1, %c8_i32 : i32
    %c1_i32 = arith.constant 1 : i32
    %1 = arith.addi %0, %c1_i32 : i32
    %c0_i32 = arith.constant 0 : i32
    %c0_i32_0 = arith.constant 0 : i32
    %c0_i32_1 = arith.constant 0 : i32
    return %arg0, %1, %c0_i32, %c0_i32_0 : i32, i32, i32, i32
  }
  func.func @transform_12(%arg0: i32, %arg1: i32) -> (i32, i32, i32, i32) {
    %c8_i32 = arith.constant 8 : i32
    %0 = arith.muli %arg1, %c8_i32 : i32
    %c2_i32 = arith.constant 2 : i32
    %1 = arith.addi %0, %c2_i32 : i32
    %c0_i32 = arith.constant 0 : i32
    %c0_i32_0 = arith.constant 0 : i32
    %c0_i32_1 = arith.constant 0 : i32
    return %arg0, %1, %c0_i32, %c0_i32_0 : i32, i32, i32, i32
  }
  func.func @transform_13(%arg0: i32, %arg1: i32) -> (i32, i32, i32, i32) {
    %c8_i32 = arith.constant 8 : i32
    %0 = arith.muli %arg1, %c8_i32 : i32
    %c3_i32 = arith.constant 3 : i32
    %1 = arith.addi %0, %c3_i32 : i32
    %c0_i32 = arith.constant 0 : i32
    %c0_i32_0 = arith.constant 0 : i32
    %c0_i32_1 = arith.constant 0 : i32
    return %arg0, %1, %c0_i32, %c0_i32_0 : i32, i32, i32, i32
  }
  func.func @transform_14(%arg0: i32, %arg1: i32) -> (i32, i32, i32, i32) {
    %c8_i32 = arith.constant 8 : i32
    %0 = arith.muli %arg1, %c8_i32 : i32
    %c4_i32 = arith.constant 4 : i32
    %1 = arith.addi %0, %c4_i32 : i32
    %c0_i32 = arith.constant 0 : i32
    %c0_i32_0 = arith.constant 0 : i32
    %c0_i32_1 = arith.constant 0 : i32
    return %arg0, %1, %c0_i32, %c0_i32_0 : i32, i32, i32, i32
  }
  func.func @transform_15(%arg0: i32, %arg1: i32) -> (i32, i32, i32, i32) {
    %c8_i32 = arith.constant 8 : i32
    %0 = arith.muli %arg1, %c8_i32 : i32
    %c5_i32 = arith.constant 5 : i32
    %1 = arith.addi %0, %c5_i32 : i32
    %c0_i32 = arith.constant 0 : i32
    %c0_i32_0 = arith.constant 0 : i32
    %c0_i32_1 = arith.constant 0 : i32
    return %arg0, %1, %c0_i32, %c0_i32_0 : i32, i32, i32, i32
  }
  func.func @transform_16(%arg0: i32, %arg1: i32) -> (i32, i32, i32, i32) {
    %c8_i32 = arith.constant 8 : i32
    %0 = arith.muli %arg1, %c8_i32 : i32
    %c6_i32 = arith.constant 6 : i32
    %1 = arith.addi %0, %c6_i32 : i32
    %c0_i32 = arith.constant 0 : i32
    %c0_i32_0 = arith.constant 0 : i32
    %c0_i32_1 = arith.constant 0 : i32
    return %arg0, %1, %c0_i32, %c0_i32_0 : i32, i32, i32, i32
  }
  func.func @transform_17(%arg0: i32, %arg1: i32) -> (i32, i32, i32, i32) {
    %c8_i32 = arith.constant 8 : i32
    %0 = arith.muli %arg1, %c8_i32 : i32
    %c7_i32 = arith.constant 7 : i32
    %1 = arith.addi %0, %c7_i32 : i32
    %c0_i32 = arith.constant 0 : i32
    %c0_i32_0 = arith.constant 0 : i32
    %c0_i32_1 = arith.constant 0 : i32
    return %arg0, %1, %c0_i32, %c0_i32_0 : i32, i32, i32, i32
  }
  func.func @transform_18(%arg0: i32, %arg1: i32) -> (i32, i32, i32, i32) {
    %c8_i32 = arith.constant 8 : i32
    %0 = arith.muli %arg1, %c8_i32 : i32
    %c8_i32_0 = arith.constant 8 : i32
    %1 = arith.addi %0, %c8_i32_0 : i32
    %c0_i32 = arith.constant 0 : i32
    %c0_i32_1 = arith.constant 0 : i32
    %c0_i32_2 = arith.constant 0 : i32
    return %arg0, %1, %c0_i32, %c0_i32_1 : i32, i32, i32, i32
  }
  func.func @transform_19(%arg0: i32, %arg1: i32) -> (i32, i32, i32, i32) {
    %c8_i32 = arith.constant 8 : i32
    %0 = arith.muli %arg1, %c8_i32 : i32
    %c9_i32 = arith.constant 9 : i32
    %1 = arith.addi %0, %c9_i32 : i32
    %c0_i32 = arith.constant 0 : i32
    %c0_i32_0 = arith.constant 0 : i32
    %c0_i32_1 = arith.constant 0 : i32
    return %arg0, %1, %c0_i32, %c0_i32_0 : i32, i32, i32, i32
  }
  func.func @transform_20(%arg0: i32, %arg1: i32) -> (i32, i32, i32) {
    %c0_i32 = arith.constant 0 : i32
    %c0_i32_0 = arith.constant 0 : i32
    %c0_i32_1 = arith.constant 0 : i32
    %c0_i32_2 = arith.constant 0 : i32
    return %c0_i32, %c0_i32_0, %c0_i32_1 : i32, i32, i32
  }
  func.func @transform_21(%arg0: i32, %arg1: i32) -> (i32, i32) {
    %c0_i32 = arith.constant 0 : i32
    %c0_i32_0 = arith.constant 0 : i32
    %c0_i32_1 = arith.constant 0 : i32
    return %c0_i32, %c0_i32_0 : i32, i32
  }
  func.func @transform_22(%arg0: i32, %arg1: i32) -> (i32, i32, i32, i32) {
    %c0_i32 = arith.constant 0 : i32
    %c0_i32_0 = arith.constant 0 : i32
    %c0_i32_1 = arith.constant 0 : i32
    return %arg0, %arg1, %c0_i32, %c0_i32_0 : i32, i32, i32, i32
  }
}

</mosaic_0001>

<llo_original>
// kernel: fam_forward_nhwc.1
$region0: #{fam_forward_nhwc.1}
  #allocation0 [shape = 'u32[]', space=smem, size = 0x4, offset = 0x4, fixed_abs, tag = 'smem constant byte address 0x4 - core index']
  #allocation1 [shape = 'u32[144,128]{1,0:T(1,128)}', space=vmem, size = 0x12000, scoped, tag = 'internal scratch']
  %s0 = inlined_call_operand.vmem [shape: bf16[2,18,18,4], index: 0, kind: input, shape index: {}, may-alias: {0,1,2,3,4,5,6,7,8,9}]
  %s1 = inlined_call_operand.vmem [shape: bf16[2,18,18,4], index: 1, kind: input, shape index: {}, may-alias: {0,1,2,3,4,5,6,7,8,9}]
  %s2 = inlined_call_operand.vmem [shape: bf16[2,18,18,4], index: 2, kind: input, shape index: {}, may-alias: {0,1,2,3,4,5,6,7,8,9}]
  %s3 = inlined_call_operand.vmem [shape: bf16[2,18,18,4], index: 3, kind: input, shape index: {}, may-alias: {0,1,2,3,4,5,6,7,8,9}]
  %s4 = inlined_call_operand.vmem [shape: bf16[2,18,18,4], index: 4, kind: input, shape index: {}, may-alias: {0,1,2,3,4,5,6,7,8,9}]
  %s5 = inlined_call_operand.vmem [shape: bf16[2,18,18,4], index: 5, kind: input, shape index: {}, may-alias: {0,1,2,3,4,5,6,7,8,9}]
  %s6 = inlined_call_operand.vmem [shape: bf16[2,18,18,4], index: 6, kind: input, shape index: {}, may-alias: {0,1,2,3,4,5,6,7,8,9}]
  %s7 = inlined_call_operand.vmem [shape: bf16[2,18,18,4], index: 7, kind: input, shape index: {}, may-alias: {0,1,2,3,4,5,6,7,8,9}]
  %s8 = inlined_call_operand.vmem [shape: bf16[2,18,18,4], index: 8, kind: input, shape index: {}, may-alias: {0,1,2,3,4,5,6,7,8,9}]
  %s9 = inlined_call_operand.vmem [shape: bf16[2,18,18,4], index: 9, kind: input, shape index: {}, may-alias: {0,1,2,3,4,5,6,7,8,9}]
  %s10 = inlined_call_operand.vmem [shape: bf16[2,18,18,4], index: 10, kind: input, shape index: {}, may-alias: {10,11,12,13,14,15,16,17,18,19}]
  %s11 = inlined_call_operand.vmem [shape: bf16[2,18,18,4], index: 11, kind: input, shape index: {}, may-alias: {10,11,12,13,14,15,16,17,18,19}]
  %s12 = inlined_call_operand.vmem [shape: bf16[2,18,18,4], index: 12, kind: input, shape index: {}, may-alias: {10,11,12,13,14,15,16,17,18,19}]
  %s13 = inlined_call_operand.vmem [shape: bf16[2,18,18,4], index: 13, kind: input, shape index: {}, may-alias: {10,11,12,13,14,15,16,17,18,19}]
  %s14 = inlined_call_operand.vmem [shape: bf16[2,18,18,4], index: 14, kind: input, shape index: {}, may-alias: {10,11,12,13,14,15,16,17,18,19}]
  %s15 = inlined_call_operand.vmem [shape: bf16[2,18,18,4], index: 15, kind: input, shape index: {}, may-alias: {10,11,12,13,14,15,16,17,18,19}]
  %s16 = inlined_call_operand.vmem [shape: bf16[2,18,18,4], index: 16, kind: input, shape index: {}, may-alias: {10,11,12,13,14,15,16,17,18,19}]
  %s17 = inlined_call_operand.vmem [shape: bf16[2,18,18,4], index: 17, kind: input, shape index: {}, may-alias: {10,11,12,13,14,15,16,17,18,19}]
  %s18 = inlined_call_operand.vmem [shape: bf16[2,18,18,4], index: 18, kind: input, shape index: {}, may-alias: {10,11,12,13,14,15,16,17,18,19}]
  %s19 = inlined_call_operand.vmem [shape: bf16[2,18,18,4], index: 19, kind: input, shape index: {}, may-alias: {10,11,12,13,14,15,16,17,18,19}]
  %s20 = inlined_call_operand.vmem [shape: bf16[18,4,4], index: 20, kind: input, shape index: {}]
  %s21 = inlined_call_operand.vmem [shape: f32[1,4], index: 21, kind: input, shape index: {}]
  %s22 = inlined_call_operand.vmem [shape: f32[2,16,16,4], index: 22, kind: output, shape index: {}]
  %s23 = sld [smem:[#allocation0]]
  $region121: #{fam_forward_nhwc.1} parent=0
    _
  %s25 = ssub.s32 1, %s23
  %s26 = scalar_select 0, %s25, %s23
  loop: start=0, step=1, limit=6
  $region2: #{fam_forward_nhwc.1} parent=0 // loop_pre_header
    _
  $region3: #{fam_forward_nhwc.1} parent=0 // loop_header
    %s28 = sphi 0, %s32
    %p29 = scmp.ge.s32.totalorder %s28, 6
    %s35 = sphi 0, %s47
    %s36 = sphi 0, %s43
    %s37 = sphi 0, %s35
    %s38 = sphi 0, %s36
    %s39 = sphi 0, %s37
    %s40 = sphi 0, %s38
    %s54 = sphi 0, %s56
    %s57 = sphi 0, %s54
    %s58 = sphi 0, %s57
    %s74 = sphi 0, %s58
    %s86 = sphi 0, %s88
    %s89 = sphi 0, %s86
    %s90 = sphi 0, %s89
    %s106 = sphi 0, %s90
    %s118 = sphi 0, %s120
    %s121 = sphi 0, %s118
    %s122 = sphi 0, %s121
    %s138 = sphi 0, %s122
    %s150 = sphi 0, %s152
    %s153 = sphi 0, %s150
    %s154 = sphi 0, %s153
    %s170 = sphi 0, %s154
    %s182 = sphi 0, %s184
    %s185 = sphi 0, %s182
    %s186 = sphi 0, %s185
    %s202 = sphi 0, %s186
    %s214 = sphi 0, %s216
    %s217 = sphi 0, %s214
    %s218 = sphi 0, %s217
    %s234 = sphi 0, %s218
    %s246 = sphi 0, %s248
    %s249 = sphi 0, %s246
    %s250 = sphi 0, %s249
    %s266 = sphi 0, %s250
    %s278 = sphi 0, %s280
    %s281 = sphi 0, %s278
    %s282 = sphi 0, %s281
    %s298 = sphi 0, %s282
    %s310 = sphi 0, %s312
    %s313 = sphi 0, %s310
    %s314 = sphi 0, %s313
    %s330 = sphi 0, %s314
    %s342 = sphi 0, %s344
    %s345 = sphi 0, %s342
    %s346 = sphi 0, %s345
    %s362 = sphi 0, %s346
    %s372 = sphi 0, %s374
    %s375 = sphi 0, %s372
    %s376 = sphi 0, %s375
    %s392 = sphi 0, %s376
    %s404 = sphi 0, %s406
    %s407 = sphi 0, %s404
    %s408 = sphi 0, %s407
    %s424 = sphi 0, %s408
    %s436 = sphi 0, %s438
    %s439 = sphi 0, %s436
    %s440 = sphi 0, %s439
    %s456 = sphi 0, %s440
    %s468 = sphi 0, %s470
    %s471 = sphi 0, %s468
    %s472 = sphi 0, %s471
    %s488 = sphi 0, %s472
    %s500 = sphi 0, %s502
    %s503 = sphi 0, %s500
    %s504 = sphi 0, %s503
    %s520 = sphi 0, %s504
    %s532 = sphi 0, %s534
    %s535 = sphi 0, %s532
    %s536 = sphi 0, %s535
    %s552 = sphi 0, %s536
    %s564 = sphi 0, %s566
    %s567 = sphi 0, %s564
    %s568 = sphi 0, %s567
    %s584 = sphi 0, %s568
    %s596 = sphi 0, %s598
    %s599 = sphi 0, %s596
    %s600 = sphi 0, %s599
    %s616 = sphi 0, %s600
    %s628 = sphi 0, %s630
    %s631 = sphi 0, %s628
    %s632 = sphi 0, %s631
    %s648 = sphi 0, %s632
    %s660 = sphi 0, %s662
    %s663 = sphi 0, %s660
    %s664 = sphi 0, %s663
    %s680 = sphi 0, %s664
    %s684 = sphi 0, %s684
    %s686 = sphi 0, %s684
    %s687 = sphi 0, %s686
    %s701 = sphi 0, %s687
    %s705 = sphi 0, %s705
    %s707 = sphi 0, %s705
    %s708 = sphi 0, %s707
    %s722 = sphi 0, %s708
    %s730 = sphi 0, %s732
    %s733 = sphi 0, %s730
    %s734 = sphi 0, %s733
    %s750 = sphi 0, %s734
  $region4: #{fam_forward_nhwc.1} parent=0 // loop_header_branch
    %31 = sbr.rel (%p29) target = $region8
  $region5: #{fam_forward_nhwc.1} parent=0 // loop_body
    %s33 = ssub.s32 %s28, 1
    %s34 = ssub.s32 %s28, 2
    %s41 = sadd.s32 1, %s36
    %p42 = scmp.ge.s32.totalorder %s41, 2
    %s43 = scalar_select %p42, 0, %s41
    %s44 = sadd.s32 1, %s35
    %s45 = scalar_select %p42, %s44, %s35
    %p46 = scmp.ge.s32.totalorder %s45, 2
    %s47 = scalar_select %p46, 0, %s45
    %s48 = smul.u32 %s36, 8
    %s49 = smul.u32 %s43, 8
    %s50 = ssub.s32 %s35, %s47
    %s51 = ssub.s32 %s48, %s49
    %s52 = sor.u32 %s50, %s51
    %p53 = scmp.eq.s32.totalorder %s52, 0
    %s55 = sadd.s32 %s54, 1
    %s56 = scalar_select %p53, %s54, %s55
    %p59 = pneg %p53
    %p60 = scmp.eq.s32.totalorder %s28, 3
    %p61 = por %p59, %p60
    %p62 = scmp.ne.s32.totalorder %s54, %s57
    %p63 = scmp.eq.s32.totalorder %s28, 0
    %p64 = por %p62, %p63
    %p65 = scmp.ne.s32.totalorder %s54, %s57
    %p66 = scmp.eq.s32.totalorder %s33, 3
    %p67 = por %p65, %p66
    %p68 = scmp.ne.s32.totalorder %s57, %s58
    %p69 = scmp.eq.s32.totalorder %s33, 0
    %p70 = por %p68, %p69
    %p71 = scmp.ne.s32.totalorder %s57, %s58
    %p72 = scmp.eq.s32.totalorder %s34, 3
    %p73 = por %p71, %p72
    %p75 = scmp.ne.s32.totalorder %s58, %s74
    %p76 = scmp.eq.s32.totalorder %s34, 0
    %p77 = por %p75, %p76
    %s78 = smul.u32 %s36, 8
    %s79 = sadd.s32 %s78, 1
    %s80 = smul.u32 %s43, 8
    %s81 = sadd.s32 %s80, 1
    %s82 = ssub.s32 %s35, %s47
    %s83 = ssub.s32 %s79, %s81
    %s84 = sor.u32 %s82, %s83
    %p85 = scmp.eq.s32.totalorder %s84, 0
    %s87 = sadd.s32 %s86, 1
    %s88 = scalar_select %p85, %s86, %s87
    %p91 = pneg %p85
    %p92 = scmp.eq.s32.totalorder %s28, 3
    %p93 = por %p91, %p92
    %p94 = scmp.ne.s32.totalorder %s86, %s89
    %p95 = scmp.eq.s32.totalorder %s28, 0
    %p96 = por %p94, %p95
    %p97 = scmp.ne.s32.totalorder %s86, %s89
    %p98 = scmp.eq.s32.totalorder %s33, 3
    %p99 = por %p97, %p98
    %p100 = scmp.ne.s32.totalorder %s89, %s90
    %p101 = scmp.eq.s32.totalorder %s33, 0
    %p102 = por %p100, %p101
    %p103 = scmp.ne.s32.totalorder %s89, %s90
    %p104 = scmp.eq.s32.totalorder %s34, 3
    %p105 = por %p103, %p104
    %p107 = scmp.ne.s32.totalorder %s90, %s106
    %p108 = scmp.eq.s32.totalorder %s34, 0
    %p109 = por %p107, %p108
    %s110 = smul.u32 %s36, 8
    %s111 = sadd.s32 %s110, 2
    %s112 = smul.u32 %s43, 8
    %s113 = sadd.s32 %s112, 2
    %s114 = ssub.s32 %s35, %s47
    %s115 = ssub.s32 %s111, %s113
    %s116 = sor.u32 %s114, %s115
    %p117 = scmp.eq.s32.totalorder %s116, 0
    %s119 = sadd.s32 %s118, 1
    %s120 = scalar_select %p117, %s118, %s119
    %p123 = pneg %p117
    %p124 = scmp.eq.s32.totalorder %s28, 3
    %p125 = por %p123, %p124
    %p126 = scmp.ne.s32.totalorder %s118, %s121
    %p127 = scmp.eq.s32.totalorder %s28, 0
    %p128 = por %p126, %p127
    %p129 = scmp.ne.s32.totalorder %s118, %s121
    %p130 = scmp.eq.s32.totalorder %s33, 3
    %p131 = por %p129, %p130
    %p132 = scmp.ne.s32.totalorder %s121, %s122
    %p133 = scmp.eq.s32.totalorder %s33, 0
    %p134 = por %p132, %p133
    %p135 = scmp.ne.s32.totalorder %s121, %s122
    %p136 = scmp.eq.s32.totalorder %s34, 3
    %p137 = por %p135, %p136
    %p139 = scmp.ne.s32.totalorder %s122, %s138
    %p140 = scmp.eq.s32.totalorder %s34, 0
    %p141 = por %p139, %p140
    %s142 = smul.u32 %s36, 8
    %s143 = sadd.s32 %s142, 3
    %s144 = smul.u32 %s43, 8
    %s145 = sadd.s32 %s144, 3
    %s146 = ssub.s32 %s35, %s47
    %s147 = ssub.s32 %s143, %s145
    %s148 = sor.u32 %s146, %s147
    %p149 = scmp.eq.s32.totalorder %s148, 0
    %s151 = sadd.s32 %s150, 1
    %s152 = scalar_select %p149, %s150, %s151
    %p155 = pneg %p149
    %p156 = scmp.eq.s32.totalorder %s28, 3
    %p157 = por %p155, %p156
    %p158 = scmp.ne.s32.totalorder %s150, %s153
    %p159 = scmp.eq.s32.totalorder %s28, 0
    %p160 = por %p158, %p159
    %p161 = scmp.ne.s32.totalorder %s150, %s153
    %p162 = scmp.eq.s32.totalorder %s33, 3
    %p163 = por %p161, %p162
    %p164 = scmp.ne.s32.totalorder %s153, %s154
    %p165 = scmp.eq.s32.totalorder %s33, 0
    %p166 = por %p164, %p165
    %p167 = scmp.ne.s32.totalorder %s153, %s154
    %p168 = scmp.eq.s32.totalorder %s34, 3
    %p169 = por %p167, %p168
    %p171 = scmp.ne.s32.totalorder %s154, %s170
    %p172 = scmp.eq.s32.totalorder %s34, 0
    %p173 = por %p171, %p172
    %s174 = smul.u32 %s36, 8
    %s175 = sadd.s32 %s174, 4
    %s176 = smul.u32 %s43, 8
    %s177 = sadd.s32 %s176, 4
    %s178 = ssub.s32 %s35, %s47
    %s179 = ssub.s32 %s175, %s177
    %s180 = sor.u32 %s178, %s179
    %p181 = scmp.eq.s32.totalorder %s180, 0
    %s183 = sadd.s32 %s182, 1
    %s184 = scalar_select %p181, %s182, %s183
    %p187 = pneg %p181
    %p188 = scmp.eq.s32.totalorder %s28, 3
    %p189 = por %p187, %p188
    %p190 = scmp.ne.s32.totalorder %s182, %s185
    %p191 = scmp.eq.s32.totalorder %s28, 0
    %p192 = por %p190, %p191
    %p193 = scmp.ne.s32.totalorder %s182, %s185
    %p194 = scmp.eq.s32.totalorder %s33, 3
    %p195 = por %p193, %p194
    %p196 = scmp.ne.s32.totalorder %s185, %s186
    %p197 = scmp.eq.s32.totalorder %s33, 0
    %p198 = por %p196, %p197
    %p199 = scmp.ne.s32.totalorder %s185, %s186
    %p200 = scmp.eq.s32.totalorder %s34, 3
    %p201 = por %p199, %p200
    %p203 = scmp.ne.s32.totalorder %s186, %s202
    %p204 = scmp.eq.s32.totalorder %s34, 0
    %p205 = por %p203, %p204
    %s206 = smul.u32 %s36, 8
    %s207 = sadd.s32 %s206, 5
    %s208 = smul.u32 %s43, 8
    %s209 = sadd.s32 %s208, 5
    %s210 = ssub.s32 %s35, %s47
    %s211 = ssub.s32 %s207, %s209
    %s212 = sor.u32 %s210, %s211
    %p213 = scmp.eq.s32.totalorder %s212, 0
    %s215 = sadd.s32 %s214, 1
    %s216 = scalar_select %p213, %s214, %s215
    %p219 = pneg %p213
    %p220 = scmp.eq.s32.totalorder %s28, 3
    %p221 = por %p219, %p220
    %p222 = scmp.ne.s32.totalorder %s214, %s217
    %p223 = scmp.eq.s32.totalorder %s28, 0
    %p224 = por %p222, %p223
    %p225 = scmp.ne.s32.totalorder %s214, %s217
    %p226 = scmp.eq.s32.totalorder %s33, 3
    %p227 = por %p225, %p226
    %p228 = scmp.ne.s32.totalorder %s217, %s218
    %p229 = scmp.eq.s32.totalorder %s33, 0
    %p230 = por %p228, %p229
    %p231 = scmp.ne.s32.totalorder %s217, %s218
    %p232 = scmp.eq.s32.totalorder %s34, 3
    %p233 = por %p231, %p232
    %p235 = scmp.ne.s32.totalorder %s218, %s234
    %p236 = scmp.eq.s32.totalorder %s34, 0
    %p237 = por %p235, %p236
    %s238 = smul.u32 %s36, 8
    %s239 = sadd.s32 %s238, 6
    %s240 = smul.u32 %s43, 8
    %s241 = sadd.s32 %s240, 6
    %s242 = ssub.s32 %s35, %s47
    %s243 = ssub.s32 %s239, %s241
    %s244 = sor.u32 %s242, %s243
    %p245 = scmp.eq.s32.totalorder %s244, 0
    %s247 = sadd.s32 %s246, 1
    %s248 = scalar_select %p245, %s246, %s247
    %p251 = pneg %p245
    %p252 = scmp.eq.s32.totalorder %s28, 3
    %p253 = por %p251, %p252
    %p254 = scmp.ne.s32.totalorder %s246, %s249
    %p255 = scmp.eq.s32.totalorder %s28, 0
    %p256 = por %p254, %p255
    %p257 = scmp.ne.s32.totalorder %s246, %s249
    %p258 = scmp.eq.s32.totalorder %s33, 3
    %p259 = por %p257, %p258
    %p260 = scmp.ne.s32.totalorder %s249, %s250
    %p261 = scmp.eq.s32.totalorder %s33, 0
    %p262 = por %p260, %p261
    %p263 = scmp.ne.s32.totalorder %s249, %s250
    %p264 = scmp.eq.s32.totalorder %s34, 3
    %p265 = por %p263, %p264
    %p267 = scmp.ne.s32.totalorder %s250, %s266
    %p268 = scmp.eq.s32.totalorder %s34, 0
    %p269 = por %p267, %p268
    %s270 = smul.u32 %s36, 8
    %s271 = sadd.s32 %s270, 7
    %s272 = smul.u32 %s43, 8
    %s273 = sadd.s32 %s272, 7
    %s274 = ssub.s32 %s35, %s47
    %s275 = ssub.s32 %s271, %s273
    %s276 = sor.u32 %s274, %s275
    %p277 = scmp.eq.s32.totalorder %s276, 0
    %s279 = sadd.s32 %s278, 1
    %s280 = scalar_select %p277, %s278, %s279
    %p283 = pneg %p277
    %p284 = scmp.eq.s32.totalorder %s28, 3
    %p285 = por %p283, %p284
    %p286 = scmp.ne.s32.totalorder %s278, %s281
    %p287 = scmp.eq.s32.totalorder %s28, 0
    %p288 = por %p286, %p287
    %p289 = scmp.ne.s32.totalorder %s278, %s281
    %p290 = scmp.eq.s32.totalorder %s33, 3
    %p291 = por %p289, %p290
    %p292 = scmp.ne.s32.totalorder %s281, %s282
    %p293 = scmp.eq.s32.totalorder %s33, 0
    %p294 = por %p292, %p293
    %p295 = scmp.ne.s32.totalorder %s281, %s282
    %p296 = scmp.eq.s32.totalorder %s34, 3
    %p297 = por %p295, %p296
    %p299 = scmp.ne.s32.totalorder %s282, %s298
    %p300 = scmp.eq.s32.totalorder %s34, 0
    %p301 = por %p299, %p300
    %s302 = smul.u32 %s36, 8
    %s303 = sadd.s32 %s302, 8
    %s304 = smul.u32 %s43, 8
    %s305 = sadd.s32 %s304, 8
    %s306 = ssub.s32 %s35, %s47
    %s307 = ssub.s32 %s303, %s305
    %s308 = sor.u32 %s306, %s307
    %p309 = scmp.eq.s32.totalorder %s308, 0
    %s311 = sadd.s32 %s310, 1
    %s312 = scalar_select %p309, %s310, %s311
    %p315 = pneg %p309
    %p316 = scmp.eq.s32.totalorder %s28, 3
    %p317 = por %p315, %p316
    %p318 = scmp.ne.s32.totalorder %s310, %s313
    %p319 = scmp.eq.s32.totalorder %s28, 0
    %p320 = por %p318, %p319
    %p321 = scmp.ne.s32.totalorder %s310, %s313
    %p322 = scmp.eq.s32.totalorder %s33, 3
    %p323 = por %p321, %p322
    %p324 = scmp.ne.s32.totalorder %s313, %s314
    %p325 = scmp.eq.s32.totalorder %s33, 0
    %p326 = por %p324, %p325
    %p327 = scmp.ne.s32.totalorder %s313, %s314
    %p328 = scmp.eq.s32.totalorder %s34, 3
    %p329 = por %p327, %p328
    %p331 = scmp.ne.s32.totalorder %s314, %s330
    %p332 = scmp.eq.s32.totalorder %s34, 0
    %p333 = por %p331, %p332
    %s334 = smul.u32 %s36, 8
    %s335 = sadd.s32 %s334, 9
    %s336 = smul.u32 %s43, 8
    %s337 = sadd.s32 %s336, 9
    %s338 = ssub.s32 %s35, %s47
    %s339 = ssub.s32 %s335, %s337
    %s340 = sor.u32 %s338, %s339
    %p341 = scmp.eq.s32.totalorder %s340, 0
    %s343 = sadd.s32 %s342, 1
    %s344 = scalar_select %p341, %s342, %s343
    %p347 = pneg %p341
    %p348 = scmp.eq.s32.totalorder %s28, 3
    %p349 = por %p347, %p348
    %p350 = scmp.ne.s32.totalorder %s342, %s345
    %p351 = scmp.eq.s32.totalorder %s28, 0
    %p352 = por %p350, %p351
    %p353 = scmp.ne.s32.totalorder %s342, %s345
    %p354 = scmp.eq.s32.totalorder %s33, 3
    %p355 = por %p353, %p354
    %p356 = scmp.ne.s32.totalorder %s345, %s346
    %p357 = scmp.eq.s32.totalorder %s33, 0
    %p358 = por %p356, %p357
    %p359 = scmp.ne.s32.totalorder %s345, %s346
    %p360 = scmp.eq.s32.totalorder %s34, 3
    %p361 = por %p359, %p360
    %p363 = scmp.ne.s32.totalorder %s346, %s362
    %p364 = scmp.eq.s32.totalorder %s34, 0
    %p365 = por %p363, %p364
    %s366 = smul.u32 %s36, 8
    %s367 = smul.u32 %s43, 8
    %s368 = ssub.s32 %s35, %s47
    %s369 = ssub.s32 %s366, %s367
    %s370 = sor.u32 %s368, %s369
    %p371 = scmp.eq.s32.totalorder %s370, 0
    %s373 = sadd.s32 %s372, 1
    %s374 = scalar_select %p371, %s372, %s373
    %p377 = pneg %p371
    %p378 = scmp.eq.s32.totalorder %s28, 3
    %p379 = por %p377, %p378
    %p380 = scmp.ne.s32.totalorder %s372, %s375
    %p381 = scmp.eq.s32.totalorder %s28, 0
    %p382 = por %p380, %p381
    %p383 = scmp.ne.s32.totalorder %s372, %s375
    %p384 = scmp.eq.s32.totalorder %s33, 3
    %p385 = por %p383, %p384
    %p386 = scmp.ne.s32.totalorder %s375, %s376
    %p387 = scmp.eq.s32.totalorder %s33, 0
    %p388 = por %p386, %p387
    %p389 = scmp.ne.s32.totalorder %s375, %s376
    %p390 = scmp.eq.s32.totalorder %s34, 3
    %p391 = por %p389, %p390
    %p393 = scmp.ne.s32.totalorder %s376, %s392
    %p394 = scmp.eq.s32.totalorder %s34, 0
    %p395 = por %p393, %p394
    %s396 = smul.u32 %s36, 8
    %s397 = sadd.s32 %s396, 1
    %s398 = smul.u32 %s43, 8
    %s399 = sadd.s32 %s398, 1
    %s400 = ssub.s32 %s35, %s47
    %s401 = ssub.s32 %s397, %s399
    %s402 = sor.u32 %s400, %s401
    %p403 = scmp.eq.s32.totalorder %s402, 0
    %s405 = sadd.s32 %s404, 1
    %s406 = scalar_select %p403, %s404, %s405
    %p409 = pneg %p403
    %p410 = scmp.eq.s32.totalorder %s28, 3
    %p411 = por %p409, %p410
    %p412 = scmp.ne.s32.totalorder %s404, %s407
    %p413 = scmp.eq.s32.totalorder %s28, 0
    %p414 = por %p412, %p413
    %p415 = scmp.ne.s32.totalorder %s404, %s407
    %p416 = scmp.eq.s32.totalorder %s33, 3
    %p417 = por %p415, %p416
    %p418 = scmp.ne.s32.totalorder %s407, %s408
    %p419 = scmp.eq.s32.totalorder %s33, 0
    %p420 = por %p418, %p419
    %p421 = scmp.ne.s32.totalorder %s407, %s408
    %p422 = scmp.eq.s32.totalorder %s34, 3
    %p423 = por %p421, %p422
    %p425 = scmp.ne.s32.totalorder %s408, %s424
    %p426 = scmp.eq.s32.totalorder %s34, 0
    %p427 = por %p425, %p426
    %s428 = smul.u32 %s36, 8
    %s429 = sadd.s32 %s428, 2
    %s430 = smul.u32 %s43, 8
    %s431 = sadd.s32 %s430, 2
    %s432 = ssub.s32 %s35, %s47
    %s433 = ssub.s32 %s429, %s431
    %s434 = sor.u32 %s432, %s433
    %p435 = scmp.eq.s32.totalorder %s434, 0
    %s437 = sadd.s32 %s436, 1
    %s438 = scalar_select %p435, %s436, %s437
    %p441 = pneg %p435
    %p442 = scmp.eq.s32.totalorder %s28, 3
    %p443 = por %p441, %p442
    %p444 = scmp.ne.s32.totalorder %s436, %s439
    %p445 = scmp.eq.s32.totalorder %s28, 0
    %p446 = por %p444, %p445
    %p447 = scmp.ne.s32.totalorder %s436, %s439
    %p448 = scmp.eq.s32.totalorder %s33, 3
    %p449 = por %p447, %p448
    %p450 = scmp.ne.s32.totalorder %s439, %s440
    %p451 = scmp.eq.s32.totalorder %s33, 0
    %p452 = por %p450, %p451
    %p453 = scmp.ne.s32.totalorder %s439, %s440
    %p454 = scmp.eq.s32.totalorder %s34, 3
    %p455 = por %p453, %p454
    %p457 = scmp.ne.s32.totalorder %s440, %s456
    %p458 = scmp.eq.s32.totalorder %s34, 0
    %p459 = por %p457, %p458
    %s460 = smul.u32 %s36, 8
    %s461 = sadd.s32 %s460, 3
    %s462 = smul.u32 %s43, 8
    %s463 = sadd.s32 %s462, 3
    %s464 = ssub.s32 %s35, %s47
    %s465 = ssub.s32 %s461, %s463
    %s466 = sor.u32 %s464, %s465
    %p467 = scmp.eq.s32.totalorder %s466, 0
    %s469 = sadd.s32 %s468, 1
    %s470 = scalar_select %p467, %s468, %s469
    %p473 = pneg %p467
    %p474 = scmp.eq.s32.totalorder %s28, 3
    %p475 = por %p473, %p474
    %p476 = scmp.ne.s32.totalorder %s468, %s471
    %p477 = scmp.eq.s32.totalorder %s28, 0
    %p478 = por %p476, %p477
    %p479 = scmp.ne.s32.totalorder %s468, %s471
    %p480 = scmp.eq.s32.totalorder %s33, 3
    %p481 = por %p479, %p480
    %p482 = scmp.ne.s32.totalorder %s471, %s472
    %p483 = scmp.eq.s32.totalorder %s33, 0
    %p484 = por %p482, %p483
    %p485 = scmp.ne.s32.totalorder %s471, %s472
    %p486 = scmp.eq.s32.totalorder %s34, 3
    %p487 = por %p485, %p486
    %p489 = scmp.ne.s32.totalorder %s472, %s488
    %p490 = scmp.eq.s32.totalorder %s34, 0
    %p491 = por %p489, %p490
    %s492 = smul.u32 %s36, 8
    %s493 = sadd.s32 %s492, 4
    %s494 = smul.u32 %s43, 8
    %s495 = sadd.s32 %s494, 4
    %s496 = ssub.s32 %s35, %s47
    %s497 = ssub.s32 %s493, %s495
    %s498 = sor.u32 %s496, %s497
    %p499 = scmp.eq.s32.totalorder %s498, 0
    %s501 = sadd.s32 %s500, 1
    %s502 = scalar_select %p499, %s500, %s501
    %p505 = pneg %p499
    %p506 = scmp.eq.s32.totalorder %s28, 3
    %p507 = por %p505, %p506
    %p508 = scmp.ne.s32.totalorder %s500, %s503
    %p509 = scmp.eq.s32.totalorder %s28, 0
    %p510 = por %p508, %p509
    %p511 = scmp.ne.s32.totalorder %s500, %s503
    %p512 = scmp.eq.s32.totalorder %s33, 3
    %p513 = por %p511, %p512
    %p514 = scmp.ne.s32.totalorder %s503, %s504
    %p515 = scmp.eq.s32.totalorder %s33, 0
    %p516 = por %p514, %p515
    %p517 = scmp.ne.s32.totalorder %s503, %s504
    %p518 = scmp.eq.s32.totalorder %s34, 3
    %p519 = por %p517, %p518
    %p521 = scmp.ne.s32.totalorder %s504, %s520
    %p522 = scmp.eq.s32.totalorder %s34, 0
    %p523 = por %p521, %p522
    %s524 = smul.u32 %s36, 8
    %s525 = sadd.s32 %s524, 5
    %s526 = smul.u32 %s43, 8
    %s527 = sadd.s32 %s526, 5
    %s528 = ssub.s32 %s35, %s47
    %s529 = ssub.s32 %s525, %s527
    %s530 = sor.u32 %s528, %s529
    %p531 = scmp.eq.s32.totalorder %s530, 0
    %s533 = sadd.s32 %s532, 1
    %s534 = scalar_select %p531, %s532, %s533
    %p537 = pneg %p531
    %p538 = scmp.eq.s32.totalorder %s28, 3
    %p539 = por %p537, %p538
    %p540 = scmp.ne.s32.totalorder %s532, %s535
    %p541 = scmp.eq.s32.totalorder %s28, 0
    %p542 = por %p540, %p541
    %p543 = scmp.ne.s32.totalorder %s532, %s535
    %p544 = scmp.eq.s32.totalorder %s33, 3
    %p545 = por %p543, %p544
    %p546 = scmp.ne.s32.totalorder %s535, %s536
    %p547 = scmp.eq.s32.totalorder %s33, 0
    %p548 = por %p546, %p547
    %p549 = scmp.ne.s32.totalorder %s535, %s536
    %p550 = scmp.eq.s32.totalorder %s34, 3
    %p551 = por %p549, %p550
    %p553 = scmp.ne.s32.totalorder %s536, %s552
    %p554 = scmp.eq.s32.totalorder %s34, 0
    %p555 = por %p553, %p554
    %s556 = smul.u32 %s36, 8
    %s557 = sadd.s32 %s556, 6
    %s558 = smul.u32 %s43, 8
    %s559 = sadd.s32 %s558, 6
    %s560 = ssub.s32 %s35, %s47
    %s561 = ssub.s32 %s557, %s559
    %s562 = sor.u32 %s560, %s561
    %p563 = scmp.eq.s32.totalorder %s562, 0
    %s565 = sadd.s32 %s564, 1
    %s566 = scalar_select %p563, %s564, %s565
    %p569 = pneg %p563
    %p570 = scmp.eq.s32.totalorder %s28, 3
    %p571 = por %p569, %p570
    %p572 = scmp.ne.s32.totalorder %s564, %s567
    %p573 = scmp.eq.s32.totalorder %s28, 0
    %p574 = por %p572, %p573
    %p575 = scmp.ne.s32.totalorder %s564, %s567
    %p576 = scmp.eq.s32.totalorder %s33, 3
    %p577 = por %p575, %p576
    %p578 = scmp.ne.s32.totalorder %s567, %s568
    %p579 = scmp.eq.s32.totalorder %s33, 0
    %p580 = por %p578, %p579
    %p581 = scmp.ne.s32.totalorder %s567, %s568
    %p582 = scmp.eq.s32.totalorder %s34, 3
    %p583 = por %p581, %p582
    %p585 = scmp.ne.s32.totalorder %s568, %s584
    %p586 = scmp.eq.s32.totalorder %s34, 0
    %p587 = por %p585, %p586
    %s588 = smul.u32 %s36, 8
    %s589 = sadd.s32 %s588, 7
    %s590 = smul.u32 %s43, 8
    %s591 = sadd.s32 %s590, 7
    %s592 = ssub.s32 %s35, %s47
    %s593 = ssub.s32 %s589, %s591
    %s594 = sor.u32 %s592, %s593
    %p595 = scmp.eq.s32.totalorder %s594, 0
    %s597 = sadd.s32 %s596, 1
    %s598 = scalar_select %p595, %s596, %s597
    %p601 = pneg %p595
    %p602 = scmp.eq.s32.totalorder %s28, 3
    %p603 = por %p601, %p602
    %p604 = scmp.ne.s32.totalorder %s596, %s599
    %p605 = scmp.eq.s32.totalorder %s28, 0
    %p606 = por %p604, %p605
    %p607 = scmp.ne.s32.totalorder %s596, %s599
    %p608 = scmp.eq.s32.totalorder %s33, 3
    %p609 = por %p607, %p608
    %p610 = scmp.ne.s32.totalorder %s599, %s600
    %p611 = scmp.eq.s32.totalorder %s33, 0
    %p612 = por %p610, %p611
    %p613 = scmp.ne.s32.totalorder %s599, %s600
    %p614 = scmp.eq.s32.totalorder %s34, 3
    %p615 = por %p613, %p614
    %p617 = scmp.ne.s32.totalorder %s600, %s616
    %p618 = scmp.eq.s32.totalorder %s34, 0
    %p619 = por %p617, %p618
    %s620 = smul.u32 %s36, 8
    %s621 = sadd.s32 %s620, 8
    %s622 = smul.u32 %s43, 8
    %s623 = sadd.s32 %s622, 8
    %s624 = ssub.s32 %s35, %s47
    %s625 = ssub.s32 %s621, %s623
    %s626 = sor.u32 %s624, %s625
    %p627 = scmp.eq.s32.totalorder %s626, 0
    %s629 = sadd.s32 %s628, 1
    %s630 = scalar_select %p627, %s628, %s629
    %p633 = pneg %p627
    %p634 = scmp.eq.s32.totalorder %s28, 3
    %p635 = por %p633, %p634
    %p636 = scmp.ne.s32.totalorder %s628, %s631
    %p637 = scmp.eq.s32.totalorder %s28, 0
    %p638 = por %p636, %p637
    %p639 = scmp.ne.s32.totalorder %s628, %s631
    %p640 = scmp.eq.s32.totalorder %s33, 3
    %p641 = por %p639, %p640
    %p642 = scmp.ne.s32.totalorder %s631, %s632
    %p643 = scmp.eq.s32.totalorder %s33, 0
    %p644 = por %p642, %p643
    %p645 = scmp.ne.s32.totalorder %s631, %s632
    %p646 = scmp.eq.s32.totalorder %s34, 3
    %p647 = por %p645, %p646
    %p649 = scmp.ne.s32.totalorder %s632, %s648
    %p650 = scmp.eq.s32.totalorder %s34, 0
    %p651 = por %p649, %p650
    %s652 = smul.u32 %s36, 8
    %s653 = sadd.s32 %s652, 9
    %s654 = smul.u32 %s43, 8
    %s655 = sadd.s32 %s654, 9
    %s656 = ssub.s32 %s35, %s47
    %s657 = ssub.s32 %s653, %s655
    %s658 = sor.u32 %s656, %s657
    %p659 = scmp.eq.s32.totalorder %s658, 0
    %s661 = sadd.s32 %s660, 1
    %s662 = scalar_select %p659, %s660, %s661
    %p665 = pneg %p659
    %p666 = scmp.eq.s32.totalorder %s28, 3
    %p667 = por %p665, %p666
    %p668 = scmp.ne.s32.totalorder %s660, %s663
    %p669 = scmp.eq.s32.totalorder %s28, 0
    %p670 = por %p668, %p669
    %p671 = scmp.ne.s32.totalorder %s660, %s663
    %p672 = scmp.eq.s32.totalorder %s33, 3
    %p673 = por %p671, %p672
    %p674 = scmp.ne.s32.totalorder %s663, %s664
    %p675 = scmp.eq.s32.totalorder %s33, 0
    %p676 = por %p674, %p675
    %p677 = scmp.ne.s32.totalorder %s663, %s664
    %p678 = scmp.eq.s32.totalorder %s34, 3
    %p679 = por %p677, %p678
    %p681 = scmp.ne.s32.totalorder %s664, %s680
    %p682 = scmp.eq.s32.totalorder %s34, 0
    %p683 = por %p681, %p682
    %s685 = sadd.s32 %s684, 1
    %p688 = scmp.eq.s32.totalorder %s28, 3
    %p689 = scmp.ne.s32.totalorder %s684, %s686
    %p690 = scmp.eq.s32.totalorder %s28, 0
    %p691 = por %p689, %p690
    %p692 = scmp.ne.s32.totalorder %s684, %s686
    %p693 = scmp.eq.s32.totalorder %s33, 3
    %p694 = por %p692, %p693
    %p695 = scmp.ne.s32.totalorder %s686, %s687
    %p696 = scmp.eq.s32.totalorder %s33, 0
    %p697 = por %p695, %p696
    %p698 = scmp.ne.s32.totalorder %s686, %s687
    %p699 = scmp.eq.s32.totalorder %s34, 3
    %p700 = por %p698, %p699
    %p702 = scmp.ne.s32.totalorder %s687, %s701
    %p703 = scmp.eq.s32.totalorder %s34, 0
    %p704 = por %p702, %p703
    %s706 = sadd.s32 %s705, 1
    %p709 = scmp.eq.s32.totalorder %s28, 3
    %p710 = scmp.ne.s32.totalorder %s705, %s707
    %p711 = scmp.eq.s32.totalorder %s28, 0
    %p712 = por %p710, %p711
    %p713 = scmp.ne.s32.totalorder %s705, %s707
    %p714 = scmp.eq.s32.totalorder %s33, 3
    %p715 = por %p713, %p714
    %p716 = scmp.ne.s32.totalorder %s707, %s708
    %p717 = scmp.eq.s32.totalorder %s33, 0
    %p718 = por %p716, %p717
    %p719 = scmp.ne.s32.totalorder %s707, %s708
    %p720 = scmp.eq.s32.totalorder %s34, 3
    %p721 = por %p719, %p720
    %p723 = scmp.ne.s32.totalorder %s708, %s722
    %p724 = scmp.eq.s32.totalorder %s34, 0
    %p725 = por %p723, %p724
    %s726 = ssub.s32 %s35, %s47
    %s727 = ssub.s32 %s36, %s43
    %s728 = sor.u32 %s726, %s727
    %p729 = scmp.eq.s32.totalorder %s728, 0
    %s731 = sadd.s32 %s730, 1
    %s732 = scalar_select %p729, %s730, %s731
    %p735 = pneg %p729
    %p736 = scmp.eq.s32.totalorder %s28, 3
    %p737 = por %p735, %p736
    %p738 = scmp.ne.s32.totalorder %s730, %s733
    %p739 = scmp.eq.s32.totalorder %s28, 0
    %p740 = por %p738, %p739
    %p741 = scmp.ne.s32.totalorder %s730, %s733
    %p742 = scmp.eq.s32.totalorder %s33, 3
    %p743 = por %p741, %p742
    %p744 = scmp.ne.s32.totalorder %s733, %s734
    %p745 = scmp.eq.s32.totalorder %s33, 0
    %p746 = por %p744, %p745
    %p747 = scmp.ne.s32.totalorder %s733, %s734
    %p748 = scmp.eq.s32.totalorder %s34, 3
    %p749 = por %p747, %p748
    %p751 = scmp.ne.s32.totalorder %s734, %s750
    %p752 = scmp.eq.s32.totalorder %s34, 0
    %p753 = por %p751, %p752
    %p754 = scmp.le.s32.totalorder 1, %s28
    %p755 = scmp.lt.s32.totalorder %s28, 5
    %p756 = pnand %p754, %p755
    %p757 = pneg %p756
    // Predicated region
    $region9: #{fam_forward_nhwc.1} parent=5 // pred_check
      _
    $region10: #{fam_forward_nhwc.1} parent=5 // pred_check_branch
      %759 = sbr.rel (%p756) target = $region12
    $region11: #{fam_forward_nhwc.1} parent=5 // pred_region
      %s760 = ssub.s32 %s28, 1
      // Predicated region
      $region13: #{fam_forward_nhwc.1} parent=11 // pred_check
        %p761 = pneg %p697
      $region14: #{fam_forward_nhwc.1} parent=11 // pred_check_branch
        %763 = sbr.rel (%p761) target = $region16
      $region15: #{fam_forward_nhwc.1} parent=11 // pred_region
        _
      $region16: #{fam_forward_nhwc.1} parent=11 // pred_fallthru
        _
      // Predicated region
      $region17: #{fam_forward_nhwc.1} parent=11 // pred_check
        %p764 = pneg %p718
      $region18: #{fam_forward_nhwc.1} parent=11 // pred_check_branch
        %766 = sbr.rel (%p764) target = $region20
      $region19: #{fam_forward_nhwc.1} parent=11 // pred_region
        _
      $region20: #{fam_forward_nhwc.1} parent=11 // pred_fallthru
        _
    $region12: #{fam_forward_nhwc.1} parent=5 // pred_fallthru
      _
    %p767 = scmp.lt.s32.totalorder %s28, 4
    // Predicated region
    $region21: #{fam_forward_nhwc.1} parent=5 // pred_check
      %p768 = pneg %p767
    $region22: #{fam_forward_nhwc.1} parent=5 // pred_check_branch
      %770 = sbr.rel (%p768) target = $region24
    $region23: #{fam_forward_nhwc.1} parent=5 // pred_region
      // Predicated region
      $region25: #{fam_forward_nhwc.1} parent=23 // pred_check
        %p771 = pneg %p64
      $region26: #{fam_forward_nhwc.1} parent=23 // pred_check_branch
        %773 = sbr.rel (%p771) target = $region28
      $region27: #{fam_forward_nhwc.1} parent=23 // pred_region
        %s774 = smul.u32 %s36, 8
        %p775 = scmp.lt.s32.totalorder %s35, 1
        %s776 = scalar_select %p775, %s35, 1
        %p777 = scmp.lt.s32.totalorder %s774, 17
        %s778 = scalar_select %p777, %s774, 17
        %s779 = smul.addr %s778, 3
        %s780 = smul.addr %s776, 54
        %s781 = sadd.s32 %s779, %s780
        %s782 = smul.addr %s781, 4
        %s783 = scalar_lea.vmem %s0, %s782
        %s784 = smul.u32 %s36, 8
      $region28: #{fam_forward_nhwc.1} parent=23 // pred_fallthru
        _
      // Predicated region
      $region29: #{fam_forward_nhwc.1} parent=23 // pred_check
        %p785 = pneg %p96
      $region30: #{fam_forward_nhwc.1} parent=23 // pred_check_branch
        %787 = sbr.rel (%p785) target = $region32
      $region31: #{fam_forward_nhwc.1} parent=23 // pred_region
        %s788 = smul.u32 %s36, 8
        %s789 = sadd.s32 %s788, 1
        %p790 = scmp.lt.s32.totalorder %s35, 1
        %s791 = scalar_select %p790, %s35, 1
        %p792 = scmp.lt.s32.totalorder %s789, 17
        %s793 = scalar_select %p792, %s789, 17
        %s794 = smul.addr %s793, 3
        %s795 = smul.addr %s791, 54
        %s796 = sadd.s32 %s794, %s795
        %s797 = smul.addr %s796, 4
        %s798 = scalar_lea.vmem %s1, %s797
        %s799 = smul.u32 %s36, 8
        %s800 = sadd.s32 %s799, 1
      $region32: #{fam_forward_nhwc.1} parent=23 // pred_fallthru
        _
      // Predicated region
      $region33: #{fam_forward_nhwc.1} parent=23 // pred_check
        %p801 = pneg %p128
      $region34: #{fam_forward_nhwc.1} parent=23 // pred_check_branch
        %803 = sbr.rel (%p801) target = $region36
      $region35: #{fam_forward_nhwc.1} parent=23 // pred_region
        %s804 = smul.u32 %s36, 8
        %s805 = sadd.s32 %s804, 2
        %p806 = scmp.lt.s32.totalorder %s35, 1
        %s807 = scalar_select %p806, %s35, 1
        %p808 = scmp.lt.s32.totalorder %s805, 17
        %s809 = scalar_select %p808, %s805, 17
        %s810 = smul.addr %s809, 3
        %s811 = smul.addr %s807, 54
        %s812 = sadd.s32 %s810, %s811
        %s813 = smul.addr %s812, 4
        %s814 = scalar_lea.vmem %s2, %s813
        %s815 = smul.u32 %s36, 8
        %s816 = sadd.s32 %s815, 2
      $region36: #{fam_forward_nhwc.1} parent=23 // pred_fallthru
        _
      // Predicated region
      $region37: #{fam_forward_nhwc.1} parent=23 // pred_check
        %p817 = pneg %p160
      $region38: #{fam_forward_nhwc.1} parent=23 // pred_check_branch
        %819 = sbr.rel (%p817) target = $region40
      $region39: #{fam_forward_nhwc.1} parent=23 // pred_region
        %s820 = smul.u32 %s36, 8
        %s821 = sadd.s32 %s820, 3
        %p822 = scmp.lt.s32.totalorder %s35, 1
        %s823 = scalar_select %p822, %s35, 1
        %p824 = scmp.lt.s32.totalorder %s821, 17
        %s825 = scalar_select %p824, %s821, 17
        %s826 = smul.addr %s825, 3
        %s827 = smul.addr %s823, 54
        %s828 = sadd.s32 %s826, %s827
        %s829 = smul.addr %s828, 4
        %s830 = scalar_lea.vmem %s3, %s829
        %s831 = smul.u32 %s36, 8
        %s832 = sadd.s32 %s831, 3
      $region40: #{fam_forward_nhwc.1} parent=23 // pred_fallthru
        _
      // Predicated region
      $region41: #{fam_forward_nhwc.1} parent=23 // pred_check
        %p833 = pneg %p192
      $region42: #{fam_forward_nhwc.1} parent=23 // pred_check_branch
        %835 = sbr.rel (%p833) target = $region44
      $region43: #{fam_forward_nhwc.1} parent=23 // pred_region
        %s836 = smul.u32 %s36, 8
        %s837 = sadd.s32 %s836, 4
        %p838 = scmp.lt.s32.totalorder %s35, 1
        %s839 = scalar_select %p838, %s35, 1
        %p840 = scmp.lt.s32.totalorder %s837, 17
        %s841 = scalar_select %p840, %s837, 17
        %s842 = smul.addr %s841, 3
        %s843 = smul.addr %s839, 54
        %s844 = sadd.s32 %s842, %s843
        %s845 = smul.addr %s844, 4
        %s846 = scalar_lea.vmem %s4, %s845
        %s847 = smul.u32 %s36, 8
        %s848 = sadd.s32 %s847, 4
      $region44: #{fam_forward_nhwc.1} parent=23 // pred_fallthru
        _
      // Predicated region
      $region45: #{fam_forward_nhwc.1} parent=23 // pred_check
        %p849 = pneg %p224
      $region46: #{fam_forward_nhwc.1} parent=23 // pred_check_branch
        %851 = sbr.rel (%p849) target = $region48
      $region47: #{fam_forward_nhwc.1} parent=23 // pred_region
        %s852 = smul.u32 %s36, 8
        %s853 = sadd.s32 %s852, 5
        %p854 = scmp.lt.s32.totalorder %s35, 1
        %s855 = scalar_select %p854, %s35, 1
        %p856 = scmp.lt.s32.totalorder %s853, 17
        %s857 = scalar_select %p856, %s853, 17
        %s858 = smul.addr %s857, 3
        %s859 = smul.addr %s855, 54
        %s860 = sadd.s32 %s858, %s859
        %s861 = smul.addr %s860, 4
        %s862 = scalar_lea.vmem %s5, %s861
        %s863 = smul.u32 %s36, 8
        %s864 = sadd.s32 %s863, 5
      $region48: #{fam_forward_nhwc.1} parent=23 // pred_fallthru
        _
      // Predicated region
      $region49: #{fam_forward_nhwc.1} parent=23 // pred_check
        %p865 = pneg %p256
      $region50: #{fam_forward_nhwc.1} parent=23 // pred_check_branch
        %867 = sbr.rel (%p865) target = $region52
      $region51: #{fam_forward_nhwc.1} parent=23 // pred_region
        %s868 = smul.u32 %s36, 8
        %s869 = sadd.s32 %s868, 6
        %p870 = scmp.lt.s32.totalorder %s35, 1
        %s871 = scalar_select %p870, %s35, 1
        %p872 = scmp.lt.s32.totalorder %s869, 17
        %s873 = scalar_select %p872, %s869, 17
        %s874 = smul.addr %s873, 3
        %s875 = smul.addr %s871, 54
        %s876 = sadd.s32 %s874, %s875
        %s877 = smul.addr %s876, 4
        %s878 = scalar_lea.vmem %s6, %s877
        %s879 = smul.u32 %s36, 8
        %s880 = sadd.s32 %s879, 6
      $region52: #{fam_forward_nhwc.1} parent=23 // pred_fallthru
        _
      // Predicated region
      $region53: #{fam_forward_nhwc.1} parent=23 // pred_check
        %p881 = pneg %p288
      $region54: #{fam_forward_nhwc.1} parent=23 // pred_check_branch
        %883 = sbr.rel (%p881) target = $region56
      $region55: #{fam_forward_nhwc.1} parent=23 // pred_region
        %s884 = smul.u32 %s36, 8
        %s885 = sadd.s32 %s884, 7
        %p886 = scmp.lt.s32.totalorder %s35, 1
        %s887 = scalar_select %p886, %s35, 1
        %p888 = scmp.lt.s32.totalorder %s885, 17
        %s889 = scalar_select %p888, %s885, 17
        %s890 = smul.addr %s889, 3
        %s891 = smul.addr %s887, 54
        %s892 = sadd.s32 %s890, %s891
        %s893 = smul.addr %s892, 4
        %s894 = scalar_lea.vmem %s7, %s893
        %s895 = smul.u32 %s36, 8
        %s896 = sadd.s32 %s895, 7
      $region56: #{fam_forward_nhwc.1} parent=23 // pred_fallthru
        _
      // Predicated region
      $region57: #{fam_forward_nhwc.1} parent=23 // pred_check
        %p897 = pneg %p320
      $region58: #{fam_forward_nhwc.1} parent=23 // pred_check_branch
        %899 = sbr.rel (%p897) target = $region60
      $region59: #{fam_forward_nhwc.1} parent=23 // pred_region
        %s900 = smul.u32 %s36, 8
        %s901 = sadd.s32 %s900, 8
        %p902 = scmp.lt.s32.totalorder %s35, 1
        %s903 = scalar_select %p902, %s35, 1
        %p904 = scmp.lt.s32.totalorder %s901, 17
        %s905 = scalar_select %p904, %s901, 17
        %s906 = smul.addr %s905, 3
        %s907 = smul.addr %s903, 54
        %s908 = sadd.s32 %s906, %s907
        %s909 = smul.addr %s908, 4
        %s910 = scalar_lea.vmem %s8, %s909
        %s911 = smul.u32 %s36, 8
        %s912 = sadd.s32 %s911, 8
      $region60: #{fam_forward_nhwc.1} parent=23 // pred_fallthru
        _
      // Predicated region
      $region61: #{fam_forward_nhwc.1} parent=23 // pred_check
        %p913 = pneg %p352
      $region62: #{fam_forward_nhwc.1} parent=23 // pred_check_branch
        %915 = sbr.rel (%p913) target = $region64
      $region63: #{fam_forward_nhwc.1} parent=23 // pred_region
        %s916 = smul.u32 %s36, 8
        %s917 = sadd.s32 %s916, 9
        %p918 = scmp.lt.s32.totalorder %s35, 1
        %s919 = scalar_select %p918, %s35, 1
        %p920 = scmp.lt.s32.totalorder %s917, 17
        %s921 = scalar_select %p920, %s917, 17
        %s922 = smul.addr %s921, 3
        %s923 = smul.addr %s919, 54
        %s924 = sadd.s32 %s922, %s923
        %s925 = smul.addr %s924, 4
        %s926 = scalar_lea.vmem %s9, %s925
        %s927 = smul.u32 %s36, 8
        %s928 = sadd.s32 %s927, 9
      $region64: #{fam_forward_nhwc.1} parent=23 // pred_fallthru
        _
      // Predicated region
      $region65: #{fam_forward_nhwc.1} parent=23 // pred_check
        %p929 = pneg %p382
      $region66: #{fam_forward_nhwc.1} parent=23 // pred_check_branch
        %931 = sbr.rel (%p929) target = $region68
      $region67: #{fam_forward_nhwc.1} parent=23 // pred_region
        %s932 = smul.u32 %s36, 8
        %p933 = scmp.lt.s32.totalorder %s35, 1
        %s934 = scalar_select %p933, %s35, 1
        %p935 = scmp.lt.s32.totalorder %s932, 17
        %s936 = scalar_select %p935, %s932, 17
        %s937 = smul.addr %s936, 3
        %s938 = smul.addr %s934, 54
        %s939 = sadd.s32 %s937, %s938
        %s940 = smul.addr %s939, 4
        %s941 = scalar_lea.vmem %s10, %s940
        %s942 = smul.u32 %s36, 8
      $region68: #{fam_forward_nhwc.1} parent=23 // pred_fallthru
        _
      // Predicated region
      $region69: #{fam_forward_nhwc.1} parent=23 // pred_check
        %p943 = pneg %p414
      $region70: #{fam_forward_nhwc.1} parent=23 // pred_check_branch
        %945 = sbr.rel (%p943) target = $region72
      $region71: #{fam_forward_nhwc.1} parent=23 // pred_region
        %s946 = smul.u32 %s36, 8
        %s947 = sadd.s32 %s946, 1
        %p948 = scmp.lt.s32.totalorder %s35, 1
        %s949 = scalar_select %p948, %s35, 1
        %p950 = scmp.lt.s32.totalorder %s947, 17
        %s951 = scalar_select %p950, %s947, 17
        %s952 = smul.addr %s951, 3
        %s953 = smul.addr %s949, 54
        %s954 = sadd.s32 %s952, %s953
        %s955 = smul.addr %s954, 4
        %s956 = scalar_lea.vmem %s11, %s955
        %s957 = smul.u32 %s36, 8
        %s958 = sadd.s32 %s957, 1
      $region72: #{fam_forward_nhwc.1} parent=23 // pred_fallthru
        _
      // Predicated region
      $region73: #{fam_forward_nhwc.1} parent=23 // pred_check
        %p959 = pneg %p446
      $region74: #{fam_forward_nhwc.1} parent=23 // pred_check_branch
        %961 = sbr.rel (%p959) target = $region76
      $region75: #{fam_forward_nhwc.1} parent=23 // pred_region
        %s962 = smul.u32 %s36, 8
        %s963 = sadd.s32 %s962, 2
        %p964 = scmp.lt.s32.totalorder %s35, 1
        %s965 = scalar_select %p964, %s35, 1
        %p966 = scmp.lt.s32.totalorder %s963, 17
        %s967 = scalar_select %p966, %s963, 17
        %s968 = smul.addr %s967, 3
        %s969 = smul.addr %s965, 54
        %s970 = sadd.s32 %s968, %s969
        %s971 = smul.addr %s970, 4
        %s972 = scalar_lea.vmem %s12, %s971
        %s973 = smul.u32 %s36, 8
        %s974 = sadd.s32 %s973, 2
      $region76: #{fam_forward_nhwc.1} parent=23 // pred_fallthru
        _
      // Predicated region
      $region77: #{fam_forward_nhwc.1} parent=23 // pred_check
        %p975 = pneg %p478
      $region78: #{fam_forward_nhwc.1} parent=23 // pred_check_branch
        %977 = sbr.rel (%p975) target = $region80
      $region79: #{fam_forward_nhwc.1} parent=23 // pred_region
        %s978 = smul.u32 %s36, 8
        %s979 = sadd.s32 %s978, 3
        %p980 = scmp.lt.s32.totalorder %s35, 1
        %s981 = scalar_select %p980, %s35, 1
        %p982 = scmp.lt.s32.totalorder %s979, 17
        %s983 = scalar_select %p982, %s979, 17
        %s984 = smul.addr %s983, 3
        %s985 = smul.addr %s981, 54
        %s986 = sadd.s32 %s984, %s985
        %s987 = smul.addr %s986, 4
        %s988 = scalar_lea.vmem %s13, %s987
        %s989 = smul.u32 %s36, 8
        %s990 = sadd.s32 %s989, 3
      $region80: #{fam_forward_nhwc.1} parent=23 // pred_fallthru
        _
      // Predicated region
      $region81: #{fam_forward_nhwc.1} parent=23 // pred_check
        %p991 = pneg %p510
      $region82: #{fam_forward_nhwc.1} parent=23 // pred_check_branch
        %993 = sbr.rel (%p991) target = $region84
      $region83: #{fam_forward_nhwc.1} parent=23 // pred_region
        %s994 = smul.u32 %s36, 8
        %s995 = sadd.s32 %s994, 4
        %p996 = scmp.lt.s32.totalorder %s35, 1
        %s997 = scalar_select %p996, %s35, 1
        %p998 = scmp.lt.s32.totalorder %s995, 17
        %s999 = scalar_select %p998, %s995, 17
        %s1000 = smul.addr %s999, 3
        %s1001 = smul.addr %s997, 54
        %s1002 = sadd.s32 %s1000, %s1001
        %s1003 = smul.addr %s1002, 4
        %s1004 = scalar_lea.vmem %s14, %s1003
        %s1005 = smul.u32 %s36, 8
        %s1006 = sadd.s32 %s1005, 4
      $region84: #{fam_forward_nhwc.1} parent=23 // pred_fallthru
        _
      // Predicated region
      $region85: #{fam_forward_nhwc.1} parent=23 // pred_check
        %p1007 = pneg %p542
      $region86: #{fam_forward_nhwc.1} parent=23 // pred_check_branch
        %1009 = sbr.rel (%p1007) target = $region88
      $region87: #{fam_forward_nhwc.1} parent=23 // pred_region
        %s1010 = smul.u32 %s36, 8
        %s1011 = sadd.s32 %s1010, 5
        %p1012 = scmp.lt.s32.totalorder %s35, 1
        %s1013 = scalar_select %p1012, %s35, 1
        %p1014 = scmp.lt.s32.totalorder %s1011, 17
        %s1015 = scalar_select %p1014, %s1011, 17
        %s1016 = smul.addr %s1015, 3
        %s1017 = smul.addr %s1013, 54
        %s1018 = sadd.s32 %s1016, %s1017
        %s1019 = smul.addr %s1018, 4
        %s1020 = scalar_lea.vmem %s15, %s1019
        %s1021 = smul.u32 %s36, 8
        %s1022 = sadd.s32 %s1021, 5
      $region88: #{fam_forward_nhwc.1} parent=23 // pred_fallthru
        _
      // Predicated region
      $region89: #{fam_forward_nhwc.1} parent=23 // pred_check
        %p1023 = pneg %p574
      $region90: #{fam_forward_nhwc.1} parent=23 // pred_check_branch
        %1025 = sbr.rel (%p1023) target = $region92
      $region91: #{fam_forward_nhwc.1} parent=23 // pred_region
        %s1026 = smul.u32 %s36, 8
        %s1027 = sadd.s32 %s1026, 6
        %p1028 = scmp.lt.s32.totalorder %s35, 1
        %s1029 = scalar_select %p1028, %s35, 1
        %p1030 = scmp.lt.s32.totalorder %s1027, 17
        %s1031 = scalar_select %p1030, %s1027, 17
        %s1032 = smul.addr %s1031, 3
        %s1033 = smul.addr %s1029, 54
        %s1034 = sadd.s32 %s1032, %s1033
        %s1035 = smul.addr %s1034, 4
        %s1036 = scalar_lea.vmem %s16, %s1035
        %s1037 = smul.u32 %s36, 8
        %s1038 = sadd.s32 %s1037, 6
      $region92: #{fam_forward_nhwc.1} parent=23 // pred_fallthru
        _
      // Predicated region
      $region93: #{fam_forward_nhwc.1} parent=23 // pred_check
        %p1039 = pneg %p606
      $region94: #{fam_forward_nhwc.1} parent=23 // pred_check_branch
        %1041 = sbr.rel (%p1039) target = $region96
      $region95: #{fam_forward_nhwc.1} parent=23 // pred_region
        %s1042 = smul.u32 %s36, 8
        %s1043 = sadd.s32 %s1042, 7
        %p1044 = scmp.lt.s32.totalorder %s35, 1
        %s1045 = scalar_select %p1044, %s35, 1
        %p1046 = scmp.lt.s32.totalorder %s1043, 17
        %s1047 = scalar_select %p1046, %s1043, 17
        %s1048 = smul.addr %s1047, 3
        %s1049 = smul.addr %s1045, 54
        %s1050 = sadd.s32 %s1048, %s1049
        %s1051 = smul.addr %s1050, 4
        %s1052 = scalar_lea.vmem %s17, %s1051
        %s1053 = smul.u32 %s36, 8
        %s1054 = sadd.s32 %s1053, 7
      $region96: #{fam_forward_nhwc.1} parent=23 // pred_fallthru
        _
      // Predicated region
      $region97: #{fam_forward_nhwc.1} parent=23 // pred_check
        %p1055 = pneg %p638
      $region98: #{fam_forward_nhwc.1} parent=23 // pred_check_branch
        %1057 = sbr.rel (%p1055) target = $region100
      $region99: #{fam_forward_nhwc.1} parent=23 // pred_region
        %s1058 = smul.u32 %s36, 8
        %s1059 = sadd.s32 %s1058, 8
        %p1060 = scmp.lt.s32.totalorder %s35, 1
        %s1061 = scalar_select %p1060, %s35, 1
        %p1062 = scmp.lt.s32.totalorder %s1059, 17
        %s1063 = scalar_select %p1062, %s1059, 17
        %s1064 = smul.addr %s1063, 3
        %s1065 = smul.addr %s1061, 54
        %s1066 = sadd.s32 %s1064, %s1065
        %s1067 = smul.addr %s1066, 4
        %s1068 = scalar_lea.vmem %s18, %s1067
        %s1069 = smul.u32 %s36, 8
        %s1070 = sadd.s32 %s1069, 8
      $region100: #{fam_forward_nhwc.1} parent=23 // pred_fallthru
        _
      // Predicated region
      $region101: #{fam_forward_nhwc.1} parent=23 // pred_check
        %p1071 = pneg %p670
      $region102: #{fam_forward_nhwc.1} parent=23 // pred_check_branch
        %1073 = sbr.rel (%p1071) target = $region104
      $region103: #{fam_forward_nhwc.1} parent=23 // pred_region
        %s1074 = smul.u32 %s36, 8
        %s1075 = sadd.s32 %s1074, 9
        %p1076 = scmp.lt.s32.totalorder %s35, 1
        %s1077 = scalar_select %p1076, %s35, 1
        %p1078 = scmp.lt.s32.totalorder %s1075, 17
        %s1079 = scalar_select %p1078, %s1075, 17
        %s1080 = smul.addr %s1079, 3
        %s1081 = smul.addr %s1077, 54
        %s1082 = sadd.s32 %s1080, %s1081
        %s1083 = smul.addr %s1082, 4
        %s1084 = scalar_lea.vmem %s19, %s1083
        %s1085 = smul.u32 %s36, 8
        %s1086 = sadd.s32 %s1085, 9
      $region104: #{fam_forward_nhwc.1} parent=23 // pred_fallthru
        _
    $region24: #{fam_forward_nhwc.1} parent=5 // pred_fallthru
      _
    %p1087 = scmp.le.s32.totalorder 1, %s28
    %p1088 = scmp.lt.s32.totalorder %s28, 5
    %p1089 = pnand %p1087, %p1088
    %p1090 = pneg %p1089
    // Predicated region
    $region105: #{fam_forward_nhwc.1} parent=5 // pred_check
      _
    $region106: #{fam_forward_nhwc.1} parent=5 // pred_check_branch
      %1092 = sbr.rel (%p1089) target = $region108
    $region107: #{fam_forward_nhwc.1} parent=5 // pred_region
      %s1093 = ssub.s32 %s28, 1
      %s1094 = smul.u32 %s38, 8
      %p1095 = scmp.lt.s32.totalorder %s37, 1
      %s1096 = scalar_select %p1095, %s37, 1
      %p1097 = scmp.lt.s32.totalorder %s1094, 17
      %s1098 = scalar_select %p1097, %s1094, 17
      %s1099 = smul.addr %s1098, 3
      %s1100 = smul.addr %s1096, 54
      %s1101 = sadd.s32 %s1099, %s1100
      %s1102 = smul.addr %s1101, 4
      %s1103 = scalar_lea.vmem %s0, %s1102
      %p1104 = pneg %p70
      %p1105 = pneg %p67
      %s1106 = smul.u32 %s38, 8
      %s1107 = sadd.s32 %s1106, 1
      %p1108 = scmp.lt.s32.totalorder %s37, 1
      %s1109 = scalar_select %p1108, %s37, 1
      %p1110 = scmp.lt.s32.totalorder %s1107, 17
      %s1111 = scalar_select %p1110, %s1107, 17
      %s1112 = smul.addr %s1111, 3
      %s1113 = smul.addr %s1109, 54
      %s1114 = sadd.s32 %s1112, %s1113
      %s1115 = smul.addr %s1114, 4
      %s1116 = scalar_lea.vmem %s1, %s1115
      %p1117 = pneg %p102
      %p1118 = pneg %p99
      %s1119 = smul.u32 %s38, 8
      %s1120 = sadd.s32 %s1119, 2
      %p1121 = scmp.lt.s32.totalorder %s37, 1
      %s1122 = scalar_select %p1121, %s37, 1
      %p1123 = scmp.lt.s32.totalorder %s1120, 17
      %s1124 = scalar_select %p1123, %s1120, 17
      %s1125 = smul.addr %s1124, 3
      %s1126 = smul.addr %s1122, 54
      %s1127 = sadd.s32 %s1125, %s1126
      %s1128 = smul.addr %s1127, 4
      %s1129 = scalar_lea.vmem %s2, %s1128
      %p1130 = pneg %p134
      %p1131 = pneg %p131
      %s1132 = smul.u32 %s38, 8
      %s1133 = sadd.s32 %s1132, 3
      %p1134 = scmp.lt.s32.totalorder %s37, 1
      %s1135 = scalar_select %p1134, %s37, 1
      %p1136 = scmp.lt.s32.totalorder %s1133, 17
      %s1137 = scalar_select %p1136, %s1133, 17
      %s1138 = smul.addr %s1137, 3
      %s1139 = smul.addr %s1135, 54
      %s1140 = sadd.s32 %s1138, %s1139
      %s1141 = smul.addr %s1140, 4
      %s1142 = scalar_lea.vmem %s3, %s1141
      %p1143 = pneg %p166
      %p1144 = pneg %p163
      %s1145 = smul.u32 %s38, 8
      %s1146 = sadd.s32 %s1145, 4
      %p1147 = scmp.lt.s32.totalorder %s37, 1
      %s1148 = scalar_select %p1147, %s37, 1
      %p1149 = scmp.lt.s32.totalorder %s1146, 17
      %s1150 = scalar_select %p1149, %s1146, 17
      %s1151 = smul.addr %s1150, 3
      %s1152 = smul.addr %s1148, 54
      %s1153 = sadd.s32 %s1151, %s1152
      %s1154 = smul.addr %s1153, 4
      %s1155 = scalar_lea.vmem %s4, %s1154
      %p1156 = pneg %p198
      %p1157 = pneg %p195
      %s1158 = smul.u32 %s38, 8
      %s1159 = sadd.s32 %s1158, 5
      %p1160 = scmp.lt.s32.totalorder %s37, 1
      %s1161 = scalar_select %p1160, %s37, 1
      %p1162 = scmp.lt.s32.totalorder %s1159, 17
      %s1163 = scalar_select %p1162, %s1159, 17
      %s1164 = smul.addr %s1163, 3
      %s1165 = smul.addr %s1161, 54
      %s1166 = sadd.s32 %s1164, %s1165
      %s1167 = smul.addr %s1166, 4
      %s1168 = scalar_lea.vmem %s5, %s1167
      %p1169 = pneg %p230
      %p1170 = pneg %p227
      %s1171 = smul.u32 %s38, 8
      %s1172 = sadd.s32 %s1171, 6
      %p1173 = scmp.lt.s32.totalorder %s37, 1
      %s1174 = scalar_select %p1173, %s37, 1
      %p1175 = scmp.lt.s32.totalorder %s1172, 17
      %s1176 = scalar_select %p1175, %s1172, 17
      %s1177 = smul.addr %s1176, 3
      %s1178 = smul.addr %s1174, 54
      %s1179 = sadd.s32 %s1177, %s1178
      %s1180 = smul.addr %s1179, 4
      %s1181 = scalar_lea.vmem %s6, %s1180
      %p1182 = pneg %p262
      %p1183 = pneg %p259
      %s1184 = smul.u32 %s38, 8
      %s1185 = sadd.s32 %s1184, 7
      %p1186 = scmp.lt.s32.totalorder %s37, 1
      %s1187 = scalar_select %p1186, %s37, 1
      %p1188 = scmp.lt.s32.totalorder %s1185, 17
      %s1189 = scalar_select %p1188, %s1185, 17
      %s1190 = smul.addr %s1189, 3
      %s1191 = smul.addr %s1187, 54
      %s1192 = sadd.s32 %s1190, %s1191
      %s1193 = smul.addr %s1192, 4
      %s1194 = scalar_lea.vmem %s7, %s1193
      %p1195 = pneg %p294
      %p1196 = pneg %p291
      %s1197 = smul.u32 %s38, 8
      %s1198 = sadd.s32 %s1197, 8
      %p1199 = scmp.lt.s32.totalorder %s37, 1
      %s1200 = scalar_select %p1199, %s37, 1
      %p1201 = scmp.lt.s32.totalorder %s1198, 17
      %s1202 = scalar_select %p1201, %s1198, 17
      %s1203 = smul.addr %s1202, 3
      %s1204 = smul.addr %s1200, 54
      %s1205 = sadd.s32 %s1203, %s1204
      %s1206 = smul.addr %s1205, 4
      %s1207 = scalar_lea.vmem %s8, %s1206
      %p1208 = pneg %p326
      %p1209 = pneg %p323
      %s1210 = smul.u32 %s38, 8
      %s1211 = sadd.s32 %s1210, 9
      %p1212 = scmp.lt.s32.totalorder %s37, 1
      %s1213 = scalar_select %p1212, %s37, 1
      %p1214 = scmp.lt.s32.totalorder %s1211, 17
      %s1215 = scalar_select %p1214, %s1211, 17
      %s1216 = smul.addr %s1215, 3
      %s1217 = smul.addr %s1213, 54
      %s1218 = sadd.s32 %s1216, %s1217
      %s1219 = smul.addr %s1218, 4
      %s1220 = scalar_lea.vmem %s9, %s1219
      %p1221 = pneg %p358
      %p1222 = pneg %p355
      %s1223 = smul.u32 %s38, 8
      %p1224 = scmp.lt.s32.totalorder %s37, 1
      %s1225 = scalar_select %p1224, %s37, 1
      %p1226 = scmp.lt.s32.totalorder %s1223, 17
      %s1227 = scalar_select %p1226, %s1223, 17
      %s1228 = smul.addr %s1227, 3
      %s1229 = smul.addr %s1225, 54
      %s1230 = sadd.s32 %s1228, %s1229
      %s1231 = smul.addr %s1230, 4
      %s1232 = scalar_lea.vmem %s10, %s1231
      %p1233 = pneg %p388
      %p1234 = pneg %p385
      %s1235 = smul.u32 %s38, 8
      %s1236 = sadd.s32 %s1235, 1
      %p1237 = scmp.lt.s32.totalorder %s37, 1
      %s1238 = scalar_select %p1237, %s37, 1
      %p1239 = scmp.lt.s32.totalorder %s1236, 17
      %s1240 = scalar_select %p1239, %s1236, 17
      %s1241 = smul.addr %s1240, 3
      %s1242 = smul.addr %s1238, 54
      %s1243 = sadd.s32 %s1241, %s1242
      %s1244 = smul.addr %s1243, 4
      %s1245 = scalar_lea.vmem %s11, %s1244
      %p1246 = pneg %p420
      %p1247 = pneg %p417
      %s1248 = smul.u32 %s38, 8
      %s1249 = sadd.s32 %s1248, 2
      %p1250 = scmp.lt.s32.totalorder %s37, 1
      %s1251 = scalar_select %p1250, %s37, 1
      %p1252 = scmp.lt.s32.totalorder %s1249, 17
      %s1253 = scalar_select %p1252, %s1249, 17
      %s1254 = smul.addr %s1253, 3
      %s1255 = smul.addr %s1251, 54
      %s1256 = sadd.s32 %s1254, %s1255
      %s1257 = smul.addr %s1256, 4
      %s1258 = scalar_lea.vmem %s12, %s1257
      %p1259 = pneg %p452
      %p1260 = pneg %p449
      %s1261 = smul.u32 %s38, 8
      %s1262 = sadd.s32 %s1261, 3
      %p1263 = scmp.lt.s32.totalorder %s37, 1
      %s1264 = scalar_select %p1263, %s37, 1
      %p1265 = scmp.lt.s32.totalorder %s1262, 17
      %s1266 = scalar_select %p1265, %s1262, 17
      %s1267 = smul.addr %s1266, 3
      %s1268 = smul.addr %s1264, 54
      %s1269 = sadd.s32 %s1267, %s1268
      %s1270 = smul.addr %s1269, 4
      %s1271 = scalar_lea.vmem %s13, %s1270
      %p1272 = pneg %p484
      %p1273 = pneg %p481
      %s1274 = smul.u32 %s38, 8
      %s1275 = sadd.s32 %s1274, 4
      %p1276 = scmp.lt.s32.totalorder %s37, 1
      %s1277 = scalar_select %p1276, %s37, 1
      %p1278 = scmp.lt.s32.totalorder %s1275, 17
      %s1279 = scalar_select %p1278, %s1275, 17
      %s1280 = smul.addr %s1279, 3
      %s1281 = smul.addr %s1277, 54
      %s1282 = sadd.s32 %s1280, %s1281
      %s1283 = smul.addr %s1282, 4
      %s1284 = scalar_lea.vmem %s14, %s1283
      %p1285 = pneg %p516
      %p1286 = pneg %p513
      %s1287 = smul.u32 %s38, 8
      %s1288 = sadd.s32 %s1287, 5
      %p1289 = scmp.lt.s32.totalorder %s37, 1
      %s1290 = scalar_select %p1289, %s37, 1
      %p1291 = scmp.lt.s32.totalorder %s1288, 17
      %s1292 = scalar_select %p1291, %s1288, 17
      %s1293 = smul.addr %s1292, 3
      %s1294 = smul.addr %s1290, 54
      %s1295 = sadd.s32 %s1293, %s1294
      %s1296 = smul.addr %s1295, 4
      %s1297 = scalar_lea.vmem %s15, %s1296
      %p1298 = pneg %p548
      %p1299 = pneg %p545
      %s1300 = smul.u32 %s38, 8
      %s1301 = sadd.s32 %s1300, 6
      %p1302 = scmp.lt.s32.totalorder %s37, 1
      %s1303 = scalar_select %p1302, %s37, 1
      %p1304 = scmp.lt.s32.totalorder %s1301, 17
      %s1305 = scalar_select %p1304, %s1301, 17
      %s1306 = smul.addr %s1305, 3
      %s1307 = smul.addr %s1303, 54
      %s1308 = sadd.s32 %s1306, %s1307
      %s1309 = smul.addr %s1308, 4
      %s1310 = scalar_lea.vmem %s16, %s1309
      %p1311 = pneg %p580
      %p1312 = pneg %p577
      %s1313 = smul.u32 %s38, 8
      %s1314 = sadd.s32 %s1313, 7
      %p1315 = scmp.lt.s32.totalorder %s37, 1
      %s1316 = scalar_select %p1315, %s37, 1
      %p1317 = scmp.lt.s32.totalorder %s1314, 17
      %s1318 = scalar_select %p1317, %s1314, 17
      %s1319 = smul.addr %s1318, 3
      %s1320 = smul.addr %s1316, 54
      %s1321 = sadd.s32 %s1319, %s1320
      %s1322 = smul.addr %s1321, 4
      %s1323 = scalar_lea.vmem %s17, %s1322
      %p1324 = pneg %p612
      %p1325 = pneg %p609
      %s1326 = smul.u32 %s38, 8
      %s1327 = sadd.s32 %s1326, 8
      %p1328 = scmp.lt.s32.totalorder %s37, 1
      %s1329 = scalar_select %p1328, %s37, 1
      %p1330 = scmp.lt.s32.totalorder %s1327, 17
      %s1331 = scalar_select %p1330, %s1327, 17
      %s1332 = smul.addr %s1331, 3
      %s1333 = smul.addr %s1329, 54
      %s1334 = sadd.s32 %s1332, %s1333
      %s1335 = smul.addr %s1334, 4
      %s1336 = scalar_lea.vmem %s18, %s1335
      %p1337 = pneg %p644
      %p1338 = pneg %p641
      %s1339 = smul.u32 %s38, 8
      %s1340 = sadd.s32 %s1339, 9
      %p1341 = scmp.lt.s32.totalorder %s37, 1
      %s1342 = scalar_select %p1341, %s37, 1
      %p1343 = scmp.lt.s32.totalorder %s1340, 17
      %s1344 = scalar_select %p1343, %s1340, 17
      %s1345 = smul.addr %s1344, 3
      %s1346 = smul.addr %s1342, 54
      %s1347 = sadd.s32 %s1345, %s1346
      %s1348 = smul.addr %s1347, 4
      %s1349 = scalar_lea.vmem %s19, %s1348
      %p1350 = pneg %p676
      %p1351 = pneg %p673
      %p1352 = pneg %p697
      %p1353 = pneg %p694
      %p1354 = pneg %p718
      %p1355 = pneg %p715
      %p1356 = pneg %p746
      %p1357 = pneg %p743
      %s1358 = smul.u32 8, %s38
      %p1359 = scmp.lt.s32.totalorder %s37, 1
      %s1360 = scalar_select %p1359, %s37, 1
      %p1361 = scmp.lt.s32.totalorder %s1358, 15
      %s1362 = scalar_select %p1361, %s1358, 15
      %s1363 = smul.addr %s1362, 2
      %s1364 = smul.addr %s1360, 32
      %s1365 = sadd.s32 %s1363, %s1364
      %s1366 = smul.addr %s1365, 8
      %s1367 = scalar_lea.vmem %s22, %s1366
      %s1368 = smul.u32 %s38, 8
      %p1369 = scmp.lt.s32.totalorder %s37, 1
      %s1370 = scalar_select %p1369, %s37, 1
      %p1371 = scmp.lt.s32.totalorder %s1368, 17
      %s1372 = scalar_select %p1371, %s1368, 17
      %s1373 = smul.addr %s1372, 3
      %s1374 = smul.addr %s1370, 54
      %s1375 = sadd.s32 %s1373, %s1374
      %s1376 = smul.addr %s1375, 4
      %s1377 = scalar_lea.vmem %s0, %s1376
      %s1378 = smul.u32 %s38, 8
      %s1379 = smul.u32 %s38, 8
      %s1380 = sadd.s32 %s1379, 1
      %p1381 = scmp.lt.s32.totalorder %s37, 1
      %s1382 = scalar_select %p1381, %s37, 1
      %p1383 = scmp.lt.s32.totalorder %s1380, 17
      %s1384 = scalar_select %p1383, %s1380, 17
      %s1385 = smul.addr %s1384, 3
      %s1386 = smul.addr %s1382, 54
      %s1387 = sadd.s32 %s1385, %s1386
      %s1388 = smul.addr %s1387, 4
      %s1389 = scalar_lea.vmem %s1, %s1388
      %s1390 = smul.u32 %s38, 8
      %s1391 = sadd.s32 %s1390, 1
      %s1392 = smul.u32 %s38, 8
      %s1393 = sadd.s32 %s1392, 2
      %p1394 = scmp.lt.s32.totalorder %s37, 1
      %s1395 = scalar_select %p1394, %s37, 1
      %p1396 = scmp.lt.s32.totalorder %s1393, 17
      %s1397 = scalar_select %p1396, %s1393, 17
      %s1398 = smul.addr %s1397, 3
      %s1399 = smul.addr %s1395, 54
      %s1400 = sadd.s32 %s1398, %s1399
      %s1401 = smul.addr %s1400, 4
      %s1402 = scalar_lea.vmem %s2, %s1401
      %s1403 = smul.u32 %s38, 8
      %s1404 = sadd.s32 %s1403, 2
      %s1405 = smul.u32 %s38, 8
      %s1406 = sadd.s32 %s1405, 3
      %p1407 = scmp.lt.s32.totalorder %s37, 1
      %s1408 = scalar_select %p1407, %s37, 1
      %p1409 = scmp.lt.s32.totalorder %s1406, 17
      %s1410 = scalar_select %p1409, %s1406, 17
      %s1411 = smul.addr %s1410, 3
      %s1412 = smul.addr %s1408, 54
      %s1413 = sadd.s32 %s1411, %s1412
      %s1414 = smul.addr %s1413, 4
      %s1415 = scalar_lea.vmem %s3, %s1414
      %s1416 = smul.u32 %s38, 8
      %s1417 = sadd.s32 %s1416, 3
      %s1418 = smul.u32 %s38, 8
      %s1419 = sadd.s32 %s1418, 4
      %p1420 = scmp.lt.s32.totalorder %s37, 1
      %s1421 = scalar_select %p1420, %s37, 1
      %p1422 = scmp.lt.s32.totalorder %s1419, 17
      %s1423 = scalar_select %p1422, %s1419, 17
      %s1424 = smul.addr %s1423, 3
      %s1425 = smul.addr %s1421, 54
      %s1426 = sadd.s32 %s1424, %s1425
      %s1427 = smul.addr %s1426, 4
      %s1428 = scalar_lea.vmem %s4, %s1427
      %s1429 = smul.u32 %s38, 8
      %s1430 = sadd.s32 %s1429, 4
      %s1431 = smul.u32 %s38, 8
      %s1432 = sadd.s32 %s1431, 5
      %p1433 = scmp.lt.s32.totalorder %s37, 1
      %s1434 = scalar_select %p1433, %s37, 1
      %p1435 = scmp.lt.s32.totalorder %s1432, 17
      %s1436 = scalar_select %p1435, %s1432, 17
      %s1437 = smul.addr %s1436, 3
      %s1438 = smul.addr %s1434, 54
      %s1439 = sadd.s32 %s1437, %s1438
      %s1440 = smul.addr %s1439, 4
      %s1441 = scalar_lea.vmem %s5, %s1440
      %s1442 = smul.u32 %s38, 8
      %s1443 = sadd.s32 %s1442, 5
      %s1444 = smul.u32 %s38, 8
      %s1445 = sadd.s32 %s1444, 6
      %p1446 = scmp.lt.s32.totalorder %s37, 1
      %s1447 = scalar_select %p1446, %s37, 1
      %p1448 = scmp.lt.s32.totalorder %s1445, 17
      %s1449 = scalar_select %p1448, %s1445, 17
      %s1450 = smul.addr %s1449, 3
      %s1451 = smul.addr %s1447, 54
      %s1452 = sadd.s32 %s1450, %s1451
      %s1453 = smul.addr %s1452, 4
      %s1454 = scalar_lea.vmem %s6, %s1453
      %s1455 = smul.u32 %s38, 8
      %s1456 = sadd.s32 %s1455, 6
      %s1457 = smul.u32 %s38, 8
      %s1458 = sadd.s32 %s1457, 7
      %p1459 = scmp.lt.s32.totalorder %s37, 1
      %s1460 = scalar_select %p1459, %s37, 1
      %p1461 = scmp.lt.s32.totalorder %s1458, 17
      %s1462 = scalar_select %p1461, %s1458, 17
      %s1463 = smul.addr %s1462, 3
      %s1464 = smul.addr %s1460, 54
      %s1465 = sadd.s32 %s1463, %s1464
      %s1466 = smul.addr %s1465, 4
      %s1467 = scalar_lea.vmem %s7, %s1466
      %s1468 = smul.u32 %s38, 8
      %s1469 = sadd.s32 %s1468, 7
      %s1470 = smul.u32 %s38, 8
      %s1471 = sadd.s32 %s1470, 8
      %p1472 = scmp.lt.s32.totalorder %s37, 1
      %s1473 = scalar_select %p1472, %s37, 1
      %p1474 = scmp.lt.s32.totalorder %s1471, 17
      %s1475 = scalar_select %p1474, %s1471, 17
      %s1476 = smul.addr %s1475, 3
      %s1477 = smul.addr %s1473, 54
      %s1478 = sadd.s32 %s1476, %s1477
      %s1479 = smul.addr %s1478, 4
      %s1480 = scalar_lea.vmem %s8, %s1479
      %s1481 = smul.u32 %s38, 8
      %s1482 = sadd.s32 %s1481, 8
      %s1483 = smul.u32 %s38, 8
      %s1484 = sadd.s32 %s1483, 9
      %p1485 = scmp.lt.s32.totalorder %s37, 1
      %s1486 = scalar_select %p1485, %s37, 1
      %p1487 = scmp.lt.s32.totalorder %s1484, 17
      %s1488 = scalar_select %p1487, %s1484, 17
      %s1489 = smul.addr %s1488, 3
      %s1490 = smul.addr %s1486, 54
      %s1491 = sadd.s32 %s1489, %s1490
      %s1492 = smul.addr %s1491, 4
      %s1493 = scalar_lea.vmem %s9, %s1492
      %s1494 = smul.u32 %s38, 8
      %s1495 = sadd.s32 %s1494, 9
      %s1496 = smul.u32 %s38, 8
      %p1497 = scmp.lt.s32.totalorder %s37, 1
      %s1498 = scalar_select %p1497, %s37, 1
      %p1499 = scmp.lt.s32.totalorder %s1496, 17
      %s1500 = scalar_select %p1499, %s1496, 17
      %s1501 = smul.addr %s1500, 3
      %s1502 = smul.addr %s1498, 54
      %s1503 = sadd.s32 %s1501, %s1502
      %s1504 = smul.addr %s1503, 4
      %s1505 = scalar_lea.vmem %s10, %s1504
      %s1506 = smul.u32 %s38, 8
      %s1507 = smul.u32 %s38, 8
      %s1508 = sadd.s32 %s1507, 1
      %p1509 = scmp.lt.s32.totalorder %s37, 1
      %s1510 = scalar_select %p1509, %s37, 1
      %p1511 = scmp.lt.s32.totalorder %s1508, 17
      %s1512 = scalar_select %p1511, %s1508, 17
      %s1513 = smul.addr %s1512, 3
      %s1514 = smul.addr %s1510, 54
      %s1515 = sadd.s32 %s1513, %s1514
      %s1516 = smul.addr %s1515, 4
      %s1517 = scalar_lea.vmem %s11, %s1516
      %s1518 = smul.u32 %s38, 8
      %s1519 = sadd.s32 %s1518, 1
      %s1520 = smul.u32 %s38, 8
      %s1521 = sadd.s32 %s1520, 2
      %p1522 = scmp.lt.s32.totalorder %s37, 1
      %s1523 = scalar_select %p1522, %s37, 1
      %p1524 = scmp.lt.s32.totalorder %s1521, 17
      %s1525 = scalar_select %p1524, %s1521, 17
      %s1526 = smul.addr %s1525, 3
      %s1527 = smul.addr %s1523, 54
      %s1528 = sadd.s32 %s1526, %s1527
      %s1529 = smul.addr %s1528, 4
      %s1530 = scalar_lea.vmem %s12, %s1529
      %s1531 = smul.u32 %s38, 8
      %s1532 = sadd.s32 %s1531, 2
      %s1533 = smul.u32 %s38, 8
      %s1534 = sadd.s32 %s1533, 3
      %p1535 = scmp.lt.s32.totalorder %s37, 1
      %s1536 = scalar_select %p1535, %s37, 1
      %p1537 = scmp.lt.s32.totalorder %s1534, 17
      %s1538 = scalar_select %p1537, %s1534, 17
      %s1539 = smul.addr %s1538, 3
      %s1540 = smul.addr %s1536, 54
      %s1541 = sadd.s32 %s1539, %s1540
      %s1542 = smul.addr %s1541, 4
      %s1543 = scalar_lea.vmem %s13, %s1542
      %s1544 = smul.u32 %s38, 8
      %s1545 = sadd.s32 %s1544, 3
      %s1546 = smul.u32 %s38, 8
      %s1547 = sadd.s32 %s1546, 4
      %p1548 = scmp.lt.s32.totalorder %s37, 1
      %s1549 = scalar_select %p1548, %s37, 1
      %p1550 = scmp.lt.s32.totalorder %s1547, 17
      %s1551 = scalar_select %p1550, %s1547, 17
      %s1552 = smul.addr %s1551, 3
      %s1553 = smul.addr %s1549, 54
      %s1554 = sadd.s32 %s1552, %s1553
      %s1555 = smul.addr %s1554, 4
      %s1556 = scalar_lea.vmem %s14, %s1555
      %s1557 = smul.u32 %s38, 8
      %s1558 = sadd.s32 %s1557, 4
      %s1559 = smul.u32 %s38, 8
      %s1560 = sadd.s32 %s1559, 5
      %p1561 = scmp.lt.s32.totalorder %s37, 1
      %s1562 = scalar_select %p1561, %s37, 1
      %p1563 = scmp.lt.s32.totalorder %s1560, 17
      %s1564 = scalar_select %p1563, %s1560, 17
      %s1565 = smul.addr %s1564, 3
      %s1566 = smul.addr %s1562, 54
      %s1567 = sadd.s32 %s1565, %s1566
      %s1568 = smul.addr %s1567, 4
      %s1569 = scalar_lea.vmem %s15, %s1568
      %s1570 = smul.u32 %s38, 8
      %s1571 = sadd.s32 %s1570, 5
      %s1572 = smul.u32 %s38, 8
      %s1573 = sadd.s32 %s1572, 6
      %p1574 = scmp.lt.s32.totalorder %s37, 1
      %s1575 = scalar_select %p1574, %s37, 1
      %p1576 = scmp.lt.s32.totalorder %s1573, 17
      %s1577 = scalar_select %p1576, %s1573, 17
      %s1578 = smul.addr %s1577, 3
      %s1579 = smul.addr %s1575, 54
      %s1580 = sadd.s32 %s1578, %s1579
      %s1581 = smul.addr %s1580, 4
      %s1582 = scalar_lea.vmem %s16, %s1581
      %s1583 = smul.u32 %s38, 8
      %s1584 = sadd.s32 %s1583, 6
      %s1585 = smul.u32 %s38, 8
      %s1586 = sadd.s32 %s1585, 7
      %p1587 = scmp.lt.s32.totalorder %s37, 1
      %s1588 = scalar_select %p1587, %s37, 1
      %p1589 = scmp.lt.s32.totalorder %s1586, 17
      %s1590 = scalar_select %p1589, %s1586, 17
      %s1591 = smul.addr %s1590, 3
      %s1592 = smul.addr %s1588, 54
      %s1593 = sadd.s32 %s1591, %s1592
      %s1594 = smul.addr %s1593, 4
      %s1595 = scalar_lea.vmem %s17, %s1594
      %s1596 = smul.u32 %s38, 8
      %s1597 = sadd.s32 %s1596, 7
      %s1598 = smul.u32 %s38, 8
      %s1599 = sadd.s32 %s1598, 8
      %p1600 = scmp.lt.s32.totalorder %s37, 1
      %s1601 = scalar_select %p1600, %s37, 1
      %p1602 = scmp.lt.s32.totalorder %s1599, 17
      %s1603 = scalar_select %p1602, %s1599, 17
      %s1604 = smul.addr %s1603, 3
      %s1605 = smul.addr %s1601, 54
      %s1606 = sadd.s32 %s1604, %s1605
      %s1607 = smul.addr %s1606, 4
      %s1608 = scalar_lea.vmem %s18, %s1607
      %s1609 = smul.u32 %s38, 8
      %s1610 = sadd.s32 %s1609, 8
      %s1611 = smul.u32 %s38, 8
      %s1612 = sadd.s32 %s1611, 9
      %p1613 = scmp.lt.s32.totalorder %s37, 1
      %s1614 = scalar_select %p1613, %s37, 1
      %p1615 = scmp.lt.s32.totalorder %s1612, 17
      %s1616 = scalar_select %p1615, %s1612, 17
      %s1617 = smul.addr %s1616, 3
      %s1618 = smul.addr %s1614, 54
      %s1619 = sadd.s32 %s1617, %s1618
      %s1620 = smul.addr %s1619, 4
      %s1621 = scalar_lea.vmem %s19, %s1620
      %s1622 = smul.u32 %s38, 8
      %s1623 = sadd.s32 %s1622, 9
      %s1624 = smul.u32 8, %s38
      %p1625 = scmp.lt.s32.totalorder %s37, 1
      %s1626 = scalar_select %p1625, %s37, 1
      %p1627 = scmp.lt.s32.totalorder %s1624, 15
      %s1628 = scalar_select %p1627, %s1624, 15
      %s1629 = smul.addr %s1628, 2
      %s1630 = smul.addr %s1626, 32
      %s1631 = sadd.s32 %s1629, %s1630
      %s1632 = smul.addr %s1631, 8
      %s1633 = scalar_lea.vmem %s22, %s1632
      %s1634 = smul.u32 8, %s38
      %v1636 = vld [vmem:[%s1377] sm:$0xf]
      %v1637 = vld [vmem:[%s1377 + $0x4] sm:$0xf]
      %v1638 = vld [vmem:[%s1377 + $0x8] sm:$0x1]
      %v1639 = vld [vmem:[%s1389] sm:$0xf]
      %v1640 = vld [vmem:[%s1389 + $0x4] sm:$0xf]
      %v1641 = vld [vmem:[%s1389 + $0x8] sm:$0x1]
      %v1642 = vld [vmem:[%s1402] sm:$0xf]
      %v1643 = vld [vmem:[%s1402 + $0x4] sm:$0xf]
      %v1644 = vld [vmem:[%s1402 + $0x8] sm:$0x1]
      %v1645 = vld [vmem:[%s1415] sm:$0xf]
      %v1646 = vld [vmem:[%s1415 + $0x4] sm:$0xf]
      %v1647 = vld [vmem:[%s1415 + $0x8] sm:$0x1]
      %v1648 = vld [vmem:[%s1428] sm:$0xf]
      %v1649 = vld [vmem:[%s1428 + $0x4] sm:$0xf]
      %v1650 = vld [vmem:[%s1428 + $0x8] sm:$0x1]
      %v1651 = vld [vmem:[%s1441] sm:$0xf]
      %v1652 = vld [vmem:[%s1441 + $0x4] sm:$0xf]
      %v1653 = vld [vmem:[%s1441 + $0x8] sm:$0x1]
      %v1654 = vld [vmem:[%s1454] sm:$0xf]
      %v1655 = vld [vmem:[%s1454 + $0x4] sm:$0xf]
      %v1656 = vld [vmem:[%s1454 + $0x8] sm:$0x1]
      %v1657 = vld [vmem:[%s1467] sm:$0xf]
      %v1658 = vld [vmem:[%s1467 + $0x4] sm:$0xf]
      %v1659 = vld [vmem:[%s1467 + $0x8] sm:$0x1]
      %v1660 = vld [vmem:[%s1480] sm:$0xf]
      %v1661 = vld [vmem:[%s1480 + $0x4] sm:$0xf]
      %v1662 = vld [vmem:[%s1480 + $0x8] sm:$0x1]
      %v1663 = vld [vmem:[%s1493] sm:$0xf]
      %v1664 = vld [vmem:[%s1493 + $0x4] sm:$0xf]
      %v1665 = vld [vmem:[%s1493 + $0x8] sm:$0x1]
      %v1666 = vld [vmem:[%s20] sm:$0x3]
      %vm1667 = vsmask.f32 3328
      %vm1668 = vsmask.f32 7440
      %vm1669 = vmor %vm1667, %vm1668
      %v1671 = vshrl.u32 %v1636, 16
      %v1673 = vrot.slane %v1671, 4
      %v1674 = vshll.u32 %v1636, 16
      %v1676 = vrot.slane %v1674, 5
      %v1677 = vor.u32 %v1673, %v1676
      %v1678 = vrot.slane %v1677, 4
      %v1680 = vshll.u32 %v1637, 16
      %v1682 = vrot.slane %v1680, 5
      %v1683 = vsel %vm1669, %v1678, %v1682
      %v1684 = vshrl.u32 %v1637, 16
      %v1686 = vrot.slane %v1684, 4
      %v1687 = vor.u32 %v1686, %v1682
      %v1688 = vrot.slane %v1687, 4
      %v1690 = vshll.u32 %v1638, 16
      %v1692 = vrot.slane %v1690, 5
      %v1693 = vsel %vm1669, %v1688, %v1692
      %v1695 = vshrl.u32 %v1639, 16
      %v1697 = vrot.slane %v1695, 4
      %v1698 = vshll.u32 %v1639, 16
      %v1700 = vrot.slane %v1698, 5
      %v1701 = vor.u32 %v1697, %v1700
      %v1702 = vrot.slane %v1701, 4
      %v1704 = vshll.u32 %v1640, 16
      %v1706 = vrot.slane %v1704, 5
      %v1707 = vsel %vm1669, %v1702, %v1706
      %v1708 = vshrl.u32 %v1640, 16
      %v1710 = vrot.slane %v1708, 4
      %v1711 = vor.u32 %v1710, %v1706
      %v1712 = vrot.slane %v1711, 4
      %v1714 = vshll.u32 %v1641, 16
      %v1716 = vrot.slane %v1714, 5
      %v1717 = vsel %vm1669, %v1712, %v1716
      %v1719 = vshrl.u32 %v1642, 16
      %v1721 = vrot.slane %v1719, 4
      %v1722 = vshll.u32 %v1642, 16
      %v1724 = vrot.slane %v1722, 5
      %v1725 = vor.u32 %v1721, %v1724
      %v1726 = vrot.slane %v1725, 4
      %v1728 = vshll.u32 %v1643, 16
      %v1730 = vrot.slane %v1728, 5
      %v1731 = vsel %vm1669, %v1726, %v1730
      %v1732 = vshrl.u32 %v1643, 16
      %v1734 = vrot.slane %v1732, 4
      %v1735 = vor.u32 %v1734, %v1730
      %v1736 = vrot.slane %v1735, 4
      %v1738 = vshll.u32 %v1644, 16
      %v1740 = vrot.slane %v1738, 5
      %v1741 = vsel %vm1669, %v1736, %v1740
      %v1743 = vshrl.u32 %v1645, 16
      %v1745 = vrot.slane %v1743, 4
      %v1746 = vshll.u32 %v1645, 16
      %v1748 = vrot.slane %v1746, 5
      %v1749 = vor.u32 %v1745, %v1748
      %v1750 = vrot.slane %v1749, 4
      %v1752 = vshll.u32 %v1646, 16
      %v1754 = vrot.slane %v1752, 5
      %v1755 = vsel %vm1669, %v1750, %v1754
      %v1756 = vshrl.u32 %v1646, 16
      %v1758 = vrot.slane %v1756, 4
      %v1759 = vor.u32 %v1758, %v1754
      %v1760 = vrot.slane %v1759, 4
      %v1762 = vshll.u32 %v1647, 16
      %v1764 = vrot.slane %v1762, 5
      %v1765 = vsel %vm1669, %v1760, %v1764
      %v1767 = vshrl.u32 %v1648, 16
      %v1769 = vrot.slane %v1767, 4
      %v1770 = vshll.u32 %v1648, 16
      %v1772 = vrot.slane %v1770, 5
      %v1773 = vor.u32 %v1769, %v1772
      %v1774 = vrot.slane %v1773, 4
      %v1776 = vshll.u32 %v1649, 16
      %v1778 = vrot.slane %v1776, 5
      %v1779 = vsel %vm1669, %v1774, %v1778
      %v1780 = vshrl.u32 %v1649, 16
      %v1782 = vrot.slane %v1780, 4
      %v1783 = vor.u32 %v1782, %v1778
      %v1784 = vrot.slane %v1783, 4
      %v1786 = vshll.u32 %v1650, 16
      %v1788 = vrot.slane %v1786, 5
      %v1789 = vsel %vm1669, %v1784, %v1788
      %v1791 = vshrl.u32 %v1651, 16
      %v1793 = vrot.slane %v1791, 4
      %v1794 = vshll.u32 %v1651, 16
      %v1796 = vrot.slane %v1794, 5
      %v1797 = vor.u32 %v1793, %v1796
      %v1798 = vrot.slane %v1797, 4
      %v1800 = vshll.u32 %v1652, 16
      %v1802 = vrot.slane %v1800, 5
      %v1803 = vsel %vm1669, %v1798, %v1802
      %v1804 = vshrl.u32 %v1652, 16
      %v1806 = vrot.slane %v1804, 4
      %v1807 = vor.u32 %v1806, %v1802
      %v1808 = vrot.slane %v1807, 4
      %v1810 = vshll.u32 %v1653, 16
      %v1812 = vrot.slane %v1810, 5
      %v1813 = vsel %vm1669, %v1808, %v1812
      %v1815 = vshrl.u32 %v1654, 16
      %v1817 = vrot.slane %v1815, 4
      %v1818 = vshll.u32 %v1654, 16
      %v1820 = vrot.slane %v1818, 5
      %v1821 = vor.u32 %v1817, %v1820
      %v1822 = vrot.slane %v1821, 4
      %v1824 = vshll.u32 %v1655, 16
      %v1826 = vrot.slane %v1824, 5
      %v1827 = vsel %vm1669, %v1822, %v1826
      %v1828 = vshrl.u32 %v1655, 16
      %v1830 = vrot.slane %v1828, 4
      %v1831 = vor.u32 %v1830, %v1826
      %v1832 = vrot.slane %v1831, 4
      %v1834 = vshll.u32 %v1656, 16
      %v1836 = vrot.slane %v1834, 5
      %v1837 = vsel %vm1669, %v1832, %v1836
      %v1839 = vshrl.u32 %v1657, 16
      %v1841 = vrot.slane %v1839, 4
      %v1842 = vshll.u32 %v1657, 16
      %v1844 = vrot.slane %v1842, 5
      %v1845 = vor.u32 %v1841, %v1844
      %v1846 = vrot.slane %v1845, 4
      %v1848 = vshll.u32 %v1658, 16
      %v1850 = vrot.slane %v1848, 5
      %v1851 = vsel %vm1669, %v1846, %v1850
      %v1852 = vshrl.u32 %v1658, 16
      %v1854 = vrot.slane %v1852, 4
      %v1855 = vor.u32 %v1854, %v1850
      %v1856 = vrot.slane %v1855, 4
      %v1858 = vshll.u32 %v1659, 16
      %v1860 = vrot.slane %v1858, 5
      %v1861 = vsel %vm1669, %v1856, %v1860
      %s1862 = scalar_lea.vmem %s20, 2
      %v1863 = vld [vmem:[%s1862] sm:$0x3]
      %v1864 = vunpack.c.l.b16 %v1683
      %v1865 = vunpack.c.l.b16 %v1693
      %v1866 = vunpack.c.l.b16 %v1707
      %v1867 = vunpack.c.l.b16 %v1717
      %v1868 = vunpack.c.l.b16 %v1731
      %v1869 = vunpack.c.l.b16 %v1741
      %v1870 = vunpack.c.l.b16 %v1755
      %v1871 = vunpack.c.l.b16 %v1765
      %v1872 = vunpack.c.l.b16 %v1779
      %v1873 = vunpack.c.l.b16 %v1789
      %v1874 = vunpack.c.l.b16 %v1803
      %v1875 = vunpack.c.l.b16 %v1813
      %v1876 = vunpack.c.l.b16 %v1827
      %v1877 = vunpack.c.l.b16 %v1837
      %v1878 = vunpack.c.l.b16 %v1851
      %v1879 = vunpack.c.l.b16 %v1861
      %v1880 = vpack.c.b16 %v1865, %v1864
      %v1881 = vpack.c.b16 %v1867, %v1866
      %v1882 = vpack.c.b16 %v1869, %v1868
      %v1883 = vpack.c.b16 %v1871, %v1870
      %v1884 = vpack.c.b16 %v1873, %v1872
      %v1885 = vpack.c.b16 %v1875, %v1874
      %v1886 = vpack.c.b16 %v1877, %v1876
      %v1887 = vpack.c.b16 %v1879, %v1878
      %vm1888 = vcmask 31744
      %v1890 = vsel %vm1888, %v1880, 0
      %v1893 = vsel %vm1888, %v1881, 0
      %v1896 = vsel %vm1888, %v1882, 0
      %v1899 = vsel %vm1888, %v1883, 0
      %v1902 = vsel %vm1888, %v1884, 0
      %v1905 = vsel %vm1888, %v1885, 0
      %v1908 = vsel %vm1888, %v1886, 0
      %v1911 = vsel %vm1888, %v1887, 0
      %vm1913 = vcmask 1041408
      %v1915 = vsel %vm1913, %v1863, 0
      %1917 = vmatprep.subr.bf16.mxu0 0
      %1918 = vmatpush1.bf16.msra.mxu0 0
      %1919 = vmatprep.subr.bf16.mxu0 0
      %1920 = vmatpush1.bf16.msra.mxu0 0
      %1921 = vmatprep.subr.bf16.mxu0 0
      %1922 = vmatpush1.bf16.msra.mxu0 0
      %1923 = vmatprep.subr.bf16.mxu0 0
      %1924 = vmatpush1.bf16.msra.mxu0 0
      %1925 = vmatprep.subr.bf16.mxu0 0
      %1926 = vmatpush1.bf16.msra.mxu0 0
      %1927 = vmatprep.subr.bf16.mxu0 0
      %1928 = vmatpush1.bf16.msra.mxu0 0
      %1929 = vmatprep.subr.bf16.mxu0 0
      %1930 = vmatpush1.bf16.msra.mxu0 0
      %1931 = vmatprep.subr.bf16.mxu0 0
      %1932 = vmatpush1.bf16.msra.mxu0 %v1915
      %1933 = vmatprep.subr.bf16.mxu0 0
      %1934 = vmatpush2.bf16.msra.mxu0 0
      %1935 = vmatprep.subr.bf16.mxu0 0
      %1936 = vmatpush2.bf16.msra.mxu0 0
      %1937 = vmatprep.subr.bf16.mxu0 0
      %1938 = vmatpush2.bf16.msra.mxu0 0
      %1939 = vmatprep.subr.bf16.mxu0 0
      %1940 = vmatpush2.bf16.msra.mxu0 0
      %1941 = vmatprep.subr.bf16.mxu0 0
      %1942 = vmatpush2.bf16.msra.mxu0 0
      %1943 = vmatprep.subr.bf16.mxu0 0
      %1944 = vmatpush2.bf16.msra.mxu0 0
      %1945 = vmatprep.subr.bf16.mxu0 0
      %1946 = vmatpush2.bf16.msra.mxu0 0
      %1947 = vmatprep.subr.bf16.mxu0 0
      %1948 = vmatpush2.bf16.msra.mxu0 0
      %1949 = vmatprep.mubr.bf16.mxu0 0
      %1950 = vmatmul.mubr.bf16.gmra.mxu0 %v1890
      %v1951 = vpop.f32.mrf.mxu0
      %v1952 = vadd.f32 0.0, %v1951
      %v1953 = vpop.f32.mrf.mxu0
      %v1954 = vpop.f32.mrf.mxu0
      %v1955 = vadd.f32 0.0, %v1954
      %v1956 = vpop.f32.mrf.mxu0
      %1957 = vmatprep.mubr.bf16.mxu0 0
      %1958 = vmatmul.mubr.bf16.gmra.mxu0 %v1893
      %v1959 = vpop.f32.mrf.mxu0
      %v1960 = vadd.f32 0.0, %v1959
      %v1961 = vpop.f32.mrf.mxu0
      %v1962 = vpop.f32.mrf.mxu0
      %v1963 = vadd.f32 0.0, %v1962
      %v1964 = vpop.f32.mrf.mxu0
      %1965 = vmatprep.mubr.bf16.mxu0 0
      %1966 = vmatmul.mubr.bf16.gmra.mxu0 %v1896
      %v1967 = vpop.f32.mrf.mxu0
      %v1968 = vadd.f32 0.0, %v1967
      %v1969 = vpop.f32.mrf.mxu0
      %v1970 = vpop.f32.mrf.mxu0
      %v1971 = vadd.f32 0.0, %v1970
      %v1972 = vpop.f32.mrf.mxu0
      %1973 = vmatprep.mubr.bf16.mxu0 0
      %1974 = vmatmul.mubr.bf16.gmra.mxu0 %v1899
      %v1975 = vpop.f32.mrf.mxu0
      %v1976 = vadd.f32 0.0, %v1975
      %v1977 = vpop.f32.mrf.mxu0
      %v1978 = vpop.f32.mrf.mxu0
      %v1979 = vadd.f32 0.0, %v1978
      %v1980 = vpop.f32.mrf.mxu0
      %1981 = vmatprep.mubr.bf16.mxu0 0
      %1982 = vmatmul.mubr.bf16.gmra.mxu0 %v1902
      %v1983 = vpop.f32.mrf.mxu0
      %v1984 = vadd.f32 0.0, %v1983
      %v1985 = vpop.f32.mrf.mxu0
      %v1986 = vpop.f32.mrf.mxu0
      %v1987 = vadd.f32 0.0, %v1986
      %v1988 = vpop.f32.mrf.mxu0
      %1989 = vmatprep.mubr.bf16.mxu0 0
      %1990 = vmatmul.mubr.bf16.gmra.mxu0 %v1905
      %v1991 = vpop.f32.mrf.mxu0
      %v1992 = vadd.f32 0.0, %v1991
      %v1993 = vpop.f32.mrf.mxu0
      %v1994 = vpop.f32.mrf.mxu0
      %v1995 = vadd.f32 0.0, %v1994
      %v1996 = vpop.f32.mrf.mxu0
      %1997 = vmatprep.mubr.bf16.mxu0 0
      %1998 = vmatmul.mubr.bf16.gmra.mxu0 %v1908
      %v1999 = vpop.f32.mrf.mxu0
      %v2000 = vadd.f32 0.0, %v1999
      %v2001 = vpop.f32.mrf.mxu0
      %v2002 = vpop.f32.mrf.mxu0
      %v2003 = vadd.f32 0.0, %v2002
      %v2004 = vpop.f32.mrf.mxu0
      %2005 = vmatprep.mubr.bf16.mxu0 0
      %2006 = vmatmul.mubr.bf16.gmra.mxu0 %v1911
      %v2007 = vpop.f32.mrf.mxu0
      %v2008 = vadd.f32 0.0, %v2007
      %v2009 = vpop.f32.mrf.mxu0
      %v2010 = vpop.f32.mrf.mxu0
      %v2011 = vadd.f32 0.0, %v2010
      %v2012 = vpop.f32.mrf.mxu0
      %2013 = vdwg.mxu0
      %v2030 = vunpack.c.l.b16 %v1636
      %v2031 = vunpack.c.l.b16 %v1637
      %v2032 = vunpack.c.l.b16 %v1639
      %v2033 = vunpack.c.l.b16 %v1640
      %v2034 = vunpack.c.l.b16 %v1642
      %v2035 = vunpack.c.l.b16 %v1643
      %v2036 = vunpack.c.l.b16 %v1645
      %v2037 = vunpack.c.l.b16 %v1646
      %v2038 = vunpack.c.l.b16 %v1648
      %v2039 = vunpack.c.l.b16 %v1649
      %v2040 = vunpack.c.l.b16 %v1651
      %v2041 = vunpack.c.l.b16 %v1652
      %v2042 = vunpack.c.l.b16 %v1654
      %v2043 = vunpack.c.l.b16 %v1655
      %v2044 = vunpack.c.l.b16 %v1657
      %v2045 = vunpack.c.l.b16 %v1658
      %v2046 = vpack.c.b16 %v2031, %v2030
      %v2047 = vpack.c.b16 %v2033, %v2032
      %v2048 = vpack.c.b16 %v2035, %v2034
      %v2049 = vpack.c.b16 %v2037, %v2036
      %v2050 = vpack.c.b16 %v2039, %v2038
      %v2051 = vpack.c.b16 %v2041, %v2040
      %v2052 = vpack.c.b16 %v2043, %v2042
      %v2053 = vpack.c.b16 %v2045, %v2044
      %v2055 = vsel %vm1888, %v2046, 0
      %v2058 = vsel %vm1888, %v2047, 0
      %v2061 = vsel %vm1888, %v2048, 0
      %v2064 = vsel %vm1888, %v2049, 0
      %v2067 = vsel %vm1888, %v2050, 0
      %v2070 = vsel %vm1888, %v2051, 0
      %v2073 = vsel %vm1888, %v2052, 0
      %v2076 = vsel %vm1888, %v2053, 0
      %v2079 = vsel %vm1913, %v1666, 0
      %2081 = vmatprep.subr.bf16.mxu0 0
      %2082 = vmatpush1.bf16.msra.mxu0 0
      %2083 = vmatprep.subr.bf16.mxu0 0
      %2084 = vmatpush1.bf16.msra.mxu0 0
      %2085 = vmatprep.subr.bf16.mxu0 0
      %2086 = vmatpush1.bf16.msra.mxu0 0
      %2087 = vmatprep.subr.bf16.mxu0 0
      %2088 = vmatpush1.bf16.msra.mxu0 0
      %2089 = vmatprep.subr.bf16.mxu0 0
      %2090 = vmatpush1.bf16.msra.mxu0 0
      %2091 = vmatprep.subr.bf16.mxu0 0
      %2092 = vmatpush1.bf16.msra.mxu0 0
      %2093 = vmatprep.subr.bf16.mxu0 0
      %2094 = vmatpush1.bf16.msra.mxu0 0
      %2095 = vmatprep.subr.bf16.mxu0 0
      %2096 = vmatpush1.bf16.msra.mxu0 %v2079
      %2097 = vmatprep.subr.bf16.mxu0 0
      %2098 = vmatpush2.bf16.msra.mxu0 0
      %2099 = vmatprep.subr.bf16.mxu0 0
      %2100 = vmatpush2.bf16.msra.mxu0 0
      %2101 = vmatprep.subr.bf16.mxu0 0
      %2102 = vmatpush2.bf16.msra.mxu0 0
      %2103 = vmatprep.subr.bf16.mxu0 0
      %2104 = vmatpush2.bf16.msra.mxu0 0
      %2105 = vmatprep.subr.bf16.mxu0 0
      %2106 = vmatpush2.bf16.msra.mxu0 0
      %2107 = vmatprep.subr.bf16.mxu0 0
      %2108 = vmatpush2.bf16.msra.mxu0 0
      %2109 = vmatprep.subr.bf16.mxu0 0
      %2110 = vmatpush2.bf16.msra.mxu0 0
      %2111 = vmatprep.subr.bf16.mxu0 0
      %2112 = vmatpush2.bf16.msra.mxu0 0
      %2113 = vmatprep.mubr.bf16.mxu0 0
      %2114 = vmatmul.mubr.bf16.gmra.mxu0 %v2055
      %v2115 = vpop.f32.mrf.mxu0
      %v2116 = vadd.f32 %v1952, %v2115
      %v2117 = vpop.f32.mrf.mxu0
      %v2118 = vpop.f32.mrf.mxu0
      %v2119 = vadd.f32 %v1955, %v2118
      %v2120 = vpop.f32.mrf.mxu0
      %2121 = vmatprep.mubr.bf16.mxu0 0
      %2122 = vmatmul.mubr.bf16.gmra.mxu0 %v2058
      %v2123 = vpop.f32.mrf.mxu0
      %v2124 = vadd.f32 %v1960, %v2123
      %v2125 = vpop.f32.mrf.mxu0
      %v2126 = vpop.f32.mrf.mxu0
      %v2127 = vadd.f32 %v1963, %v2126
      %v2128 = vpop.f32.mrf.mxu0
      %2129 = vmatprep.mubr.bf16.mxu0 0
      %2130 = vmatmul.mubr.bf16.gmra.mxu0 %v2061
      %v2131 = vpop.f32.mrf.mxu0
      %v2132 = vadd.f32 %v1968, %v2131
      %v2133 = vpop.f32.mrf.mxu0
      %v2134 = vpop.f32.mrf.mxu0
      %v2135 = vadd.f32 %v1971, %v2134
      %v2136 = vpop.f32.mrf.mxu0
      %2137 = vmatprep.mubr.bf16.mxu0 0
      %2138 = vmatmul.mubr.bf16.gmra.mxu0 %v2064
      %v2139 = vpop.f32.mrf.mxu0
      %v2140 = vadd.f32 %v1976, %v2139
      %v2141 = vpop.f32.mrf.mxu0
      %v2142 = vpop.f32.mrf.mxu0
      %v2143 = vadd.f32 %v1979, %v2142
      %v2144 = vpop.f32.mrf.mxu0
      %2145 = vmatprep.mubr.bf16.mxu0 0
      %2146 = vmatmul.mubr.bf16.gmra.mxu0 %v2067
      %v2147 = vpop.f32.mrf.mxu0
      %v2148 = vadd.f32 %v1984, %v2147
      %v2149 = vpop.f32.mrf.mxu0
      %v2150 = vpop.f32.mrf.mxu0
      %v2151 = vadd.f32 %v1987, %v2150
      %v2152 = vpop.f32.mrf.mxu0
      %2153 = vmatprep.mubr.bf16.mxu0 0
      %2154 = vmatmul.mubr.bf16.gmra.mxu0 %v2070
      %v2155 = vpop.f32.mrf.mxu0
      %v2156 = vadd.f32 %v1992, %v2155
      %v2157 = vpop.f32.mrf.mxu0
      %v2158 = vpop.f32.mrf.mxu0
      %v2159 = vadd.f32 %v1995, %v2158
      %v2160 = vpop.f32.mrf.mxu0
      %2161 = vmatprep.mubr.bf16.mxu0 0
      %2162 = vmatmul.mubr.bf16.gmra.mxu0 %v2073
      %v2163 = vpop.f32.mrf.mxu0
      %v2164 = vadd.f32 %v2000, %v2163
      %v2165 = vpop.f32.mrf.mxu0
      %v2166 = vpop.f32.mrf.mxu0
      %v2167 = vadd.f32 %v2003, %v2166
      %v2168 = vpop.f32.mrf.mxu0
      %2169 = vmatprep.mubr.bf16.mxu0 0
      %2170 = vmatmul.mubr.bf16.gmra.mxu0 %v2076
      %v2171 = vpop.f32.mrf.mxu0
      %v2172 = vadd.f32 %v2008, %v2171
      %v2173 = vpop.f32.mrf.mxu0
      %v2174 = vpop.f32.mrf.mxu0
      %v2175 = vadd.f32 %v2011, %v2174
      %v2176 = vpop.f32.mrf.mxu0
      %2177 = vdwg.mxu0
      %vm2186 = vcmask 1042432
      %vm2187 = vcmask 1046532
      %vm2188 = vmor %vm2186, %vm2187
      %v2189 = vrot.slane %v1636, 5
      %v2190 = vrot.slane %v2189, 4
      %v2191 = vrot.slane %v1637, 5
      %v2192 = vsel %vm2188, %v2190, %v2191
      %v2193 = vrot.slane %v2191, 4
      %v2194 = vrot.slane %v1638, 5
      %v2195 = vsel %vm2188, %v2193, %v2194
      %v2196 = vrot.slane %v1639, 5
      %v2197 = vrot.slane %v2196, 4
      %v2198 = vrot.slane %v1640, 5
      %v2199 = vsel %vm2188, %v2197, %v2198
      %v2200 = vrot.slane %v2198, 4
      %v2201 = vrot.slane %v1641, 5
      %v2202 = vsel %vm2188, %v2200, %v2201
      %v2203 = vrot.slane %v1642, 5
      %v2204 = vrot.slane %v2203, 4
      %v2205 = vrot.slane %v1643, 5
      %v2206 = vsel %vm2188, %v2204, %v2205
      %v2207 = vrot.slane %v2205, 4
      %v2208 = vrot.slane %v1644, 5
      %v2209 = vsel %vm2188, %v2207, %v2208
      %v2210 = vrot.slane %v1645, 5
      %v2211 = vrot.slane %v2210, 4
      %v2212 = vrot.slane %v1646, 5
      %v2213 = vsel %vm2188, %v2211, %v2212
      %v2214 = vrot.slane %v2212, 4
      %v2215 = vrot.slane %v1647, 5
      %v2216 = vsel %vm2188, %v2214, %v2215
      %v2217 = vrot.slane %v1648, 5
      %v2218 = vrot.slane %v2217, 4
      %v2219 = vrot.slane %v1649, 5
      %v2220 = vsel %vm2188, %v2218, %v2219
      %v2221 = vrot.slane %v2219, 4
      %v2222 = vrot.slane %v1650, 5
      %v2223 = vsel %vm2188, %v2221, %v2222
      %v2224 = vrot.slane %v1651, 5
      %v2225 = vrot.slane %v2224, 4
      %v2226 = vrot.slane %v1652, 5
      %v2227 = vsel %vm2188, %v2225, %v2226
      %v2228 = vrot.slane %v2226, 4
      %v2229 = vrot.slane %v1653, 5
      %v2230 = vsel %vm2188, %v2228, %v2229
      %v2231 = vrot.slane %v1654, 5
      %v2232 = vrot.slane %v2231, 4
      %v2233 = vrot.slane %v1655, 5
      %v2234 = vsel %vm2188, %v2232, %v2233
      %v2235 = vrot.slane %v2233, 4
      %v2236 = vrot.slane %v1656, 5
      %v2237 = vsel %vm2188, %v2235, %v2236
      %v2238 = vrot.slane %v1657, 5
      %v2239 = vrot.slane %v2238, 4
      %v2240 = vrot.slane %v1658, 5
      %v2241 = vsel %vm2188, %v2239, %v2240
      %v2242 = vrot.slane %v2240, 4
      %v2243 = vrot.slane %v1659, 5
      %v2244 = vsel %vm2188, %v2242, %v2243
      %s2245 = scalar_lea.vmem %s20, 4
      %v2246 = vld [vmem:[%s2245] sm:$0x3]
      %v2247 = vunpack.c.l.b16 %v2192
      %v2248 = vunpack.c.l.b16 %v2195
      %v2249 = vunpack.c.l.b16 %v2199
      %v2250 = vunpack.c.l.b16 %v2202
      %v2251 = vunpack.c.l.b16 %v2206
      %v2252 = vunpack.c.l.b16 %v2209
      %v2253 = vunpack.c.l.b16 %v2213
      %v2254 = vunpack.c.l.b16 %v2216
      %v2255 = vunpack.c.l.b16 %v2220
      %v2256 = vunpack.c.l.b16 %v2223
      %v2257 = vunpack.c.l.b16 %v2227
      %v2258 = vunpack.c.l.b16 %v2230
      %v2259 = vunpack.c.l.b16 %v2234
      %v2260 = vunpack.c.l.b16 %v2237
      %v2261 = vunpack.c.l.b16 %v2241
      %v2262 = vunpack.c.l.b16 %v2244
      %v2263 = vpack.c.b16 %v2248, %v2247
      %v2264 = vpack.c.b16 %v2250, %v2249
      %v2265 = vpack.c.b16 %v2252, %v2251
      %v2266 = vpack.c.b16 %v2254, %v2253
      %v2267 = vpack.c.b16 %v2256, %v2255
      %v2268 = vpack.c.b16 %v2258, %v2257
      %v2269 = vpack.c.b16 %v2260, %v2259
      %v2270 = vpack.c.b16 %v2262, %v2261
      %v2272 = vsel %vm1888, %v2263, 0
      %v2275 = vsel %vm1888, %v2264, 0
      %v2278 = vsel %vm1888, %v2265, 0
      %v2281 = vsel %vm1888, %v2266, 0
      %v2284 = vsel %vm1888, %v2267, 0
      %v2287 = vsel %vm1888, %v2268, 0
      %v2290 = vsel %vm1888, %v2269, 0
      %v2293 = vsel %vm1888, %v2270, 0
      %v2296 = vsel %vm1913, %v2246, 0
      %2298 = vmatprep.subr.bf16.mxu0 0
      %2299 = vmatpush1.bf16.msra.mxu0 0
      %2300 = vmatprep.subr.bf16.mxu0 0
      %2301 = vmatpush1.bf16.msra.mxu0 0
      %2302 = vmatprep.subr.bf16.mxu0 0
      %2303 = vmatpush1.bf16.msra.mxu0 0
      %2304 = vmatprep.subr.bf16.mxu0 0
      %2305 = vmatpush1.bf16.msra.mxu0 0
      %2306 = vmatprep.subr.bf16.mxu0 0
      %2307 = vmatpush1.bf16.msra.mxu0 0
      %2308 = vmatprep.subr.bf16.mxu0 0
      %2309 = vmatpush1.bf16.msra.mxu0 0
      %2310 = vmatprep.subr.bf16.mxu0 0
      %2311 = vmatpush1.bf16.msra.mxu0 0
      %2312 = vmatprep.subr.bf16.mxu0 0
      %2313 = vmatpush1.bf16.msra.mxu0 %v2296
      %2314 = vmatprep.subr.bf16.mxu0 0
      %2315 = vmatpush2.bf16.msra.mxu0 0
      %2316 = vmatprep.subr.bf16.mxu0 0
      %2317 = vmatpush2.bf16.msra.mxu0 0
      %2318 = vmatprep.subr.bf16.mxu0 0
      %2319 = vmatpush2.bf16.msra.mxu0 0
      %2320 = vmatprep.subr.bf16.mxu0 0
      %2321 = vmatpush2.bf16.msra.mxu0 0
      %2322 = vmatprep.subr.bf16.mxu0 0
      %2323 = vmatpush2.bf16.msra.mxu0 0
      %2324 = vmatprep.subr.bf16.mxu0 0
      %2325 = vmatpush2.bf16.msra.mxu0 0
      %2326 = vmatprep.subr.bf16.mxu0 0
      %2327 = vmatpush2.bf16.msra.mxu0 0
      %2328 = vmatprep.subr.bf16.mxu0 0
      %2329 = vmatpush2.bf16.msra.mxu0 0
      %2330 = vmatprep.mubr.bf16.mxu0 0
      %2331 = vmatmul.mubr.bf16.gmra.mxu0 %v2272
      %v2332 = vpop.f32.mrf.mxu0
      %v2333 = vadd.f32 0.0, %v2332
      %v2334 = vpop.f32.mrf.mxu0
      %v2335 = vpop.f32.mrf.mxu0
      %v2336 = vadd.f32 0.0, %v2335
      %v2337 = vpop.f32.mrf.mxu0
      %2338 = vmatprep.mubr.bf16.mxu0 0
      %2339 = vmatmul.mubr.bf16.gmra.mxu0 %v2275
      %v2340 = vpop.f32.mrf.mxu0
      %v2341 = vadd.f32 0.0, %v2340
      %v2342 = vpop.f32.mrf.mxu0
      %v2343 = vpop.f32.mrf.mxu0
      %v2344 = vadd.f32 0.0, %v2343
      %v2345 = vpop.f32.mrf.mxu0
      %2346 = vmatprep.mubr.bf16.mxu0 0
      %2347 = vmatmul.mubr.bf16.gmra.mxu0 %v2278
      %v2348 = vpop.f32.mrf.mxu0
      %v2349 = vadd.f32 0.0, %v2348
      %v2350 = vpop.f32.mrf.mxu0
      %v2351 = vpop.f32.mrf.mxu0
      %v2352 = vadd.f32 0.0, %v2351
      %v2353 = vpop.f32.mrf.mxu0
      %2354 = vmatprep.mubr.bf16.mxu0 0
      %2355 = vmatmul.mubr.bf16.gmra.mxu0 %v2281
      %v2356 = vpop.f32.mrf.mxu0
      %v2357 = vadd.f32 0.0, %v2356
      %v2358 = vpop.f32.mrf.mxu0
      %v2359 = vpop.f32.mrf.mxu0
      %v2360 = vadd.f32 0.0, %v2359
      %v2361 = vpop.f32.mrf.mxu0
      %2362 = vmatprep.mubr.bf16.mxu0 0
      %2363 = vmatmul.mubr.bf16.gmra.mxu0 %v2284
      %v2364 = vpop.f32.mrf.mxu0
      %v2365 = vadd.f32 0.0, %v2364
      %v2366 = vpop.f32.mrf.mxu0
      %v2367 = vpop.f32.mrf.mxu0
      %v2368 = vadd.f32 0.0, %v2367
      %v2369 = vpop.f32.mrf.mxu0
      %2370 = vmatprep.mubr.bf16.mxu0 0
      %2371 = vmatmul.mubr.bf16.gmra.mxu0 %v2287
      %v2372 = vpop.f32.mrf.mxu0
      %v2373 = vadd.f32 0.0, %v2372
      %v2374 = vpop.f32.mrf.mxu0
      %v2375 = vpop.f32.mrf.mxu0
      %v2376 = vadd.f32 0.0, %v2375
      %v2377 = vpop.f32.mrf.mxu0
      %2378 = vmatprep.mubr.bf16.mxu0 0
      %2379 = vmatmul.mubr.bf16.gmra.mxu0 %v2290
      %v2380 = vpop.f32.mrf.mxu0
      %v2381 = vadd.f32 0.0, %v2380
      %v2382 = vpop.f32.mrf.mxu0
      %v2383 = vpop.f32.mrf.mxu0
      %v2384 = vadd.f32 0.0, %v2383
      %v2385 = vpop.f32.mrf.mxu0
      %2386 = vmatprep.mubr.bf16.mxu0 0
      %2387 = vmatmul.mubr.bf16.gmra.mxu0 %v2293
      %v2388 = vpop.f32.mrf.mxu0
      %v2389 = vadd.f32 0.0, %v2388
      %v2390 = vpop.f32.mrf.mxu0
      %v2391 = vpop.f32.mrf.mxu0
      %v2392 = vadd.f32 0.0, %v2391
      %v2393 = vpop.f32.mrf.mxu0
      %2394 = vdwg.mxu0
      %v2395 = vadd.f32 %v2116, %v2333
      %v2396 = vadd.f32 %v2119, %v2336
      %v2397 = vadd.f32 %v2124, %v2341
      %v2398 = vadd.f32 %v2127, %v2344
      %v2399 = vadd.f32 %v2132, %v2349
      %v2400 = vadd.f32 %v2135, %v2352
      %v2401 = vadd.f32 %v2140, %v2357
      %v2402 = vadd.f32 %v2143, %v2360
      %v2403 = vadd.f32 %v2148, %v2365
      %v2404 = vadd.f32 %v2151, %v2368
      %v2405 = vadd.f32 %v2156, %v2373
      %v2406 = vadd.f32 %v2159, %v2376
      %v2407 = vadd.f32 %v2164, %v2381
      %v2408 = vadd.f32 %v2167, %v2384
      %v2409 = vadd.f32 %v2172, %v2389
      %v2410 = vadd.f32 %v2175, %v2392
      %s2411 = scalar_lea.vmem %s20, 6
      %v2412 = vld [vmem:[%s2411] sm:$0x3]
      %v2415 = vunpack.c.l.b16 %v1660
      %v2416 = vunpack.c.l.b16 %v1661
      %v2417 = vpack.c.b16 %v2416, %v2415
      %v2419 = vsel %vm1888, %v2417, 0
      %v2422 = vsel %vm1913, %v2412, 0
      %2424 = vmatprep.subr.bf16.mxu0 0
      %2425 = vmatpush1.bf16.msra.mxu0 0
      %2426 = vmatprep.subr.bf16.mxu0 0
      %2427 = vmatpush1.bf16.msra.mxu0 0
      %2428 = vmatprep.subr.bf16.mxu0 0
      %2429 = vmatpush1.bf16.msra.mxu0 0
      %2430 = vmatprep.subr.bf16.mxu0 0
      %2431 = vmatpush1.bf16.msra.mxu0 0
      %2432 = vmatprep.subr.bf16.mxu0 0
      %2433 = vmatpush1.bf16.msra.mxu0 0
      %2434 = vmatprep.subr.bf16.mxu0 0
      %2435 = vmatpush1.bf16.msra.mxu0 0
      %2436 = vmatprep.subr.bf16.mxu0 0
      %2437 = vmatpush1.bf16.msra.mxu0 0
      %2438 = vmatprep.subr.bf16.mxu0 0
      %2439 = vmatpush1.bf16.msra.mxu0 %v2422
      %2440 = vmatprep.subr.bf16.mxu0 0
      %2441 = vmatpush2.bf16.msra.mxu0 0
      %2442 = vmatprep.subr.bf16.mxu0 0
      %2443 = vmatpush2.bf16.msra.mxu0 0
      %2444 = vmatprep.subr.bf16.mxu0 0
      %2445 = vmatpush2.bf16.msra.mxu0 0
      %2446 = vmatprep.subr.bf16.mxu0 0
      %2447 = vmatpush2.bf16.msra.mxu0 0
      %2448 = vmatprep.subr.bf16.mxu0 0
      %2449 = vmatpush2.bf16.msra.mxu0 0
      %2450 = vmatprep.subr.bf16.mxu0 0
      %2451 = vmatpush2.bf16.msra.mxu0 0
      %2452 = vmatprep.subr.bf16.mxu0 0
      %2453 = vmatpush2.bf16.msra.mxu0 0
      %2454 = vmatprep.subr.bf16.mxu0 0
      %2455 = vmatpush2.bf16.msra.mxu0 0
      %2456 = vmatprep.mubr.bf16.mxu0 0
      %2457 = vmatmul.mubr.bf16.gmra.mxu0 %v2058
      %v2458 = vpop.f32.mrf.mxu0
      %v2459 = vadd.f32 0.0, %v2458
      %v2460 = vpop.f32.mrf.mxu0
      %v2461 = vpop.f32.mrf.mxu0
      %v2462 = vadd.f32 0.0, %v2461
      %v2463 = vpop.f32.mrf.mxu0
      %2464 = vmatprep.mubr.bf16.mxu0 0
      %2465 = vmatmul.mubr.bf16.gmra.mxu0 %v2061
      %v2466 = vpop.f32.mrf.mxu0
      %v2467 = vadd.f32 0.0, %v2466
      %v2468 = vpop.f32.mrf.mxu0
      %v2469 = vpop.f32.mrf.mxu0
      %v2470 = vadd.f32 0.0, %v2469
      %v2471 = vpop.f32.mrf.mxu0
      %2472 = vmatprep.mubr.bf16.mxu0 0
      %2473 = vmatmul.mubr.bf16.gmra.mxu0 %v2064
      %v2474 = vpop.f32.mrf.mxu0
      %v2475 = vadd.f32 0.0, %v2474
      %v2476 = vpop.f32.mrf.mxu0
      %v2477 = vpop.f32.mrf.mxu0
      %v2478 = vadd.f32 0.0, %v2477
      %v2479 = vpop.f32.mrf.mxu0
      %2480 = vmatprep.mubr.bf16.mxu0 0
      %2481 = vmatmul.mubr.bf16.gmra.mxu0 %v2067
      %v2482 = vpop.f32.mrf.mxu0
      %v2483 = vadd.f32 0.0, %v2482
      %v2484 = vpop.f32.mrf.mxu0
      %v2485 = vpop.f32.mrf.mxu0
      %v2486 = vadd.f32 0.0, %v2485
      %v2487 = vpop.f32.mrf.mxu0
      %2488 = vmatprep.mubr.bf16.mxu0 0
      %2489 = vmatmul.mubr.bf16.gmra.mxu0 %v2070
      %v2490 = vpop.f32.mrf.mxu0
      %v2491 = vadd.f32 0.0, %v2490
      %v2492 = vpop.f32.mrf.mxu0
      %v2493 = vpop.f32.mrf.mxu0
      %v2494 = vadd.f32 0.0, %v2493
      %v2495 = vpop.f32.mrf.mxu0
      %2496 = vmatprep.mubr.bf16.mxu0 0
      %2497 = vmatmul.mubr.bf16.gmra.mxu0 %v2073
      %v2498 = vpop.f32.mrf.mxu0
      %v2499 = vadd.f32 0.0, %v2498
      %v2500 = vpop.f32.mrf.mxu0
      %v2501 = vpop.f32.mrf.mxu0
      %v2502 = vadd.f32 0.0, %v2501
      %v2503 = vpop.f32.mrf.mxu0
      %2504 = vmatprep.mubr.bf16.mxu0 0
      %2505 = vmatmul.mubr.bf16.gmra.mxu0 %v2076
      %v2506 = vpop.f32.mrf.mxu0
      %v2507 = vadd.f32 0.0, %v2506
      %v2508 = vpop.f32.mrf.mxu0
      %v2509 = vpop.f32.mrf.mxu0
      %v2510 = vadd.f32 0.0, %v2509
      %v2511 = vpop.f32.mrf.mxu0
      %2512 = vmatprep.mubr.bf16.mxu0 0
      %2513 = vmatmul.mubr.bf16.gmra.mxu0 %v2419
      %v2514 = vpop.f32.mrf.mxu0
      %v2515 = vadd.f32 0.0, %v2514
      %v2516 = vpop.f32.mrf.mxu0
      %v2517 = vpop.f32.mrf.mxu0
      %v2518 = vadd.f32 0.0, %v2517
      %v2519 = vpop.f32.mrf.mxu0
      %2520 = vdwg.mxu0
      %v2521 = vadd.f32 %v2395, %v2459
      %v2522 = vadd.f32 %v2396, %v2462
      %v2523 = vadd.f32 %v2397, %v2467
      %v2524 = vadd.f32 %v2398, %v2470
      %v2525 = vadd.f32 %v2399, %v2475
      %v2526 = vadd.f32 %v2400, %v2478
      %v2527 = vadd.f32 %v2401, %v2483
      %v2528 = vadd.f32 %v2402, %v2486
      %v2529 = vadd.f32 %v2403, %v2491
      %v2530 = vadd.f32 %v2404, %v2494
      %v2531 = vadd.f32 %v2405, %v2499
      %v2532 = vadd.f32 %v2406, %v2502
      %v2533 = vadd.f32 %v2407, %v2507
      %v2534 = vadd.f32 %v2408, %v2510
      %v2535 = vadd.f32 %v2409, %v2515
      %v2536 = vadd.f32 %v2410, %v2518
      %v2538 = vshrl.u32 %v1660, 16
      %v2540 = vrot.slane %v2538, 4
      %v2541 = vshll.u32 %v1660, 16
      %v2543 = vrot.slane %v2541, 5
      %v2544 = vor.u32 %v2540, %v2543
      %v2545 = vrot.slane %v2544, 4
      %v2547 = vshll.u32 %v1661, 16
      %v2549 = vrot.slane %v2547, 5
      %v2550 = vsel %vm1669, %v2545, %v2549
      %v2551 = vshrl.u32 %v1661, 16
      %v2553 = vrot.slane %v2551, 4
      %v2554 = vor.u32 %v2553, %v2549
      %v2555 = vrot.slane %v2554, 4
      %v2557 = vshll.u32 %v1662, 16
      %v2559 = vrot.slane %v2557, 5
      %v2560 = vsel %vm1669, %v2555, %v2559
      %s2561 = scalar_lea.vmem %s20, 8
      %v2562 = vld [vmem:[%s2561] sm:$0x3]
      %v2563 = vunpack.c.l.b16 %v2550
      %v2564 = vunpack.c.l.b16 %v2560
      %v2565 = vpack.c.b16 %v2564, %v2563
      %v2567 = vsel %vm1888, %v2565, 0
      %v2570 = vsel %vm1913, %v2562, 0
      %2572 = vmatprep.subr.bf16.mxu0 0
      %2573 = vmatpush1.bf16.msra.mxu0 0
      %2574 = vmatprep.subr.bf16.mxu0 0
      %2575 = vmatpush1.bf16.msra.mxu0 0
      %2576 = vmatprep.subr.bf16.mxu0 0
      %2577 = vmatpush1.bf16.msra.mxu0 0
      %2578 = vmatprep.subr.bf16.mxu0 0
      %2579 = vmatpush1.bf16.msra.mxu0 0
      %2580 = vmatprep.subr.bf16.mxu0 0
      %2581 = vmatpush1.bf16.msra.mxu0 0
      %2582 = vmatprep.subr.bf16.mxu0 0
      %2583 = vmatpush1.bf16.msra.mxu0 0
      %2584 = vmatprep.subr.bf16.mxu0 0
      %2585 = vmatpush1.bf16.msra.mxu0 0
      %2586 = vmatprep.subr.bf16.mxu0 0
      %2587 = vmatpush1.bf16.msra.mxu0 %v2570
      %2588 = vmatprep.subr.bf16.mxu0 0
      %2589 = vmatpush2.bf16.msra.mxu0 0
      %2590 = vmatprep.subr.bf16.mxu0 0
      %2591 = vmatpush2.bf16.msra.mxu0 0
      %2592 = vmatprep.subr.bf16.mxu0 0
      %2593 = vmatpush2.bf16.msra.mxu0 0
      %2594 = vmatprep.subr.bf16.mxu0 0
      %2595 = vmatpush2.bf16.msra.mxu0 0
      %2596 = vmatprep.subr.bf16.mxu0 0
      %2597 = vmatpush2.bf16.msra.mxu0 0
      %2598 = vmatprep.subr.bf16.mxu0 0
      %2599 = vmatpush2.bf16.msra.mxu0 0
      %2600 = vmatprep.subr.bf16.mxu0 0
      %2601 = vmatpush2.bf16.msra.mxu0 0
      %2602 = vmatprep.subr.bf16.mxu0 0
      %2603 = vmatpush2.bf16.msra.mxu0 0
      %2604 = vmatprep.mubr.bf16.mxu0 0
      %2605 = vmatmul.mubr.bf16.gmra.mxu0 %v1893
      %v2606 = vpop.f32.mrf.mxu0
      %v2607 = vadd.f32 0.0, %v2606
      %v2608 = vpop.f32.mrf.mxu0
      %v2609 = vpop.f32.mrf.mxu0
      %v2610 = vadd.f32 0.0, %v2609
      %v2611 = vpop.f32.mrf.mxu0
      %2612 = vmatprep.mubr.bf16.mxu0 0
      %2613 = vmatmul.mubr.bf16.gmra.mxu0 %v1896
      %v2614 = vpop.f32.mrf.mxu0
      %v2615 = vadd.f32 0.0, %v2614
      %v2616 = vpop.f32.mrf.mxu0
      %v2617 = vpop.f32.mrf.mxu0
      %v2618 = vadd.f32 0.0, %v2617
      %v2619 = vpop.f32.mrf.mxu0
      %2620 = vmatprep.mubr.bf16.mxu0 0
      %2621 = vmatmul.mubr.bf16.gmra.mxu0 %v1899
      %v2622 = vpop.f32.mrf.mxu0
      %v2623 = vadd.f32 0.0, %v2622
      %v2624 = vpop.f32.mrf.mxu0
      %v2625 = vpop.f32.mrf.mxu0
      %v2626 = vadd.f32 0.0, %v2625
      %v2627 = vpop.f32.mrf.mxu0
      %2628 = vmatprep.mubr.bf16.mxu0 0
      %2629 = vmatmul.mubr.bf16.gmra.mxu0 %v1902
      %v2630 = vpop.f32.mrf.mxu0
      %v2631 = vadd.f32 0.0, %v2630
      %v2632 = vpop.f32.mrf.mxu0
      %v2633 = vpop.f32.mrf.mxu0
      %v2634 = vadd.f32 0.0, %v2633
      %v2635 = vpop.f32.mrf.mxu0
      %2636 = vmatprep.mubr.bf16.mxu0 0
      %2637 = vmatmul.mubr.bf16.gmra.mxu0 %v1905
      %v2638 = vpop.f32.mrf.mxu0
      %v2639 = vadd.f32 0.0, %v2638
      %v2640 = vpop.f32.mrf.mxu0
      %v2641 = vpop.f32.mrf.mxu0
      %v2642 = vadd.f32 0.0, %v2641
      %v2643 = vpop.f32.mrf.mxu0
      %2644 = vmatprep.mubr.bf16.mxu0 0
      %2645 = vmatmul.mubr.bf16.gmra.mxu0 %v1908
      %v2646 = vpop.f32.mrf.mxu0
      %v2647 = vadd.f32 0.0, %v2646
      %v2648 = vpop.f32.mrf.mxu0
      %v2649 = vpop.f32.mrf.mxu0
      %v2650 = vadd.f32 0.0, %v2649
      %v2651 = vpop.f32.mrf.mxu0
      %2652 = vmatprep.mubr.bf16.mxu0 0
      %2653 = vmatmul.mubr.bf16.gmra.mxu0 %v1911
      %v2654 = vpop.f32.mrf.mxu0
      %v2655 = vadd.f32 0.0, %v2654
      %v2656 = vpop.f32.mrf.mxu0
      %v2657 = vpop.f32.mrf.mxu0
      %v2658 = vadd.f32 0.0, %v2657
      %v2659 = vpop.f32.mrf.mxu0
      %2660 = vmatprep.mubr.bf16.mxu0 0
      %2661 = vmatmul.mubr.bf16.gmra.mxu0 %v2567
      %v2662 = vpop.f32.mrf.mxu0
      %v2663 = vadd.f32 0.0, %v2662
      %v2664 = vpop.f32.mrf.mxu0
      %v2665 = vpop.f32.mrf.mxu0
      %v2666 = vadd.f32 0.0, %v2665
      %v2667 = vpop.f32.mrf.mxu0
      %2668 = vdwg.mxu0
      %v2669 = vadd.f32 %v2521, %v2607
      %v2670 = vadd.f32 %v2522, %v2610
      %v2671 = vadd.f32 %v2523, %v2615
      %v2672 = vadd.f32 %v2524, %v2618
      %v2673 = vadd.f32 %v2525, %v2623
      %v2674 = vadd.f32 %v2526, %v2626
      %v2675 = vadd.f32 %v2527, %v2631
      %v2676 = vadd.f32 %v2528, %v2634
      %v2677 = vadd.f32 %v2529, %v2639
      %v2678 = vadd.f32 %v2530, %v2642
      %v2679 = vadd.f32 %v2531, %v2647
      %v2680 = vadd.f32 %v2532, %v2650
      %v2681 = vadd.f32 %v2533, %v2655
      %v2682 = vadd.f32 %v2534, %v2658
      %v2683 = vadd.f32 %v2535, %v2663
      %v2684 = vadd.f32 %v2536, %v2666
      %v2686 = vrot.slane %v1660, 5
      %v2687 = vrot.slane %v2686, 4
      %v2688 = vrot.slane %v1661, 5
      %v2689 = vsel %vm2188, %v2687, %v2688
      %v2690 = vrot.slane %v2688, 4
      %v2691 = vrot.slane %v1662, 5
      %v2692 = vsel %vm2188, %v2690, %v2691
      %s2693 = scalar_lea.vmem %s20, 10
      %v2694 = vld [vmem:[%s2693] sm:$0x3]
      %v2695 = vunpack.c.l.b16 %v2689
      %v2696 = vunpack.c.l.b16 %v2692
      %v2697 = vpack.c.b16 %v2696, %v2695
      %v2699 = vsel %vm1888, %v2697, 0
      %v2702 = vsel %vm1913, %v2694, 0
      %2704 = vmatprep.subr.bf16.mxu0 0
      %2705 = vmatpush1.bf16.msra.mxu0 0
      %2706 = vmatprep.subr.bf16.mxu0 0
      %2707 = vmatpush1.bf16.msra.mxu0 0
      %2708 = vmatprep.subr.bf16.mxu0 0
      %2709 = vmatpush1.bf16.msra.mxu0 0
      %2710 = vmatprep.subr.bf16.mxu0 0
      %2711 = vmatpush1.bf16.msra.mxu0 0
      %2712 = vmatprep.subr.bf16.mxu0 0
      %2713 = vmatpush1.bf16.msra.mxu0 0
      %2714 = vmatprep.subr.bf16.mxu0 0
      %2715 = vmatpush1.bf16.msra.mxu0 0
      %2716 = vmatprep.subr.bf16.mxu0 0
      %2717 = vmatpush1.bf16.msra.mxu0 0
      %2718 = vmatprep.subr.bf16.mxu0 0
      %2719 = vmatpush1.bf16.msra.mxu0 %v2702
      %2720 = vmatprep.subr.bf16.mxu0 0
      %2721 = vmatpush2.bf16.msra.mxu0 0
      %2722 = vmatprep.subr.bf16.mxu0 0
      %2723 = vmatpush2.bf16.msra.mxu0 0
      %2724 = vmatprep.subr.bf16.mxu0 0
      %2725 = vmatpush2.bf16.msra.mxu0 0
      %2726 = vmatprep.subr.bf16.mxu0 0
      %2727 = vmatpush2.bf16.msra.mxu0 0
      %2728 = vmatprep.subr.bf16.mxu0 0
      %2729 = vmatpush2.bf16.msra.mxu0 0
      %2730 = vmatprep.subr.bf16.mxu0 0
      %2731 = vmatpush2.bf16.msra.mxu0 0
      %2732 = vmatprep.subr.bf16.mxu0 0
      %2733 = vmatpush2.bf16.msra.mxu0 0
      %2734 = vmatprep.subr.bf16.mxu0 0
      %2735 = vmatpush2.bf16.msra.mxu0 0
      %2736 = vmatprep.mubr.bf16.mxu0 0
      %2737 = vmatmul.mubr.bf16.gmra.mxu0 %v2275
      %v2738 = vpop.f32.mrf.mxu0
      %v2739 = vadd.f32 0.0, %v2738
      %v2740 = vpop.f32.mrf.mxu0
      %v2741 = vpop.f32.mrf.mxu0
      %v2742 = vadd.f32 0.0, %v2741
      %v2743 = vpop.f32.mrf.mxu0
      %2744 = vmatprep.mubr.bf16.mxu0 0
      %2745 = vmatmul.mubr.bf16.gmra.mxu0 %v2278
      %v2746 = vpop.f32.mrf.mxu0
      %v2747 = vadd.f32 0.0, %v2746
      %v2748 = vpop.f32.mrf.mxu0
      %v2749 = vpop.f32.mrf.mxu0
      %v2750 = vadd.f32 0.0, %v2749
      %v2751 = vpop.f32.mrf.mxu0
      %2752 = vmatprep.mubr.bf16.mxu0 0
      %2753 = vmatmul.mubr.bf16.gmra.mxu0 %v2281
      %v2754 = vpop.f32.mrf.mxu0
      %v2755 = vadd.f32 0.0, %v2754
      %v2756 = vpop.f32.mrf.mxu0
      %v2757 = vpop.f32.mrf.mxu0
      %v2758 = vadd.f32 0.0, %v2757
      %v2759 = vpop.f32.mrf.mxu0
      %2760 = vmatprep.mubr.bf16.mxu0 0
      %2761 = vmatmul.mubr.bf16.gmra.mxu0 %v2284
      %v2762 = vpop.f32.mrf.mxu0
      %v2763 = vadd.f32 0.0, %v2762
      %v2764 = vpop.f32.mrf.mxu0
      %v2765 = vpop.f32.mrf.mxu0
      %v2766 = vadd.f32 0.0, %v2765
      %v2767 = vpop.f32.mrf.mxu0
      %2768 = vmatprep.mubr.bf16.mxu0 0
      %2769 = vmatmul.mubr.bf16.gmra.mxu0 %v2287
      %v2770 = vpop.f32.mrf.mxu0
      %v2771 = vadd.f32 0.0, %v2770
      %v2772 = vpop.f32.mrf.mxu0
      %v2773 = vpop.f32.mrf.mxu0
      %v2774 = vadd.f32 0.0, %v2773
      %v2775 = vpop.f32.mrf.mxu0
      %2776 = vmatprep.mubr.bf16.mxu0 0
      %2777 = vmatmul.mubr.bf16.gmra.mxu0 %v2290
      %v2778 = vpop.f32.mrf.mxu0
      %v2779 = vadd.f32 0.0, %v2778
      %v2780 = vpop.f32.mrf.mxu0
      %v2781 = vpop.f32.mrf.mxu0
      %v2782 = vadd.f32 0.0, %v2781
      %v2783 = vpop.f32.mrf.mxu0
      %2784 = vmatprep.mubr.bf16.mxu0 0
      %2785 = vmatmul.mubr.bf16.gmra.mxu0 %v2293
      %v2786 = vpop.f32.mrf.mxu0
      %v2787 = vadd.f32 0.0, %v2786
      %v2788 = vpop.f32.mrf.mxu0
      %v2789 = vpop.f32.mrf.mxu0
      %v2790 = vadd.f32 0.0, %v2789
      %v2791 = vpop.f32.mrf.mxu0
      %2792 = vmatprep.mubr.bf16.mxu0 0
      %2793 = vmatmul.mubr.bf16.gmra.mxu0 %v2699
      %v2794 = vpop.f32.mrf.mxu0
      %v2795 = vadd.f32 0.0, %v2794
      %v2796 = vpop.f32.mrf.mxu0
      %v2797 = vpop.f32.mrf.mxu0
      %v2798 = vadd.f32 0.0, %v2797
      %v2799 = vpop.f32.mrf.mxu0
      %2800 = vdwg.mxu0
      %v2801 = vadd.f32 %v2669, %v2739
      %v2802 = vadd.f32 %v2670, %v2742
      %v2803 = vadd.f32 %v2671, %v2747
      %v2804 = vadd.f32 %v2672, %v2750
      %v2805 = vadd.f32 %v2673, %v2755
      %v2806 = vadd.f32 %v2674, %v2758
      %v2807 = vadd.f32 %v2675, %v2763
      %v2808 = vadd.f32 %v2676, %v2766
      %v2809 = vadd.f32 %v2677, %v2771
      %v2810 = vadd.f32 %v2678, %v2774
      %v2811 = vadd.f32 %v2679, %v2779
      %v2812 = vadd.f32 %v2680, %v2782
      %v2813 = vadd.f32 %v2681, %v2787
      %v2814 = vadd.f32 %v2682, %v2790
      %v2815 = vadd.f32 %v2683, %v2795
      %v2816 = vadd.f32 %v2684, %v2798
      %s2817 = scalar_lea.vmem %s20, 12
      %v2818 = vld [vmem:[%s2817] sm:$0x3]
      %v2821 = vunpack.c.l.b16 %v1663
      %v2822 = vunpack.c.l.b16 %v1664
      %v2823 = vpack.c.b16 %v2822, %v2821
      %v2825 = vsel %vm1888, %v2823, 0
      %v2828 = vsel %vm1913, %v2818, 0
      %2830 = vmatprep.subr.bf16.mxu0 0
      %2831 = vmatpush1.bf16.msra.mxu0 0
      %2832 = vmatprep.subr.bf16.mxu0 0
      %2833 = vmatpush1.bf16.msra.mxu0 0
      %2834 = vmatprep.subr.bf16.mxu0 0
      %2835 = vmatpush1.bf16.msra.mxu0 0
      %2836 = vmatprep.subr.bf16.mxu0 0
      %2837 = vmatpush1.bf16.msra.mxu0 0
      %2838 = vmatprep.subr.bf16.mxu0 0
      %2839 = vmatpush1.bf16.msra.mxu0 0
      %2840 = vmatprep.subr.bf16.mxu0 0
      %2841 = vmatpush1.bf16.msra.mxu0 0
      %2842 = vmatprep.subr.bf16.mxu0 0
      %2843 = vmatpush1.bf16.msra.mxu0 0
      %2844 = vmatprep.subr.bf16.mxu0 0
      %2845 = vmatpush1.bf16.msra.mxu0 %v2828
      %2846 = vmatprep.subr.bf16.mxu0 0
      %2847 = vmatpush2.bf16.msra.mxu0 0
      %2848 = vmatprep.subr.bf16.mxu0 0
      %2849 = vmatpush2.bf16.msra.mxu0 0
      %2850 = vmatprep.subr.bf16.mxu0 0
      %2851 = vmatpush2.bf16.msra.mxu0 0
      %2852 = vmatprep.subr.bf16.mxu0 0
      %2853 = vmatpush2.bf16.msra.mxu0 0
      %2854 = vmatprep.subr.bf16.mxu0 0
      %2855 = vmatpush2.bf16.msra.mxu0 0
      %2856 = vmatprep.subr.bf16.mxu0 0
      %2857 = vmatpush2.bf16.msra.mxu0 0
      %2858 = vmatprep.subr.bf16.mxu0 0
      %2859 = vmatpush2.bf16.msra.mxu0 0
      %2860 = vmatprep.subr.bf16.mxu0 0
      %2861 = vmatpush2.bf16.msra.mxu0 0
      %2862 = vmatprep.mubr.bf16.mxu0 0
      %2863 = vmatmul.mubr.bf16.gmra.mxu0 %v2061
      %v2864 = vpop.f32.mrf.mxu0
      %v2865 = vadd.f32 0.0, %v2864
      %v2866 = vpop.f32.mrf.mxu0
      %v2867 = vpop.f32.mrf.mxu0
      %v2868 = vadd.f32 0.0, %v2867
      %v2869 = vpop.f32.mrf.mxu0
      %2870 = vmatprep.mubr.bf16.mxu0 0
      %2871 = vmatmul.mubr.bf16.gmra.mxu0 %v2064
      %v2872 = vpop.f32.mrf.mxu0
      %v2873 = vadd.f32 0.0, %v2872
      %v2874 = vpop.f32.mrf.mxu0
      %v2875 = vpop.f32.mrf.mxu0
      %v2876 = vadd.f32 0.0, %v2875
      %v2877 = vpop.f32.mrf.mxu0
      %2878 = vmatprep.mubr.bf16.mxu0 0
      %2879 = vmatmul.mubr.bf16.gmra.mxu0 %v2067
      %v2880 = vpop.f32.mrf.mxu0
      %v2881 = vadd.f32 0.0, %v2880
      %v2882 = vpop.f32.mrf.mxu0
      %v2883 = vpop.f32.mrf.mxu0
      %v2884 = vadd.f32 0.0, %v2883
      %v2885 = vpop.f32.mrf.mxu0
      %2886 = vmatprep.mubr.bf16.mxu0 0
      %2887 = vmatmul.mubr.bf16.gmra.mxu0 %v2070
      %v2888 = vpop.f32.mrf.mxu0
      %v2889 = vadd.f32 0.0, %v2888
      %v2890 = vpop.f32.mrf.mxu0
      %v2891 = vpop.f32.mrf.mxu0
      %v2892 = vadd.f32 0.0, %v2891
      %v2893 = vpop.f32.mrf.mxu0
      %2894 = vmatprep.mubr.bf16.mxu0 0
      %2895 = vmatmul.mubr.bf16.gmra.mxu0 %v2073
      %v2896 = vpop.f32.mrf.mxu0
      %v2897 = vadd.f32 0.0, %v2896
      %v2898 = vpop.f32.mrf.mxu0
      %v2899 = vpop.f32.mrf.mxu0
      %v2900 = vadd.f32 0.0, %v2899
      %v2901 = vpop.f32.mrf.mxu0
      %2902 = vmatprep.mubr.bf16.mxu0 0
      %2903 = vmatmul.mubr.bf16.gmra.mxu0 %v2076
      %v2904 = vpop.f32.mrf.mxu0
      %v2905 = vadd.f32 0.0, %v2904
      %v2906 = vpop.f32.mrf.mxu0
      %v2907 = vpop.f32.mrf.mxu0
      %v2908 = vadd.f32 0.0, %v2907
      %v2909 = vpop.f32.mrf.mxu0
      %2910 = vmatprep.mubr.bf16.mxu0 0
      %2911 = vmatmul.mubr.bf16.gmra.mxu0 %v2419
      %v2912 = vpop.f32.mrf.mxu0
      %v2913 = vadd.f32 0.0, %v2912
      %v2914 = vpop.f32.mrf.mxu0
      %v2915 = vpop.f32.mrf.mxu0
      %v2916 = vadd.f32 0.0, %v2915
      %v2917 = vpop.f32.mrf.mxu0
      %2918 = vmatprep.mubr.bf16.mxu0 0
      %2919 = vmatmul.mubr.bf16.gmra.mxu0 %v2825
      %v2920 = vpop.f32.mrf.mxu0
      %v2921 = vadd.f32 0.0, %v2920
      %v2922 = vpop.f32.mrf.mxu0
      %v2923 = vpop.f32.mrf.mxu0
      %v2924 = vadd.f32 0.0, %v2923
      %v2925 = vpop.f32.mrf.mxu0
      %2926 = vdwg.mxu0
      %v2927 = vadd.f32 %v2801, %v2865
      %v2928 = vadd.f32 %v2802, %v2868
      %v2929 = vadd.f32 %v2803, %v2873
      %v2930 = vadd.f32 %v2804, %v2876
      %v2931 = vadd.f32 %v2805, %v2881
      %v2932 = vadd.f32 %v2806, %v2884
      %v2933 = vadd.f32 %v2807, %v2889
      %v2934 = vadd.f32 %v2808, %v2892
      %v2935 = vadd.f32 %v2809, %v2897
      %v2936 = vadd.f32 %v2810, %v2900
      %v2937 = vadd.f32 %v2811, %v2905
      %v2938 = vadd.f32 %v2812, %v2908
      %v2939 = vadd.f32 %v2813, %v2913
      %v2940 = vadd.f32 %v2814, %v2916
      %v2941 = vadd.f32 %v2815, %v2921
      %v2942 = vadd.f32 %v2816, %v2924
      %v2944 = vshrl.u32 %v1663, 16
      %v2946 = vrot.slane %v2944, 4
      %v2947 = vshll.u32 %v1663, 16
      %v2949 = vrot.slane %v2947, 5
      %v2950 = vor.u32 %v2946, %v2949
      %v2951 = vrot.slane %v2950, 4
      %v2953 = vshll.u32 %v1664, 16
      %v2955 = vrot.slane %v2953, 5
      %v2956 = vsel %vm1669, %v2951, %v2955
      %v2957 = vshrl.u32 %v1664, 16
      %v2959 = vrot.slane %v2957, 4
      %v2960 = vor.u32 %v2959, %v2955
      %v2961 = vrot.slane %v2960, 4
      %v2963 = vshll.u32 %v1665, 16
      %v2965 = vrot.slane %v2963, 5
      %v2966 = vsel %vm1669, %v2961, %v2965
      %s2967 = scalar_lea.vmem %s20, 14
      %v2968 = vld [vmem:[%s2967] sm:$0x3]
      %v2969 = vunpack.c.l.b16 %v2956
      %v2970 = vunpack.c.l.b16 %v2966
      %v2971 = vpack.c.b16 %v2970, %v2969
      %v2973 = vsel %vm1888, %v2971, 0
      %v2976 = vsel %vm1913, %v2968, 0
      %2978 = vmatprep.subr.bf16.mxu0 0
      %2979 = vmatpush1.bf16.msra.mxu0 0
      %2980 = vmatprep.subr.bf16.mxu0 0
      %2981 = vmatpush1.bf16.msra.mxu0 0
      %2982 = vmatprep.subr.bf16.mxu0 0
      %2983 = vmatpush1.bf16.msra.mxu0 0
      %2984 = vmatprep.subr.bf16.mxu0 0
      %2985 = vmatpush1.bf16.msra.mxu0 0
      %2986 = vmatprep.subr.bf16.mxu0 0
      %2987 = vmatpush1.bf16.msra.mxu0 0
      %2988 = vmatprep.subr.bf16.mxu0 0
      %2989 = vmatpush1.bf16.msra.mxu0 0
      %2990 = vmatprep.subr.bf16.mxu0 0
      %2991 = vmatpush1.bf16.msra.mxu0 0
      %2992 = vmatprep.subr.bf16.mxu0 0
      %2993 = vmatpush1.bf16.msra.mxu0 %v2976
      %2994 = vmatprep.subr.bf16.mxu0 0
      %2995 = vmatpush2.bf16.msra.mxu0 0
      %2996 = vmatprep.subr.bf16.mxu0 0
      %2997 = vmatpush2.bf16.msra.mxu0 0
      %2998 = vmatprep.subr.bf16.mxu0 0
      %2999 = vmatpush2.bf16.msra.mxu0 0
      %3000 = vmatprep.subr.bf16.mxu0 0
      %3001 = vmatpush2.bf16.msra.mxu0 0
      %3002 = vmatprep.subr.bf16.mxu0 0
      %3003 = vmatpush2.bf16.msra.mxu0 0
      %3004 = vmatprep.subr.bf16.mxu0 0
      %3005 = vmatpush2.bf16.msra.mxu0 0
      %3006 = vmatprep.subr.bf16.mxu0 0
      %3007 = vmatpush2.bf16.msra.mxu0 0
      %3008 = vmatprep.subr.bf16.mxu0 0
      %3009 = vmatpush2.bf16.msra.mxu0 0
      %3010 = vmatprep.mubr.bf16.mxu0 0
      %3011 = vmatmul.mubr.bf16.gmra.mxu0 %v1896
      %v3012 = vpop.f32.mrf.mxu0
      %v3013 = vadd.f32 0.0, %v3012
      %v3014 = vpop.f32.mrf.mxu0
      %v3015 = vpop.f32.mrf.mxu0
      %v3016 = vadd.f32 0.0, %v3015
      %v3017 = vpop.f32.mrf.mxu0
      %3018 = vmatprep.mubr.bf16.mxu0 0
      %3019 = vmatmul.mubr.bf16.gmra.mxu0 %v1899
      %v3020 = vpop.f32.mrf.mxu0
      %v3021 = vadd.f32 0.0, %v3020
      %v3022 = vpop.f32.mrf.mxu0
      %v3023 = vpop.f32.mrf.mxu0
      %v3024 = vadd.f32 0.0, %v3023
      %v3025 = vpop.f32.mrf.mxu0
      %3026 = vmatprep.mubr.bf16.mxu0 0
      %3027 = vmatmul.mubr.bf16.gmra.mxu0 %v1902
      %v3028 = vpop.f32.mrf.mxu0
      %v3029 = vadd.f32 0.0, %v3028
      %v3030 = vpop.f32.mrf.mxu0
      %v3031 = vpop.f32.mrf.mxu0
      %v3032 = vadd.f32 0.0, %v3031
      %v3033 = vpop.f32.mrf.mxu0
      %3034 = vmatprep.mubr.bf16.mxu0 0
      %3035 = vmatmul.mubr.bf16.gmra.mxu0 %v1905
      %v3036 = vpop.f32.mrf.mxu0
      %v3037 = vadd.f32 0.0, %v3036
      %v3038 = vpop.f32.mrf.mxu0
      %v3039 = vpop.f32.mrf.mxu0
      %v3040 = vadd.f32 0.0, %v3039
      %v3041 = vpop.f32.mrf.mxu0
      %3042 = vmatprep.mubr.bf16.mxu0 0
      %3043 = vmatmul.mubr.bf16.gmra.mxu0 %v1908
      %v3044 = vpop.f32.mrf.mxu0
      %v3045 = vadd.f32 0.0, %v3044
      %v3046 = vpop.f32.mrf.mxu0
      %v3047 = vpop.f32.mrf.mxu0
      %v3048 = vadd.f32 0.0, %v3047
      %v3049 = vpop.f32.mrf.mxu0
      %3050 = vmatprep.mubr.bf16.mxu0 0
      %3051 = vmatmul.mubr.bf16.gmra.mxu0 %v1911
      %v3052 = vpop.f32.mrf.mxu0
      %v3053 = vadd.f32 0.0, %v3052
      %v3054 = vpop.f32.mrf.mxu0
      %v3055 = vpop.f32.mrf.mxu0
      %v3056 = vadd.f32 0.0, %v3055
      %v3057 = vpop.f32.mrf.mxu0
      %3058 = vmatprep.mubr.bf16.mxu0 0
      %3059 = vmatmul.mubr.bf16.gmra.mxu0 %v2567
      %v3060 = vpop.f32.mrf.mxu0
      %v3061 = vadd.f32 0.0, %v3060
      %v3062 = vpop.f32.mrf.mxu0
      %v3063 = vpop.f32.mrf.mxu0
      %v3064 = vadd.f32 0.0, %v3063
      %v3065 = vpop.f32.mrf.mxu0
      %3066 = vmatprep.mubr.bf16.mxu0 0
      %3067 = vmatmul.mubr.bf16.gmra.mxu0 %v2973
      %v3068 = vpop.f32.mrf.mxu0
      %v3069 = vadd.f32 0.0, %v3068
      %v3070 = vpop.f32.mrf.mxu0
      %v3071 = vpop.f32.mrf.mxu0
      %v3072 = vadd.f32 0.0, %v3071
      %v3073 = vpop.f32.mrf.mxu0
      %3074 = vdwg.mxu0
      %v3075 = vadd.f32 %v2927, %v3013
      %v3076 = vadd.f32 %v2928, %v3016
      %v3077 = vadd.f32 %v2929, %v3021
      %v3078 = vadd.f32 %v2930, %v3024
      %v3079 = vadd.f32 %v2931, %v3029
      %v3080 = vadd.f32 %v2932, %v3032
      %v3081 = vadd.f32 %v2933, %v3037
      %v3082 = vadd.f32 %v2934, %v3040
      %v3083 = vadd.f32 %v2935, %v3045
      %v3084 = vadd.f32 %v2936, %v3048
      %v3085 = vadd.f32 %v2937, %v3053
      %v3086 = vadd.f32 %v2938, %v3056
      %v3087 = vadd.f32 %v2939, %v3061
      %v3088 = vadd.f32 %v2940, %v3064
      %v3089 = vadd.f32 %v2941, %v3069
      %v3090 = vadd.f32 %v2942, %v3072
      %v3092 = vrot.slane %v1663, 5
      %v3093 = vrot.slane %v3092, 4
      %v3094 = vrot.slane %v1664, 5
      %v3095 = vsel %vm2188, %v3093, %v3094
      %v3096 = vrot.slane %v3094, 4
      %v3097 = vrot.slane %v1665, 5
      %v3098 = vsel %vm2188, %v3096, %v3097
      %s3099 = scalar_lea.vmem %s20, 16
      %v3100 = vld [vmem:[%s3099] sm:$0x3]
      %v3101 = vunpack.c.l.b16 %v3095
      %v3102 = vunpack.c.l.b16 %v3098
      %v3103 = vpack.c.b16 %v3102, %v3101
      %v3105 = vsel %vm1888, %v3103, 0
      %v3108 = vsel %vm1913, %v3100, 0
      %3110 = vmatprep.subr.bf16.mxu0 0
      %3111 = vmatpush1.bf16.msra.mxu0 0
      %3112 = vmatprep.subr.bf16.mxu0 0
      %3113 = vmatpush1.bf16.msra.mxu0 0
      %3114 = vmatprep.subr.bf16.mxu0 0
      %3115 = vmatpush1.bf16.msra.mxu0 0
      %3116 = vmatprep.subr.bf16.mxu0 0
      %3117 = vmatpush1.bf16.msra.mxu0 0
      %3118 = vmatprep.subr.bf16.mxu0 0
      %3119 = vmatpush1.bf16.msra.mxu0 0
      %3120 = vmatprep.subr.bf16.mxu0 0
      %3121 = vmatpush1.bf16.msra.mxu0 0
      %3122 = vmatprep.subr.bf16.mxu0 0
      %3123 = vmatpush1.bf16.msra.mxu0 0
      %3124 = vmatprep.subr.bf16.mxu0 0
      %3125 = vmatpush1.bf16.msra.mxu0 %v3108
      %3126 = vmatprep.subr.bf16.mxu0 0
      %3127 = vmatpush2.bf16.msra.mxu0 0
      %3128 = vmatprep.subr.bf16.mxu0 0
      %3129 = vmatpush2.bf16.msra.mxu0 0
      %3130 = vmatprep.subr.bf16.mxu0 0
      %3131 = vmatpush2.bf16.msra.mxu0 0
      %3132 = vmatprep.subr.bf16.mxu0 0
      %3133 = vmatpush2.bf16.msra.mxu0 0
      %3134 = vmatprep.subr.bf16.mxu0 0
      %3135 = vmatpush2.bf16.msra.mxu0 0
      %3136 = vmatprep.subr.bf16.mxu0 0
      %3137 = vmatpush2.bf16.msra.mxu0 0
      %3138 = vmatprep.subr.bf16.mxu0 0
      %3139 = vmatpush2.bf16.msra.mxu0 0
      %3140 = vmatprep.subr.bf16.mxu0 0
      %3141 = vmatpush2.bf16.msra.mxu0 0
      %3142 = vmatprep.mubr.bf16.mxu0 0
      %3143 = vmatmul.mubr.bf16.gmra.mxu0 %v2278
      %v3144 = vpop.f32.mrf.mxu0
      %v3145 = vadd.f32 0.0, %v3144
      %v3146 = vpop.f32.mrf.mxu0
      %v3147 = vpop.f32.mrf.mxu0
      %v3148 = vadd.f32 0.0, %v3147
      %v3149 = vpop.f32.mrf.mxu0
      %3150 = vmatprep.mubr.bf16.mxu0 0
      %3151 = vmatmul.mubr.bf16.gmra.mxu0 %v2281
      %v3152 = vpop.f32.mrf.mxu0
      %v3153 = vadd.f32 0.0, %v3152
      %v3154 = vpop.f32.mrf.mxu0
      %v3155 = vpop.f32.mrf.mxu0
      %v3156 = vadd.f32 0.0, %v3155
      %v3157 = vpop.f32.mrf.mxu0
      %3158 = vmatprep.mubr.bf16.mxu0 0
      %3159 = vmatmul.mubr.bf16.gmra.mxu0 %v2284
      %v3160 = vpop.f32.mrf.mxu0
      %v3161 = vadd.f32 0.0, %v3160
      %v3162 = vpop.f32.mrf.mxu0
      %v3163 = vpop.f32.mrf.mxu0
      %v3164 = vadd.f32 0.0, %v3163
      %v3165 = vpop.f32.mrf.mxu0
      %3166 = vmatprep.mubr.bf16.mxu0 0
      %3167 = vmatmul.mubr.bf16.gmra.mxu0 %v2287
      %v3168 = vpop.f32.mrf.mxu0
      %v3169 = vadd.f32 0.0, %v3168
      %v3170 = vpop.f32.mrf.mxu0
      %v3171 = vpop.f32.mrf.mxu0
      %v3172 = vadd.f32 0.0, %v3171
      %v3173 = vpop.f32.mrf.mxu0
      %3174 = vmatprep.mubr.bf16.mxu0 0
      %3175 = vmatmul.mubr.bf16.gmra.mxu0 %v2290
      %v3176 = vpop.f32.mrf.mxu0
      %v3177 = vadd.f32 0.0, %v3176
      %v3178 = vpop.f32.mrf.mxu0
      %v3179 = vpop.f32.mrf.mxu0
      %v3180 = vadd.f32 0.0, %v3179
      %v3181 = vpop.f32.mrf.mxu0
      %3182 = vmatprep.mubr.bf16.mxu0 0
      %3183 = vmatmul.mubr.bf16.gmra.mxu0 %v2293
      %v3184 = vpop.f32.mrf.mxu0
      %v3185 = vadd.f32 0.0, %v3184
      %v3186 = vpop.f32.mrf.mxu0
      %v3187 = vpop.f32.mrf.mxu0
      %v3188 = vadd.f32 0.0, %v3187
      %v3189 = vpop.f32.mrf.mxu0
      %3190 = vmatprep.mubr.bf16.mxu0 0
      %3191 = vmatmul.mubr.bf16.gmra.mxu0 %v2699
      %v3192 = vpop.f32.mrf.mxu0
      %v3193 = vadd.f32 0.0, %v3192
      %v3194 = vpop.f32.mrf.mxu0
      %v3195 = vpop.f32.mrf.mxu0
      %v3196 = vadd.f32 0.0, %v3195
      %v3197 = vpop.f32.mrf.mxu0
      %3198 = vmatprep.mubr.bf16.mxu0 0
      %3199 = vmatmul.mubr.bf16.gmra.mxu0 %v3105
      %v3200 = vpop.f32.mrf.mxu0
      %v3201 = vadd.f32 0.0, %v3200
      %v3202 = vpop.f32.mrf.mxu0
      %v3203 = vpop.f32.mrf.mxu0
      %v3204 = vadd.f32 0.0, %v3203
      %v3205 = vpop.f32.mrf.mxu0
      %3206 = vdwg.mxu0
      %v3207 = vadd.f32 %v3075, %v3145
      %v3208 = vadd.f32 %v3076, %v3148
      %v3209 = vadd.f32 %v3077, %v3153
      %v3210 = vadd.f32 %v3078, %v3156
      %v3211 = vadd.f32 %v3079, %v3161
      %v3212 = vadd.f32 %v3080, %v3164
      %v3213 = vadd.f32 %v3081, %v3169
      %v3214 = vadd.f32 %v3082, %v3172
      %v3215 = vadd.f32 %v3083, %v3177
      %v3216 = vadd.f32 %v3084, %v3180
      %v3217 = vadd.f32 %v3085, %v3185
      %v3218 = vadd.f32 %v3086, %v3188
      %v3219 = vadd.f32 %v3087, %v3193
      %v3220 = vadd.f32 %v3088, %v3196
      %v3221 = vadd.f32 %v3089, %v3201
      %v3222 = vadd.f32 %v3090, %v3204
      %v3223 = vld [vmem:[%s1505] sm:$0xf]
      %v3224 = vld [vmem:[%s1505 + $0x4] sm:$0xf]
      %v3225 = vld [vmem:[%s1505 + $0x8] sm:$0x1]
      %v3226 = vld [vmem:[%s1517] sm:$0xf]
      %v3227 = vld [vmem:[%s1517 + $0x4] sm:$0xf]
      %v3228 = vld [vmem:[%s1517 + $0x8] sm:$0x1]
      %v3229 = vld [vmem:[%s1530] sm:$0xf]
      %v3230 = vld [vmem:[%s1530 + $0x4] sm:$0xf]
      %v3231 = vld [vmem:[%s1530 + $0x8] sm:$0x1]
      %v3232 = vld [vmem:[%s1543] sm:$0xf]
      %v3233 = vld [vmem:[%s1543 + $0x4] sm:$0xf]
      %v3234 = vld [vmem:[%s1543 + $0x8] sm:$0x1]
      %v3235 = vld [vmem:[%s1556] sm:$0xf]
      %v3236 = vld [vmem:[%s1556 + $0x4] sm:$0xf]
      %v3237 = vld [vmem:[%s1556 + $0x8] sm:$0x1]
      %v3238 = vld [vmem:[%s1569] sm:$0xf]
      %v3239 = vld [vmem:[%s1569 + $0x4] sm:$0xf]
      %v3240 = vld [vmem:[%s1569 + $0x8] sm:$0x1]
      %v3241 = vld [vmem:[%s1582] sm:$0xf]
      %v3242 = vld [vmem:[%s1582 + $0x4] sm:$0xf]
      %v3243 = vld [vmem:[%s1582 + $0x8] sm:$0x1]
      %v3244 = vld [vmem:[%s1595] sm:$0xf]
      %v3245 = vld [vmem:[%s1595 + $0x4] sm:$0xf]
      %v3246 = vld [vmem:[%s1595 + $0x8] sm:$0x1]
      %v3247 = vld [vmem:[%s1608] sm:$0xf]
      %v3248 = vld [vmem:[%s1608 + $0x4] sm:$0xf]
      %v3249 = vld [vmem:[%s1608 + $0x8] sm:$0x1]
      %v3250 = vld [vmem:[%s1621] sm:$0xf]
      %v3251 = vld [vmem:[%s1621 + $0x4] sm:$0xf]
      %v3252 = vld [vmem:[%s1621 + $0x8] sm:$0x1]
      %s3253 = scalar_lea.vmem %s20, 18
      %v3254 = vld [vmem:[%s3253] sm:$0x3]
      %v3271 = vunpack.c.l.b16 %v3223
      %v3272 = vunpack.c.l.b16 %v3224
      %v3273 = vunpack.c.l.b16 %v3226
      %v3274 = vunpack.c.l.b16 %v3227
      %v3275 = vunpack.c.l.b16 %v3229
      %v3276 = vunpack.c.l.b16 %v3230
      %v3277 = vunpack.c.l.b16 %v3232
      %v3278 = vunpack.c.l.b16 %v3233
      %v3279 = vunpack.c.l.b16 %v3235
      %v3280 = vunpack.c.l.b16 %v3236
      %v3281 = vunpack.c.l.b16 %v3238
      %v3282 = vunpack.c.l.b16 %v3239
      %v3283 = vunpack.c.l.b16 %v3241
      %v3284 = vunpack.c.l.b16 %v3242
      %v3285 = vunpack.c.l.b16 %v3244
      %v3286 = vunpack.c.l.b16 %v3245
      %v3287 = vpack.c.b16 %v3272, %v3271
      %v3288 = vpack.c.b16 %v3274, %v3273
      %v3289 = vpack.c.b16 %v3276, %v3275
      %v3290 = vpack.c.b16 %v3278, %v3277
      %v3291 = vpack.c.b16 %v3280, %v3279
      %v3292 = vpack.c.b16 %v3282, %v3281
      %v3293 = vpack.c.b16 %v3284, %v3283
      %v3294 = vpack.c.b16 %v3286, %v3285
      %v3296 = vsel %vm1888, %v3287, 0
      %v3299 = vsel %vm1888, %v3288, 0
      %v3302 = vsel %vm1888, %v3289, 0
      %v3305 = vsel %vm1888, %v3290, 0
      %v3308 = vsel %vm1888, %v3291, 0
      %v3311 = vsel %vm1888, %v3292, 0
      %v3314 = vsel %vm1888, %v3293, 0
      %v3317 = vsel %vm1888, %v3294, 0
      %v3320 = vsel %vm1913, %v3254, 0
      %3322 = vmatprep.subr.bf16.mxu0 0
      %3323 = vmatpush1.bf16.msra.mxu0 0
      %3324 = vmatprep.subr.bf16.mxu0 0
      %3325 = vmatpush1.bf16.msra.mxu0 0
      %3326 = vmatprep.subr.bf16.mxu0 0
      %3327 = vmatpush1.bf16.msra.mxu0 0
      %3328 = vmatprep.subr.bf16.mxu0 0
      %3329 = vmatpush1.bf16.msra.mxu0 0
      %3330 = vmatprep.subr.bf16.mxu0 0
      %3331 = vmatpush1.bf16.msra.mxu0 0
      %3332 = vmatprep.subr.bf16.mxu0 0
      %3333 = vmatpush1.bf16.msra.mxu0 0
      %3334 = vmatprep.subr.bf16.mxu0 0
      %3335 = vmatpush1.bf16.msra.mxu0 0
      %3336 = vmatprep.subr.bf16.mxu0 0
      %3337 = vmatpush1.bf16.msra.mxu0 %v3320
      %3338 = vmatprep.subr.bf16.mxu0 0
      %3339 = vmatpush2.bf16.msra.mxu0 0
      %3340 = vmatprep.subr.bf16.mxu0 0
      %3341 = vmatpush2.bf16.msra.mxu0 0
      %3342 = vmatprep.subr.bf16.mxu0 0
      %3343 = vmatpush2.bf16.msra.mxu0 0
      %3344 = vmatprep.subr.bf16.mxu0 0
      %3345 = vmatpush2.bf16.msra.mxu0 0
      %3346 = vmatprep.subr.bf16.mxu0 0
      %3347 = vmatpush2.bf16.msra.mxu0 0
      %3348 = vmatprep.subr.bf16.mxu0 0
      %3349 = vmatpush2.bf16.msra.mxu0 0
      %3350 = vmatprep.subr.bf16.mxu0 0
      %3351 = vmatpush2.bf16.msra.mxu0 0
      %3352 = vmatprep.subr.bf16.mxu0 0
      %3353 = vmatpush2.bf16.msra.mxu0 0
      %3354 = vmatprep.mubr.bf16.mxu0 0
      %3355 = vmatmul.mubr.bf16.gmra.mxu0 %v3296
      %v3356 = vpop.f32.mrf.mxu0
      %v3357 = vadd.f32 0.0, %v3356
      %v3358 = vpop.f32.mrf.mxu0
      %v3359 = vpop.f32.mrf.mxu0
      %v3360 = vadd.f32 0.0, %v3359
      %v3361 = vpop.f32.mrf.mxu0
      %3362 = vmatprep.mubr.bf16.mxu0 0
      %3363 = vmatmul.mubr.bf16.gmra.mxu0 %v3299
      %v3364 = vpop.f32.mrf.mxu0
      %v3365 = vadd.f32 0.0, %v3364
      %v3366 = vpop.f32.mrf.mxu0
      %v3367 = vpop.f32.mrf.mxu0
      %v3368 = vadd.f32 0.0, %v3367
      %v3369 = vpop.f32.mrf.mxu0
      %3370 = vmatprep.mubr.bf16.mxu0 0
      %3371 = vmatmul.mubr.bf16.gmra.mxu0 %v3302
      %v3372 = vpop.f32.mrf.mxu0
      %v3373 = vadd.f32 0.0, %v3372
      %v3374 = vpop.f32.mrf.mxu0
      %v3375 = vpop.f32.mrf.mxu0
      %v3376 = vadd.f32 0.0, %v3375
      %v3377 = vpop.f32.mrf.mxu0
      %3378 = vmatprep.mubr.bf16.mxu0 0
      %3379 = vmatmul.mubr.bf16.gmra.mxu0 %v3305
      %v3380 = vpop.f32.mrf.mxu0
      %v3381 = vadd.f32 0.0, %v3380
      %v3382 = vpop.f32.mrf.mxu0
      %v3383 = vpop.f32.mrf.mxu0
      %v3384 = vadd.f32 0.0, %v3383
      %v3385 = vpop.f32.mrf.mxu0
      %3386 = vmatprep.mubr.bf16.mxu0 0
      %3387 = vmatmul.mubr.bf16.gmra.mxu0 %v3308
      %v3388 = vpop.f32.mrf.mxu0
      %v3389 = vadd.f32 0.0, %v3388
      %v3390 = vpop.f32.mrf.mxu0
      %v3391 = vpop.f32.mrf.mxu0
      %v3392 = vadd.f32 0.0, %v3391
      %v3393 = vpop.f32.mrf.mxu0
      %3394 = vmatprep.mubr.bf16.mxu0 0
      %3395 = vmatmul.mubr.bf16.gmra.mxu0 %v3311
      %v3396 = vpop.f32.mrf.mxu0
      %v3397 = vadd.f32 0.0, %v3396
      %v3398 = vpop.f32.mrf.mxu0
      %v3399 = vpop.f32.mrf.mxu0
      %v3400 = vadd.f32 0.0, %v3399
      %v3401 = vpop.f32.mrf.mxu0
      %3402 = vmatprep.mubr.bf16.mxu0 0
      %3403 = vmatmul.mubr.bf16.gmra.mxu0 %v3314
      %v3404 = vpop.f32.mrf.mxu0
      %v3405 = vadd.f32 0.0, %v3404
      %v3406 = vpop.f32.mrf.mxu0
      %v3407 = vpop.f32.mrf.mxu0
      %v3408 = vadd.f32 0.0, %v3407
      %v3409 = vpop.f32.mrf.mxu0
      %3410 = vmatprep.mubr.bf16.mxu0 0
      %3411 = vmatmul.mubr.bf16.gmra.mxu0 %v3317
      %v3412 = vpop.f32.mrf.mxu0
      %v3413 = vadd.f32 0.0, %v3412
      %v3414 = vpop.f32.mrf.mxu0
      %v3415 = vpop.f32.mrf.mxu0
      %v3416 = vadd.f32 0.0, %v3415
      %v3417 = vpop.f32.mrf.mxu0
      %3418 = vdwg.mxu0
      %v3419 = vadd.f32 %v3207, %v3357
      %v3420 = vadd.f32 %v3208, %v3360
      %v3421 = vadd.f32 %v3209, %v3365
      %v3422 = vadd.f32 %v3210, %v3368
      %v3423 = vadd.f32 %v3211, %v3373
      %v3424 = vadd.f32 %v3212, %v3376
      %v3425 = vadd.f32 %v3213, %v3381
      %v3426 = vadd.f32 %v3214, %v3384
      %v3427 = vadd.f32 %v3215, %v3389
      %v3428 = vadd.f32 %v3216, %v3392
      %v3429 = vadd.f32 %v3217, %v3397
      %v3430 = vadd.f32 %v3218, %v3400
      %v3431 = vadd.f32 %v3219, %v3405
      %v3432 = vadd.f32 %v3220, %v3408
      %v3433 = vadd.f32 %v3221, %v3413
      %v3434 = vadd.f32 %v3222, %v3416
      %v3436 = vshrl.u32 %v3223, 16
      %v3438 = vrot.slane %v3436, 4
      %v3439 = vshll.u32 %v3223, 16
      %v3441 = vrot.slane %v3439, 5
      %v3442 = vor.u32 %v3438, %v3441
      %v3443 = vrot.slane %v3442, 4
      %v3445 = vshll.u32 %v3224, 16
      %v3447 = vrot.slane %v3445, 5
      %v3448 = vsel %vm1669, %v3443, %v3447
      %v3449 = vshrl.u32 %v3224, 16
      %v3451 = vrot.slane %v3449, 4
      %v3452 = vor.u32 %v3451, %v3447
      %v3453 = vrot.slane %v3452, 4
      %v3455 = vshll.u32 %v3225, 16
      %v3457 = vrot.slane %v3455, 5
      %v3458 = vsel %vm1669, %v3453, %v3457
      %v3460 = vshrl.u32 %v3226, 16
      %v3462 = vrot.slane %v3460, 4
      %v3463 = vshll.u32 %v3226, 16
      %v3465 = vrot.slane %v3463, 5
      %v3466 = vor.u32 %v3462, %v3465
      %v3467 = vrot.slane %v3466, 4
      %v3469 = vshll.u32 %v3227, 16
      %v3471 = vrot.slane %v3469, 5
      %v3472 = vsel %vm1669, %v3467, %v3471
      %v3473 = vshrl.u32 %v3227, 16
      %v3475 = vrot.slane %v3473, 4
      %v3476 = vor.u32 %v3475, %v3471
      %v3477 = vrot.slane %v3476, 4
      %v3479 = vshll.u32 %v3228, 16
      %v3481 = vrot.slane %v3479, 5
      %v3482 = vsel %vm1669, %v3477, %v3481
      %v3484 = vshrl.u32 %v3229, 16
      %v3486 = vrot.slane %v3484, 4
      %v3487 = vshll.u32 %v3229, 16
      %v3489 = vrot.slane %v3487, 5
      %v3490 = vor.u32 %v3486, %v3489
      %v3491 = vrot.slane %v3490, 4
      %v3493 = vshll.u32 %v3230, 16
      %v3495 = vrot.slane %v3493, 5
      %v3496 = vsel %vm1669, %v3491, %v3495
      %v3497 = vshrl.u32 %v3230, 16
      %v3499 = vrot.slane %v3497, 4
      %v3500 = vor.u32 %v3499, %v3495
      %v3501 = vrot.slane %v3500, 4
      %v3503 = vshll.u32 %v3231, 16
      %v3505 = vrot.slane %v3503, 5
      %v3506 = vsel %vm1669, %v3501, %v3505
      %v3508 = vshrl.u32 %v3232, 16
      %v3510 = vrot.slane %v3508, 4
      %v3511 = vshll.u32 %v3232, 16
      %v3513 = vrot.slane %v3511, 5
      %v3514 = vor.u32 %v3510, %v3513
      %v3515 = vrot.slane %v3514, 4
      %v3517 = vshll.u32 %v3233, 16
      %v3519 = vrot.slane %v3517, 5
      %v3520 = vsel %vm1669, %v3515, %v3519
      %v3521 = vshrl.u32 %v3233, 16
      %v3523 = vrot.slane %v3521, 4
      %v3524 = vor.u32 %v3523, %v3519
      %v3525 = vrot.slane %v3524, 4
      %v3527 = vshll.u32 %v3234, 16
      %v3529 = vrot.slane %v3527, 5
      %v3530 = vsel %vm1669, %v3525, %v3529
      %v3532 = vshrl.u32 %v3235, 16
      %v3534 = vrot.slane %v3532, 4
      %v3535 = vshll.u32 %v3235, 16
      %v3537 = vrot.slane %v3535, 5
      %v3538 = vor.u32 %v3534, %v3537
      %v3539 = vrot.slane %v3538, 4
      %v3541 = vshll.u32 %v3236, 16
      %v3543 = vrot.slane %v3541, 5
      %v3544 = vsel %vm1669, %v3539, %v3543
      %v3545 = vshrl.u32 %v3236, 16
      %v3547 = vrot.slane %v3545, 4
      %v3548 = vor.u32 %v3547, %v3543
      %v3549 = vrot.slane %v3548, 4
      %v3551 = vshll.u32 %v3237, 16
      %v3553 = vrot.slane %v3551, 5
      %v3554 = vsel %vm1669, %v3549, %v3553
      %v3556 = vshrl.u32 %v3238, 16
      %v3558 = vrot.slane %v3556, 4
      %v3559 = vshll.u32 %v3238, 16
      %v3561 = vrot.slane %v3559, 5
      %v3562 = vor.u32 %v3558, %v3561
      %v3563 = vrot.slane %v3562, 4
      %v3565 = vshll.u32 %v3239, 16
      %v3567 = vrot.slane %v3565, 5
      %v3568 = vsel %vm1669, %v3563, %v3567
      %v3569 = vshrl.u32 %v3239, 16
      %v3571 = vrot.slane %v3569, 4
      %v3572 = vor.u32 %v3571, %v3567
      %v3573 = vrot.slane %v3572, 4
      %v3575 = vshll.u32 %v3240, 16
      %v3577 = vrot.slane %v3575, 5
      %v3578 = vsel %vm1669, %v3573, %v3577
      %v3580 = vshrl.u32 %v3241, 16
      %v3582 = vrot.slane %v3580, 4
      %v3583 = vshll.u32 %v3241, 16
      %v3585 = vrot.slane %v3583, 5
      %v3586 = vor.u32 %v3582, %v3585
      %v3587 = vrot.slane %v3586, 4
      %v3589 = vshll.u32 %v3242, 16
      %v3591 = vrot.slane %v3589, 5
      %v3592 = vsel %vm1669, %v3587, %v3591
      %v3593 = vshrl.u32 %v3242, 16
      %v3595 = vrot.slane %v3593, 4
      %v3596 = vor.u32 %v3595, %v3591
      %v3597 = vrot.slane %v3596, 4
      %v3599 = vshll.u32 %v3243, 16
      %v3601 = vrot.slane %v3599, 5
      %v3602 = vsel %vm1669, %v3597, %v3601
      %v3604 = vshrl.u32 %v3244, 16
      %v3606 = vrot.slane %v3604, 4
      %v3607 = vshll.u32 %v3244, 16
      %v3609 = vrot.slane %v3607, 5
      %v3610 = vor.u32 %v3606, %v3609
      %v3611 = vrot.slane %v3610, 4
      %v3613 = vshll.u32 %v3245, 16
      %v3615 = vrot.slane %v3613, 5
      %v3616 = vsel %vm1669, %v3611, %v3615
      %v3617 = vshrl.u32 %v3245, 16
      %v3619 = vrot.slane %v3617, 4
      %v3620 = vor.u32 %v3619, %v3615
      %v3621 = vrot.slane %v3620, 4
      %v3623 = vshll.u32 %v3246, 16
      %v3625 = vrot.slane %v3623, 5
      %v3626 = vsel %vm1669, %v3621, %v3625
      %s3627 = scalar_lea.vmem %s20, 20
      %v3628 = vld [vmem:[%s3627] sm:$0x3]
      %v3629 = vunpack.c.l.b16 %v3448
      %v3630 = vunpack.c.l.b16 %v3458
      %v3631 = vunpack.c.l.b16 %v3472
      %v3632 = vunpack.c.l.b16 %v3482
      %v3633 = vunpack.c.l.b16 %v3496
      %v3634 = vunpack.c.l.b16 %v3506
      %v3635 = vunpack.c.l.b16 %v3520
      %v3636 = vunpack.c.l.b16 %v3530
      %v3637 = vunpack.c.l.b16 %v3544
      %v3638 = vunpack.c.l.b16 %v3554
      %v3639 = vunpack.c.l.b16 %v3568
      %v3640 = vunpack.c.l.b16 %v3578
      %v3641 = vunpack.c.l.b16 %v3592
      %v3642 = vunpack.c.l.b16 %v3602
      %v3643 = vunpack.c.l.b16 %v3616
      %v3644 = vunpack.c.l.b16 %v3626
      %v3645 = vpack.c.b16 %v3630, %v3629
      %v3646 = vpack.c.b16 %v3632, %v3631
      %v3647 = vpack.c.b16 %v3634, %v3633
      %v3648 = vpack.c.b16 %v3636, %v3635
      %v3649 = vpack.c.b16 %v3638, %v3637
      %v3650 = vpack.c.b16 %v3640, %v3639
      %v3651 = vpack.c.b16 %v3642, %v3641
      %v3652 = vpack.c.b16 %v3644, %v3643
      %v3654 = vsel %vm1888, %v3645, 0
      %v3657 = vsel %vm1888, %v3646, 0
      %v3660 = vsel %vm1888, %v3647, 0
      %v3663 = vsel %vm1888, %v3648, 0
      %v3666 = vsel %vm1888, %v3649, 0
      %v3669 = vsel %vm1888, %v3650, 0
      %v3672 = vsel %vm1888, %v3651, 0
      %v3675 = vsel %vm1888, %v3652, 0
      %v3678 = vsel %vm1913, %v3628, 0
      %3680 = vmatprep.subr.bf16.mxu0 0
      %3681 = vmatpush1.bf16.msra.mxu0 0
      %3682 = vmatprep.subr.bf16.mxu0 0
      %3683 = vmatpush1.bf16.msra.mxu0 0
      %3684 = vmatprep.subr.bf16.mxu0 0
      %3685 = vmatpush1.bf16.msra.mxu0 0
      %3686 = vmatprep.subr.bf16.mxu0 0
      %3687 = vmatpush1.bf16.msra.mxu0 0
      %3688 = vmatprep.subr.bf16.mxu0 0
      %3689 = vmatpush1.bf16.msra.mxu0 0
      %3690 = vmatprep.subr.bf16.mxu0 0
      %3691 = vmatpush1.bf16.msra.mxu0 0
      %3692 = vmatprep.subr.bf16.mxu0 0
      %3693 = vmatpush1.bf16.msra.mxu0 0
      %3694 = vmatprep.subr.bf16.mxu0 0
      %3695 = vmatpush1.bf16.msra.mxu0 %v3678
      %3696 = vmatprep.subr.bf16.mxu0 0
      %3697 = vmatpush2.bf16.msra.mxu0 0
      %3698 = vmatprep.subr.bf16.mxu0 0
      %3699 = vmatpush2.bf16.msra.mxu0 0
      %3700 = vmatprep.subr.bf16.mxu0 0
      %3701 = vmatpush2.bf16.msra.mxu0 0
      %3702 = vmatprep.subr.bf16.mxu0 0
      %3703 = vmatpush2.bf16.msra.mxu0 0
      %3704 = vmatprep.subr.bf16.mxu0 0
      %3705 = vmatpush2.bf16.msra.mxu0 0
      %3706 = vmatprep.subr.bf16.mxu0 0
      %3707 = vmatpush2.bf16.msra.mxu0 0
      %3708 = vmatprep.subr.bf16.mxu0 0
      %3709 = vmatpush2.bf16.msra.mxu0 0
      %3710 = vmatprep.subr.bf16.mxu0 0
      %3711 = vmatpush2.bf16.msra.mxu0 0
      %3712 = vmatprep.mubr.bf16.mxu0 0
      %3713 = vmatmul.mubr.bf16.gmra.mxu0 %v3654
      %v3714 = vpop.f32.mrf.mxu0
      %v3715 = vadd.f32 0.0, %v3714
      %v3716 = vpop.f32.mrf.mxu0
      %v3717 = vpop.f32.mrf.mxu0
      %v3718 = vadd.f32 0.0, %v3717
      %v3719 = vpop.f32.mrf.mxu0
      %3720 = vmatprep.mubr.bf16.mxu0 0
      %3721 = vmatmul.mubr.bf16.gmra.mxu0 %v3657
      %v3722 = vpop.f32.mrf.mxu0
      %v3723 = vadd.f32 0.0, %v3722
      %v3724 = vpop.f32.mrf.mxu0
      %v3725 = vpop.f32.mrf.mxu0
      %v3726 = vadd.f32 0.0, %v3725
      %v3727 = vpop.f32.mrf.mxu0
      %3728 = vmatprep.mubr.bf16.mxu0 0
      %3729 = vmatmul.mubr.bf16.gmra.mxu0 %v3660
      %v3730 = vpop.f32.mrf.mxu0
      %v3731 = vadd.f32 0.0, %v3730
      %v3732 = vpop.f32.mrf.mxu0
      %v3733 = vpop.f32.mrf.mxu0
      %v3734 = vadd.f32 0.0, %v3733
      %v3735 = vpop.f32.mrf.mxu0
      %3736 = vmatprep.mubr.bf16.mxu0 0
      %3737 = vmatmul.mubr.bf16.gmra.mxu0 %v3663
      %v3738 = vpop.f32.mrf.mxu0
      %v3739 = vadd.f32 0.0, %v3738
      %v3740 = vpop.f32.mrf.mxu0
      %v3741 = vpop.f32.mrf.mxu0
      %v3742 = vadd.f32 0.0, %v3741
      %v3743 = vpop.f32.mrf.mxu0
      %3744 = vmatprep.mubr.bf16.mxu0 0
      %3745 = vmatmul.mubr.bf16.gmra.mxu0 %v3666
      %v3746 = vpop.f32.mrf.mxu0
      %v3747 = vadd.f32 0.0, %v3746
      %v3748 = vpop.f32.mrf.mxu0
      %v3749 = vpop.f32.mrf.mxu0
      %v3750 = vadd.f32 0.0, %v3749
      %v3751 = vpop.f32.mrf.mxu0
      %3752 = vmatprep.mubr.bf16.mxu0 0
      %3753 = vmatmul.mubr.bf16.gmra.mxu0 %v3669
      %v3754 = vpop.f32.mrf.mxu0
      %v3755 = vadd.f32 0.0, %v3754
      %v3756 = vpop.f32.mrf.mxu0
      %v3757 = vpop.f32.mrf.mxu0
      %v3758 = vadd.f32 0.0, %v3757
      %v3759 = vpop.f32.mrf.mxu0
      %3760 = vmatprep.mubr.bf16.mxu0 0
      %3761 = vmatmul.mubr.bf16.gmra.mxu0 %v3672
      %v3762 = vpop.f32.mrf.mxu0
      %v3763 = vadd.f32 0.0, %v3762
      %v3764 = vpop.f32.mrf.mxu0
      %v3765 = vpop.f32.mrf.mxu0
      %v3766 = vadd.f32 0.0, %v3765
      %v3767 = vpop.f32.mrf.mxu0
      %3768 = vmatprep.mubr.bf16.mxu0 0
      %3769 = vmatmul.mubr.bf16.gmra.mxu0 %v3675
      %v3770 = vpop.f32.mrf.mxu0
      %v3771 = vadd.f32 0.0, %v3770
      %v3772 = vpop.f32.mrf.mxu0
      %v3773 = vpop.f32.mrf.mxu0
      %v3774 = vadd.f32 0.0, %v3773
      %v3775 = vpop.f32.mrf.mxu0
      %3776 = vdwg.mxu0
      %v3777 = vadd.f32 %v3419, %v3715
      %v3778 = vadd.f32 %v3420, %v3718
      %v3779 = vadd.f32 %v3421, %v3723
      %v3780 = vadd.f32 %v3422, %v3726
      %v3781 = vadd.f32 %v3423, %v3731
      %v3782 = vadd.f32 %v3424, %v3734
      %v3783 = vadd.f32 %v3425, %v3739
      %v3784 = vadd.f32 %v3426, %v3742
      %v3785 = vadd.f32 %v3427, %v3747
      %v3786 = vadd.f32 %v3428, %v3750
      %v3787 = vadd.f32 %v3429, %v3755
      %v3788 = vadd.f32 %v3430, %v3758
      %v3789 = vadd.f32 %v3431, %v3763
      %v3790 = vadd.f32 %v3432, %v3766
      %v3791 = vadd.f32 %v3433, %v3771
      %v3792 = vadd.f32 %v3434, %v3774
      %v3801 = vrot.slane %v3223, 5
      %v3802 = vrot.slane %v3801, 4
      %v3803 = vrot.slane %v3224, 5
      %v3804 = vsel %vm2188, %v3802, %v3803
      %v3805 = vrot.slane %v3803, 4
      %v3806 = vrot.slane %v3225, 5
      %v3807 = vsel %vm2188, %v3805, %v3806
      %v3808 = vrot.slane %v3226, 5
      %v3809 = vrot.slane %v3808, 4
      %v3810 = vrot.slane %v3227, 5
      %v3811 = vsel %vm2188, %v3809, %v3810
      %v3812 = vrot.slane %v3810, 4
      %v3813 = vrot.slane %v3228, 5
      %v3814 = vsel %vm2188, %v3812, %v3813
      %v3815 = vrot.slane %v3229, 5
      %v3816 = vrot.slane %v3815, 4
      %v3817 = vrot.slane %v3230, 5
      %v3818 = vsel %vm2188, %v3816, %v3817
      %v3819 = vrot.slane %v3817, 4
      %v3820 = vrot.slane %v3231, 5
      %v3821 = vsel %vm2188, %v3819, %v3820
      %v3822 = vrot.slane %v3232, 5
      %v3823 = vrot.slane %v3822, 4
      %v3824 = vrot.slane %v3233, 5
      %v3825 = vsel %vm2188, %v3823, %v3824
      %v3826 = vrot.slane %v3824, 4
      %v3827 = vrot.slane %v3234, 5
      %v3828 = vsel %vm2188, %v3826, %v3827
      %v3829 = vrot.slane %v3235, 5
      %v3830 = vrot.slane %v3829, 4
      %v3831 = vrot.slane %v3236, 5
      %v3832 = vsel %vm2188, %v3830, %v3831
      %v3833 = vrot.slane %v3831, 4
      %v3834 = vrot.slane %v3237, 5
      %v3835 = vsel %vm2188, %v3833, %v3834
      %v3836 = vrot.slane %v3238, 5
      %v3837 = vrot.slane %v3836, 4
      %v3838 = vrot.slane %v3239, 5
      %v3839 = vsel %vm2188, %v3837, %v3838
      %v3840 = vrot.slane %v3838, 4
      %v3841 = vrot.slane %v3240, 5
      %v3842 = vsel %vm2188, %v3840, %v3841
      %v3843 = vrot.slane %v3241, 5
      %v3844 = vrot.slane %v3843, 4
      %v3845 = vrot.slane %v3242, 5
      %v3846 = vsel %vm2188, %v3844, %v3845
      %v3847 = vrot.slane %v3845, 4
      %v3848 = vrot.slane %v3243, 5
      %v3849 = vsel %vm2188, %v3847, %v3848
      %v3850 = vrot.slane %v3244, 5
      %v3851 = vrot.slane %v3850, 4
      %v3852 = vrot.slane %v3245, 5
      %v3853 = vsel %vm2188, %v3851, %v3852
      %v3854 = vrot.slane %v3852, 4
      %v3855 = vrot.slane %v3246, 5
      %v3856 = vsel %vm2188, %v3854, %v3855
      %s3857 = scalar_lea.vmem %s20, 22
      %v3858 = vld [vmem:[%s3857] sm:$0x3]
      %v3859 = vunpack.c.l.b16 %v3804
      %v3860 = vunpack.c.l.b16 %v3807
      %v3861 = vunpack.c.l.b16 %v3811
      %v3862 = vunpack.c.l.b16 %v3814
      %v3863 = vunpack.c.l.b16 %v3818
      %v3864 = vunpack.c.l.b16 %v3821
      %v3865 = vunpack.c.l.b16 %v3825
      %v3866 = vunpack.c.l.b16 %v3828
      %v3867 = vunpack.c.l.b16 %v3832
      %v3868 = vunpack.c.l.b16 %v3835
      %v3869 = vunpack.c.l.b16 %v3839
      %v3870 = vunpack.c.l.b16 %v3842
      %v3871 = vunpack.c.l.b16 %v3846
      %v3872 = vunpack.c.l.b16 %v3849
      %v3873 = vunpack.c.l.b16 %v3853
      %v3874 = vunpack.c.l.b16 %v3856
      %v3875 = vpack.c.b16 %v3860, %v3859
      %v3876 = vpack.c.b16 %v3862, %v3861
      %v3877 = vpack.c.b16 %v3864, %v3863
      %v3878 = vpack.c.b16 %v3866, %v3865
      %v3879 = vpack.c.b16 %v3868, %v3867
      %v3880 = vpack.c.b16 %v3870, %v3869
      %v3881 = vpack.c.b16 %v3872, %v3871
      %v3882 = vpack.c.b16 %v3874, %v3873
      %v3884 = vsel %vm1888, %v3875, 0
      %v3887 = vsel %vm1888, %v3876, 0
      %v3890 = vsel %vm1888, %v3877, 0
      %v3893 = vsel %vm1888, %v3878, 0
      %v3896 = vsel %vm1888, %v3879, 0
      %v3899 = vsel %vm1888, %v3880, 0
      %v3902 = vsel %vm1888, %v3881, 0
      %v3905 = vsel %vm1888, %v3882, 0
      %v3908 = vsel %vm1913, %v3858, 0
      %3910 = vmatprep.subr.bf16.mxu0 0
      %3911 = vmatpush1.bf16.msra.mxu0 0
      %3912 = vmatprep.subr.bf16.mxu0 0
      %3913 = vmatpush1.bf16.msra.mxu0 0
      %3914 = vmatprep.subr.bf16.mxu0 0
      %3915 = vmatpush1.bf16.msra.mxu0 0
      %3916 = vmatprep.subr.bf16.mxu0 0
      %3917 = vmatpush1.bf16.msra.mxu0 0
      %3918 = vmatprep.subr.bf16.mxu0 0
      %3919 = vmatpush1.bf16.msra.mxu0 0
      %3920 = vmatprep.subr.bf16.mxu0 0
      %3921 = vmatpush1.bf16.msra.mxu0 0
      %3922 = vmatprep.subr.bf16.mxu0 0
      %3923 = vmatpush1.bf16.msra.mxu0 0
      %3924 = vmatprep.subr.bf16.mxu0 0
      %3925 = vmatpush1.bf16.msra.mxu0 %v3908
      %3926 = vmatprep.subr.bf16.mxu0 0
      %3927 = vmatpush2.bf16.msra.mxu0 0
      %3928 = vmatprep.subr.bf16.mxu0 0
      %3929 = vmatpush2.bf16.msra.mxu0 0
      %3930 = vmatprep.subr.bf16.mxu0 0
      %3931 = vmatpush2.bf16.msra.mxu0 0
      %3932 = vmatprep.subr.bf16.mxu0 0
      %3933 = vmatpush2.bf16.msra.mxu0 0
      %3934 = vmatprep.subr.bf16.mxu0 0
      %3935 = vmatpush2.bf16.msra.mxu0 0
      %3936 = vmatprep.subr.bf16.mxu0 0
      %3937 = vmatpush2.bf16.msra.mxu0 0
      %3938 = vmatprep.subr.bf16.mxu0 0
      %3939 = vmatpush2.bf16.msra.mxu0 0
      %3940 = vmatprep.subr.bf16.mxu0 0
      %3941 = vmatpush2.bf16.msra.mxu0 0
      %3942 = vmatprep.mubr.bf16.mxu0 0
      %3943 = vmatmul.mubr.bf16.gmra.mxu0 %v3884
      %v3944 = vpop.f32.mrf.mxu0
      %v3945 = vadd.f32 0.0, %v3944
      %v3946 = vpop.f32.mrf.mxu0
      %v3947 = vpop.f32.mrf.mxu0
      %v3948 = vadd.f32 0.0, %v3947
      %v3949 = vpop.f32.mrf.mxu0
      %3950 = vmatprep.mubr.bf16.mxu0 0
      %3951 = vmatmul.mubr.bf16.gmra.mxu0 %v3887
      %v3952 = vpop.f32.mrf.mxu0
      %v3953 = vadd.f32 0.0, %v3952
      %v3954 = vpop.f32.mrf.mxu0
      %v3955 = vpop.f32.mrf.mxu0
      %v3956 = vadd.f32 0.0, %v3955
      %v3957 = vpop.f32.mrf.mxu0
      %3958 = vmatprep.mubr.bf16.mxu0 0
      %3959 = vmatmul.mubr.bf16.gmra.mxu0 %v3890
      %v3960 = vpop.f32.mrf.mxu0
      %v3961 = vadd.f32 0.0, %v3960
      %v3962 = vpop.f32.mrf.mxu0
      %v3963 = vpop.f32.mrf.mxu0
      %v3964 = vadd.f32 0.0, %v3963
      %v3965 = vpop.f32.mrf.mxu0
      %3966 = vmatprep.mubr.bf16.mxu0 0
      %3967 = vmatmul.mubr.bf16.gmra.mxu0 %v3893
      %v3968 = vpop.f32.mrf.mxu0
      %v3969 = vadd.f32 0.0, %v3968
      %v3970 = vpop.f32.mrf.mxu0
      %v3971 = vpop.f32.mrf.mxu0
      %v3972 = vadd.f32 0.0, %v3971
      %v3973 = vpop.f32.mrf.mxu0
      %3974 = vmatprep.mubr.bf16.mxu0 0
      %3975 = vmatmul.mubr.bf16.gmra.mxu0 %v3896
      %v3976 = vpop.f32.mrf.mxu0
      %v3977 = vadd.f32 0.0, %v3976
      %v3978 = vpop.f32.mrf.mxu0
      %v3979 = vpop.f32.mrf.mxu0
      %v3980 = vadd.f32 0.0, %v3979
      %v3981 = vpop.f32.mrf.mxu0
      %3982 = vmatprep.mubr.bf16.mxu0 0
      %3983 = vmatmul.mubr.bf16.gmra.mxu0 %v3899
      %v3984 = vpop.f32.mrf.mxu0
      %v3985 = vadd.f32 0.0, %v3984
      %v3986 = vpop.f32.mrf.mxu0
      %v3987 = vpop.f32.mrf.mxu0
      %v3988 = vadd.f32 0.0, %v3987
      %v3989 = vpop.f32.mrf.mxu0
      %3990 = vmatprep.mubr.bf16.mxu0 0
      %3991 = vmatmul.mubr.bf16.gmra.mxu0 %v3902
      %v3992 = vpop.f32.mrf.mxu0
      %v3993 = vadd.f32 0.0, %v3992
      %v3994 = vpop.f32.mrf.mxu0
      %v3995 = vpop.f32.mrf.mxu0
      %v3996 = vadd.f32 0.0, %v3995
      %v3997 = vpop.f32.mrf.mxu0
      %3998 = vmatprep.mubr.bf16.mxu0 0
      %3999 = vmatmul.mubr.bf16.gmra.mxu0 %v3905
      %v4000 = vpop.f32.mrf.mxu0
      %v4001 = vadd.f32 0.0, %v4000
      %v4002 = vpop.f32.mrf.mxu0
      %v4003 = vpop.f32.mrf.mxu0
      %v4004 = vadd.f32 0.0, %v4003
      %v4005 = vpop.f32.mrf.mxu0
      %4006 = vdwg.mxu0
      %v4007 = vadd.f32 %v3777, %v3945
      %v4008 = vadd.f32 %v3778, %v3948
      %v4009 = vadd.f32 %v3779, %v3953
      %v4010 = vadd.f32 %v3780, %v3956
      %v4011 = vadd.f32 %v3781, %v3961
      %v4012 = vadd.f32 %v3782, %v3964
      %v4013 = vadd.f32 %v3783, %v3969
      %v4014 = vadd.f32 %v3784, %v3972
      %v4015 = vadd.f32 %v3785, %v3977
      %v4016 = vadd.f32 %v3786, %v3980
      %v4017 = vadd.f32 %v3787, %v3985
      %v4018 = vadd.f32 %v3788, %v3988
      %v4019 = vadd.f32 %v3789, %v3993
      %v4020 = vadd.f32 %v3790, %v3996
      %v4021 = vadd.f32 %v3791, %v4001
      %v4022 = vadd.f32 %v3792, %v4004
      %s4023 = scalar_lea.vmem %s20, 24
      %v4024 = vld [vmem:[%s4023] sm:$0x3]
      %v4027 = vunpack.c.l.b16 %v3247
      %v4028 = vunpack.c.l.b16 %v3248
      %v4029 = vpack.c.b16 %v4028, %v4027
      %v4031 = vsel %vm1888, %v4029, 0
      %v4034 = vsel %vm1913, %v4024, 0
      %4036 = vmatprep.subr.bf16.mxu0 0
      %4037 = vmatpush1.bf16.msra.mxu0 0
      %4038 = vmatprep.subr.bf16.mxu0 0
      %4039 = vmatpush1.bf16.msra.mxu0 0
      %4040 = vmatprep.subr.bf16.mxu0 0
      %4041 = vmatpush1.bf16.msra.mxu0 0
      %4042 = vmatprep.subr.bf16.mxu0 0
      %4043 = vmatpush1.bf16.msra.mxu0 0
      %4044 = vmatprep.subr.bf16.mxu0 0
      %4045 = vmatpush1.bf16.msra.mxu0 0
      %4046 = vmatprep.subr.bf16.mxu0 0
      %4047 = vmatpush1.bf16.msra.mxu0 0
      %4048 = vmatprep.subr.bf16.mxu0 0
      %4049 = vmatpush1.bf16.msra.mxu0 0
      %4050 = vmatprep.subr.bf16.mxu0 0
      %4051 = vmatpush1.bf16.msra.mxu0 %v4034
      %4052 = vmatprep.subr.bf16.mxu0 0
      %4053 = vmatpush2.bf16.msra.mxu0 0
      %4054 = vmatprep.subr.bf16.mxu0 0
      %4055 = vmatpush2.bf16.msra.mxu0 0
      %4056 = vmatprep.subr.bf16.mxu0 0
      %4057 = vmatpush2.bf16.msra.mxu0 0
      %4058 = vmatprep.subr.bf16.mxu0 0
      %4059 = vmatpush2.bf16.msra.mxu0 0
      %4060 = vmatprep.subr.bf16.mxu0 0
      %4061 = vmatpush2.bf16.msra.mxu0 0
      %4062 = vmatprep.subr.bf16.mxu0 0
      %4063 = vmatpush2.bf16.msra.mxu0 0
      %4064 = vmatprep.subr.bf16.mxu0 0
      %4065 = vmatpush2.bf16.msra.mxu0 0
      %4066 = vmatprep.subr.bf16.mxu0 0
      %4067 = vmatpush2.bf16.msra.mxu0 0
      %4068 = vmatprep.mubr.bf16.mxu0 0
      %4069 = vmatmul.mubr.bf16.gmra.mxu0 %v3299
      %v4070 = vpop.f32.mrf.mxu0
      %v4071 = vadd.f32 0.0, %v4070
      %v4072 = vpop.f32.mrf.mxu0
      %v4073 = vpop.f32.mrf.mxu0
      %v4074 = vadd.f32 0.0, %v4073
      %v4075 = vpop.f32.mrf.mxu0
      %4076 = vmatprep.mubr.bf16.mxu0 0
      %4077 = vmatmul.mubr.bf16.gmra.mxu0 %v3302
      %v4078 = vpop.f32.mrf.mxu0
      %v4079 = vadd.f32 0.0, %v4078
      %v4080 = vpop.f32.mrf.mxu0
      %v4081 = vpop.f32.mrf.mxu0
      %v4082 = vadd.f32 0.0, %v4081
      %v4083 = vpop.f32.mrf.mxu0
      %4084 = vmatprep.mubr.bf16.mxu0 0
      %4085 = vmatmul.mubr.bf16.gmra.mxu0 %v3305
      %v4086 = vpop.f32.mrf.mxu0
      %v4087 = vadd.f32 0.0, %v4086
      %v4088 = vpop.f32.mrf.mxu0
      %v4089 = vpop.f32.mrf.mxu0
      %v4090 = vadd.f32 0.0, %v4089
      %v4091 = vpop.f32.mrf.mxu0
      %4092 = vmatprep.mubr.bf16.mxu0 0
      %4093 = vmatmul.mubr.bf16.gmra.mxu0 %v3308
      %v4094 = vpop.f32.mrf.mxu0
      %v4095 = vadd.f32 0.0, %v4094
      %v4096 = vpop.f32.mrf.mxu0
      %v4097 = vpop.f32.mrf.mxu0
      %v4098 = vadd.f32 0.0, %v4097
      %v4099 = vpop.f32.mrf.mxu0
      %4100 = vmatprep.mubr.bf16.mxu0 0
      %4101 = vmatmul.mubr.bf16.gmra.mxu0 %v3311
      %v4102 = vpop.f32.mrf.mxu0
      %v4103 = vadd.f32 0.0, %v4102
      %v4104 = vpop.f32.mrf.mxu0
      %v4105 = vpop.f32.mrf.mxu0
      %v4106 = vadd.f32 0.0, %v4105
      %v4107 = vpop.f32.mrf.mxu0
      %4108 = vmatprep.mubr.bf16.mxu0 0
      %4109 = vmatmul.mubr.bf16.gmra.mxu0 %v3314
      %v4110 = vpop.f32.mrf.mxu0
      %v4111 = vadd.f32 0.0, %v4110
      %v4112 = vpop.f32.mrf.mxu0
      %v4113 = vpop.f32.mrf.mxu0
      %v4114 = vadd.f32 0.0, %v4113
      %v4115 = vpop.f32.mrf.mxu0
      %4116 = vmatprep.mubr.bf16.mxu0 0
      %4117 = vmatmul.mubr.bf16.gmra.mxu0 %v3317
      %v4118 = vpop.f32.mrf.mxu0
      %v4119 = vadd.f32 0.0, %v4118
      %v4120 = vpop.f32.mrf.mxu0
      %v4121 = vpop.f32.mrf.mxu0
      %v4122 = vadd.f32 0.0, %v4121
      %v4123 = vpop.f32.mrf.mxu0
      %4124 = vmatprep.mubr.bf16.mxu0 0
      %4125 = vmatmul.mubr.bf16.gmra.mxu0 %v4031
      %v4126 = vpop.f32.mrf.mxu0
      %v4127 = vadd.f32 0.0, %v4126
      %v4128 = vpop.f32.mrf.mxu0
      %v4129 = vpop.f32.mrf.mxu0
      %v4130 = vadd.f32 0.0, %v4129
      %v4131 = vpop.f32.mrf.mxu0
      %4132 = vdwg.mxu0
      %v4133 = vadd.f32 %v4007, %v4071
      %v4134 = vadd.f32 %v4008, %v4074
      %v4135 = vadd.f32 %v4009, %v4079
      %v4136 = vadd.f32 %v4010, %v4082
      %v4137 = vadd.f32 %v4011, %v4087
      %v4138 = vadd.f32 %v4012, %v4090
      %v4139 = vadd.f32 %v4013, %v4095
      %v4140 = vadd.f32 %v4014, %v4098
      %v4141 = vadd.f32 %v4015, %v4103
      %v4142 = vadd.f32 %v4016, %v4106
      %v4143 = vadd.f32 %v4017, %v4111
      %v4144 = vadd.f32 %v4018, %v4114
      %v4145 = vadd.f32 %v4019, %v4119
      %v4146 = vadd.f32 %v4020, %v4122
      %v4147 = vadd.f32 %v4021, %v4127
      %v4148 = vadd.f32 %v4022, %v4130
      %v4150 = vshrl.u32 %v3247, 16
      %v4152 = vrot.slane %v4150, 4
      %v4153 = vshll.u32 %v3247, 16
      %v4155 = vrot.slane %v4153, 5
      %v4156 = vor.u32 %v4152, %v4155
      %v4157 = vrot.slane %v4156, 4
      %v4159 = vshll.u32 %v3248, 16
      %v4161 = vrot.slane %v4159, 5
      %v4162 = vsel %vm1669, %v4157, %v4161
      %v4163 = vshrl.u32 %v3248, 16
      %v4165 = vrot.slane %v4163, 4
      %v4166 = vor.u32 %v4165, %v4161
      %v4167 = vrot.slane %v4166, 4
      %v4169 = vshll.u32 %v3249, 16
      %v4171 = vrot.slane %v4169, 5
      %v4172 = vsel %vm1669, %v4167, %v4171
      %s4173 = scalar_lea.vmem %s20, 26
      %v4174 = vld [vmem:[%s4173] sm:$0x3]
      %v4175 = vunpack.c.l.b16 %v4162
      %v4176 = vunpack.c.l.b16 %v4172
      %v4177 = vpack.c.b16 %v4176, %v4175
      %v4179 = vsel %vm1888, %v4177, 0
      %v4182 = vsel %vm1913, %v4174, 0
      %4184 = vmatprep.subr.bf16.mxu0 0
      %4185 = vmatpush1.bf16.msra.mxu0 0
      %4186 = vmatprep.subr.bf16.mxu0 0
      %4187 = vmatpush1.bf16.msra.mxu0 0
      %4188 = vmatprep.subr.bf16.mxu0 0
      %4189 = vmatpush1.bf16.msra.mxu0 0
      %4190 = vmatprep.subr.bf16.mxu0 0
      %4191 = vmatpush1.bf16.msra.mxu0 0
      %4192 = vmatprep.subr.bf16.mxu0 0
      %4193 = vmatpush1.bf16.msra.mxu0 0
      %4194 = vmatprep.subr.bf16.mxu0 0
      %4195 = vmatpush1.bf16.msra.mxu0 0
      %4196 = vmatprep.subr.bf16.mxu0 0
      %4197 = vmatpush1.bf16.msra.mxu0 0
      %4198 = vmatprep.subr.bf16.mxu0 0
      %4199 = vmatpush1.bf16.msra.mxu0 %v4182
      %4200 = vmatprep.subr.bf16.mxu0 0
      %4201 = vmatpush2.bf16.msra.mxu0 0
      %4202 = vmatprep.subr.bf16.mxu0 0
      %4203 = vmatpush2.bf16.msra.mxu0 0
      %4204 = vmatprep.subr.bf16.mxu0 0
      %4205 = vmatpush2.bf16.msra.mxu0 0
      %4206 = vmatprep.subr.bf16.mxu0 0
      %4207 = vmatpush2.bf16.msra.mxu0 0
      %4208 = vmatprep.subr.bf16.mxu0 0
      %4209 = vmatpush2.bf16.msra.mxu0 0
      %4210 = vmatprep.subr.bf16.mxu0 0
      %4211 = vmatpush2.bf16.msra.mxu0 0
      %4212 = vmatprep.subr.bf16.mxu0 0
      %4213 = vmatpush2.bf16.msra.mxu0 0
      %4214 = vmatprep.subr.bf16.mxu0 0
      %4215 = vmatpush2.bf16.msra.mxu0 0
      %4216 = vmatprep.mubr.bf16.mxu0 0
      %4217 = vmatmul.mubr.bf16.gmra.mxu0 %v3657
      %v4218 = vpop.f32.mrf.mxu0
      %v4219 = vadd.f32 0.0, %v4218
      %v4220 = vpop.f32.mrf.mxu0
      %v4221 = vpop.f32.mrf.mxu0
      %v4222 = vadd.f32 0.0, %v4221
      %v4223 = vpop.f32.mrf.mxu0
      %4224 = vmatprep.mubr.bf16.mxu0 0
      %4225 = vmatmul.mubr.bf16.gmra.mxu0 %v3660
      %v4226 = vpop.f32.mrf.mxu0
      %v4227 = vadd.f32 0.0, %v4226
      %v4228 = vpop.f32.mrf.mxu0
      %v4229 = vpop.f32.mrf.mxu0
      %v4230 = vadd.f32 0.0, %v4229
      %v4231 = vpop.f32.mrf.mxu0
      %4232 = vmatprep.mubr.bf16.mxu0 0
      %4233 = vmatmul.mubr.bf16.gmra.mxu0 %v3663
      %v4234 = vpop.f32.mrf.mxu0
      %v4235 = vadd.f32 0.0, %v4234
      %v4236 = vpop.f32.mrf.mxu0
      %v4237 = vpop.f32.mrf.mxu0
      %v4238 = vadd.f32 0.0, %v4237
      %v4239 = vpop.f32.mrf.mxu0
      %4240 = vmatprep.mubr.bf16.mxu0 0
      %4241 = vmatmul.mubr.bf16.gmra.mxu0 %v3666
      %v4242 = vpop.f32.mrf.mxu0
      %v4243 = vadd.f32 0.0, %v4242
      %v4244 = vpop.f32.mrf.mxu0
      %v4245 = vpop.f32.mrf.mxu0
      %v4246 = vadd.f32 0.0, %v4245
      %v4247 = vpop.f32.mrf.mxu0
      %4248 = vmatprep.mubr.bf16.mxu0 0
      %4249 = vmatmul.mubr.bf16.gmra.mxu0 %v3669
      %v4250 = vpop.f32.mrf.mxu0
      %v4251 = vadd.f32 0.0, %v4250
      %v4252 = vpop.f32.mrf.mxu0
      %v4253 = vpop.f32.mrf.mxu0
      %v4254 = vadd.f32 0.0, %v4253
      %v4255 = vpop.f32.mrf.mxu0
      %4256 = vmatprep.mubr.bf16.mxu0 0
      %4257 = vmatmul.mubr.bf16.gmra.mxu0 %v3672
      %v4258 = vpop.f32.mrf.mxu0
      %v4259 = vadd.f32 0.0, %v4258
      %v4260 = vpop.f32.mrf.mxu0
      %v4261 = vpop.f32.mrf.mxu0
      %v4262 = vadd.f32 0.0, %v4261
      %v4263 = vpop.f32.mrf.mxu0
      %4264 = vmatprep.mubr.bf16.mxu0 0
      %4265 = vmatmul.mubr.bf16.gmra.mxu0 %v3675
      %v4266 = vpop.f32.mrf.mxu0
      %v4267 = vadd.f32 0.0, %v4266
      %v4268 = vpop.f32.mrf.mxu0
      %v4269 = vpop.f32.mrf.mxu0
      %v4270 = vadd.f32 0.0, %v4269
      %v4271 = vpop.f32.mrf.mxu0
      %4272 = vmatprep.mubr.bf16.mxu0 0
      %4273 = vmatmul.mubr.bf16.gmra.mxu0 %v4179
      %v4274 = vpop.f32.mrf.mxu0
      %v4275 = vadd.f32 0.0, %v4274
      %v4276 = vpop.f32.mrf.mxu0
      %v4277 = vpop.f32.mrf.mxu0
      %v4278 = vadd.f32 0.0, %v4277
      %v4279 = vpop.f32.mrf.mxu0
      %4280 = vdwg.mxu0
      %v4281 = vadd.f32 %v4133, %v4219
      %v4282 = vadd.f32 %v4134, %v4222
      %v4283 = vadd.f32 %v4135, %v4227
      %v4284 = vadd.f32 %v4136, %v4230
      %v4285 = vadd.f32 %v4137, %v4235
      %v4286 = vadd.f32 %v4138, %v4238
      %v4287 = vadd.f32 %v4139, %v4243
      %v4288 = vadd.f32 %v4140, %v4246
      %v4289 = vadd.f32 %v4141, %v4251
      %v4290 = vadd.f32 %v4142, %v4254
      %v4291 = vadd.f32 %v4143, %v4259
      %v4292 = vadd.f32 %v4144, %v4262
      %v4293 = vadd.f32 %v4145, %v4267
      %v4294 = vadd.f32 %v4146, %v4270
      %v4295 = vadd.f32 %v4147, %v4275
      %v4296 = vadd.f32 %v4148, %v4278
      %v4298 = vrot.slane %v3247, 5
      %v4299 = vrot.slane %v4298, 4
      %v4300 = vrot.slane %v3248, 5
      %v4301 = vsel %vm2188, %v4299, %v4300
      %v4302 = vrot.slane %v4300, 4
      %v4303 = vrot.slane %v3249, 5
      %v4304 = vsel %vm2188, %v4302, %v4303
      %s4305 = scalar_lea.vmem %s20, 28
      %v4306 = vld [vmem:[%s4305] sm:$0x3]
      %v4307 = vunpack.c.l.b16 %v4301
      %v4308 = vunpack.c.l.b16 %v4304
      %v4309 = vpack.c.b16 %v4308, %v4307
      %v4311 = vsel %vm1888, %v4309, 0
      %v4314 = vsel %vm1913, %v4306, 0
      %4316 = vmatprep.subr.bf16.mxu0 0
      %4317 = vmatpush1.bf16.msra.mxu0 0
      %4318 = vmatprep.subr.bf16.mxu0 0
      %4319 = vmatpush1.bf16.msra.mxu0 0
      %4320 = vmatprep.subr.bf16.mxu0 0
      %4321 = vmatpush1.bf16.msra.mxu0 0
      %4322 = vmatprep.subr.bf16.mxu0 0
      %4323 = vmatpush1.bf16.msra.mxu0 0
      %4324 = vmatprep.subr.bf16.mxu0 0
      %4325 = vmatpush1.bf16.msra.mxu0 0
      %4326 = vmatprep.subr.bf16.mxu0 0
      %4327 = vmatpush1.bf16.msra.mxu0 0
      %4328 = vmatprep.subr.bf16.mxu0 0
      %4329 = vmatpush1.bf16.msra.mxu0 0
      %4330 = vmatprep.subr.bf16.mxu0 0
      %4331 = vmatpush1.bf16.msra.mxu0 %v4314
      %4332 = vmatprep.subr.bf16.mxu0 0
      %4333 = vmatpush2.bf16.msra.mxu0 0
      %4334 = vmatprep.subr.bf16.mxu0 0
      %4335 = vmatpush2.bf16.msra.mxu0 0
      %4336 = vmatprep.subr.bf16.mxu0 0
      %4337 = vmatpush2.bf16.msra.mxu0 0
      %4338 = vmatprep.subr.bf16.mxu0 0
      %4339 = vmatpush2.bf16.msra.mxu0 0
      %4340 = vmatprep.subr.bf16.mxu0 0
      %4341 = vmatpush2.bf16.msra.mxu0 0
      %4342 = vmatprep.subr.bf16.mxu0 0
      %4343 = vmatpush2.bf16.msra.mxu0 0
      %4344 = vmatprep.subr.bf16.mxu0 0
      %4345 = vmatpush2.bf16.msra.mxu0 0
      %4346 = vmatprep.subr.bf16.mxu0 0
      %4347 = vmatpush2.bf16.msra.mxu0 0
      %4348 = vmatprep.mubr.bf16.mxu0 0
      %4349 = vmatmul.mubr.bf16.gmra.mxu0 %v3887
      %v4350 = vpop.f32.mrf.mxu0
      %v4351 = vadd.f32 0.0, %v4350
      %v4352 = vpop.f32.mrf.mxu0
      %v4353 = vpop.f32.mrf.mxu0
      %v4354 = vadd.f32 0.0, %v4353
      %v4355 = vpop.f32.mrf.mxu0
      %4356 = vmatprep.mubr.bf16.mxu0 0
      %4357 = vmatmul.mubr.bf16.gmra.mxu0 %v3890
      %v4358 = vpop.f32.mrf.mxu0
      %v4359 = vadd.f32 0.0, %v4358
      %v4360 = vpop.f32.mrf.mxu0
      %v4361 = vpop.f32.mrf.mxu0
      %v4362 = vadd.f32 0.0, %v4361
      %v4363 = vpop.f32.mrf.mxu0
      %4364 = vmatprep.mubr.bf16.mxu0 0
      %4365 = vmatmul.mubr.bf16.gmra.mxu0 %v3893
      %v4366 = vpop.f32.mrf.mxu0
      %v4367 = vadd.f32 0.0, %v4366
      %v4368 = vpop.f32.mrf.mxu0
      %v4369 = vpop.f32.mrf.mxu0
      %v4370 = vadd.f32 0.0, %v4369
      %v4371 = vpop.f32.mrf.mxu0
      %4372 = vmatprep.mubr.bf16.mxu0 0
      %4373 = vmatmul.mubr.bf16.gmra.mxu0 %v3896
      %v4374 = vpop.f32.mrf.mxu0
      %v4375 = vadd.f32 0.0, %v4374
      %v4376 = vpop.f32.mrf.mxu0
      %v4377 = vpop.f32.mrf.mxu0
      %v4378 = vadd.f32 0.0, %v4377
      %v4379 = vpop.f32.mrf.mxu0
      %4380 = vmatprep.mubr.bf16.mxu0 0
      %4381 = vmatmul.mubr.bf16.gmra.mxu0 %v3899
      %v4382 = vpop.f32.mrf.mxu0
      %v4383 = vadd.f32 0.0, %v4382
      %v4384 = vpop.f32.mrf.mxu0
      %v4385 = vpop.f32.mrf.mxu0
      %v4386 = vadd.f32 0.0, %v4385
      %v4387 = vpop.f32.mrf.mxu0
      %4388 = vmatprep.mubr.bf16.mxu0 0
      %4389 = vmatmul.mubr.bf16.gmra.mxu0 %v3902
      %v4390 = vpop.f32.mrf.mxu0
      %v4391 = vadd.f32 0.0, %v4390
      %v4392 = vpop.f32.mrf.mxu0
      %v4393 = vpop.f32.mrf.mxu0
      %v4394 = vadd.f32 0.0, %v4393
      %v4395 = vpop.f32.mrf.mxu0
      %4396 = vmatprep.mubr.bf16.mxu0 0
      %4397 = vmatmul.mubr.bf16.gmra.mxu0 %v3905
      %v4398 = vpop.f32.mrf.mxu0
      %v4399 = vadd.f32 0.0, %v4398
      %v4400 = vpop.f32.mrf.mxu0
      %v4401 = vpop.f32.mrf.mxu0
      %v4402 = vadd.f32 0.0, %v4401
      %v4403 = vpop.f32.mrf.mxu0
      %4404 = vmatprep.mubr.bf16.mxu0 0
      %4405 = vmatmul.mubr.bf16.gmra.mxu0 %v4311
      %v4406 = vpop.f32.mrf.mxu0
      %v4407 = vadd.f32 0.0, %v4406
      %v4408 = vpop.f32.mrf.mxu0
      %v4409 = vpop.f32.mrf.mxu0
      %v4410 = vadd.f32 0.0, %v4409
      %v4411 = vpop.f32.mrf.mxu0
      %4412 = vdwg.mxu0
      %v4413 = vadd.f32 %v4281, %v4351
      %v4414 = vadd.f32 %v4282, %v4354
      %v4415 = vadd.f32 %v4283, %v4359
      %v4416 = vadd.f32 %v4284, %v4362
      %v4417 = vadd.f32 %v4285, %v4367
      %v4418 = vadd.f32 %v4286, %v4370
      %v4419 = vadd.f32 %v4287, %v4375
      %v4420 = vadd.f32 %v4288, %v4378
      %v4421 = vadd.f32 %v4289, %v4383
      %v4422 = vadd.f32 %v4290, %v4386
      %v4423 = vadd.f32 %v4291, %v4391
      %v4424 = vadd.f32 %v4292, %v4394
      %v4425 = vadd.f32 %v4293, %v4399
      %v4426 = vadd.f32 %v4294, %v4402
      %v4427 = vadd.f32 %v4295, %v4407
      %v4428 = vadd.f32 %v4296, %v4410
      %s4429 = scalar_lea.vmem %s20, 30
      %v4430 = vld [vmem:[%s4429] sm:$0x3]
      %v4433 = vunpack.c.l.b16 %v3250
      %v4434 = vunpack.c.l.b16 %v3251
      %v4435 = vpack.c.b16 %v4434, %v4433
      %v4437 = vsel %vm1888, %v4435, 0
      %v4440 = vsel %vm1913, %v4430, 0
      %4442 = vmatprep.subr.bf16.mxu0 0
      %4443 = vmatpush1.bf16.msra.mxu0 0
      %4444 = vmatprep.subr.bf16.mxu0 0
      %4445 = vmatpush1.bf16.msra.mxu0 0
      %4446 = vmatprep.subr.bf16.mxu0 0
      %4447 = vmatpush1.bf16.msra.mxu0 0
      %4448 = vmatprep.subr.bf16.mxu0 0
      %4449 = vmatpush1.bf16.msra.mxu0 0
      %4450 = vmatprep.subr.bf16.mxu0 0
      %4451 = vmatpush1.bf16.msra.mxu0 0
      %4452 = vmatprep.subr.bf16.mxu0 0
      %4453 = vmatpush1.bf16.msra.mxu0 0
      %4454 = vmatprep.subr.bf16.mxu0 0
      %4455 = vmatpush1.bf16.msra.mxu0 0
      %4456 = vmatprep.subr.bf16.mxu0 0
      %4457 = vmatpush1.bf16.msra.mxu0 %v4440
      %4458 = vmatprep.subr.bf16.mxu0 0
      %4459 = vmatpush2.bf16.msra.mxu0 0
      %4460 = vmatprep.subr.bf16.mxu0 0
      %4461 = vmatpush2.bf16.msra.mxu0 0
      %4462 = vmatprep.subr.bf16.mxu0 0
      %4463 = vmatpush2.bf16.msra.mxu0 0
      %4464 = vmatprep.subr.bf16.mxu0 0
      %4465 = vmatpush2.bf16.msra.mxu0 0
      %4466 = vmatprep.subr.bf16.mxu0 0
      %4467 = vmatpush2.bf16.msra.mxu0 0
      %4468 = vmatprep.subr.bf16.mxu0 0
      %4469 = vmatpush2.bf16.msra.mxu0 0
      %4470 = vmatprep.subr.bf16.mxu0 0
      %4471 = vmatpush2.bf16.msra.mxu0 0
      %4472 = vmatprep.subr.bf16.mxu0 0
      %4473 = vmatpush2.bf16.msra.mxu0 0
      %4474 = vmatprep.mubr.bf16.mxu0 0
      %4475 = vmatmul.mubr.bf16.gmra.mxu0 %v3302
      %v4476 = vpop.f32.mrf.mxu0
      %v4477 = vadd.f32 0.0, %v4476
      %v4478 = vpop.f32.mrf.mxu0
      %v4479 = vpop.f32.mrf.mxu0
      %v4480 = vadd.f32 0.0, %v4479
      %v4481 = vpop.f32.mrf.mxu0
      %4482 = vmatprep.mubr.bf16.mxu0 0
      %4483 = vmatmul.mubr.bf16.gmra.mxu0 %v3305
      %v4484 = vpop.f32.mrf.mxu0
      %v4485 = vadd.f32 0.0, %v4484
      %v4486 = vpop.f32.mrf.mxu0
      %v4487 = vpop.f32.mrf.mxu0
      %v4488 = vadd.f32 0.0, %v4487
      %v4489 = vpop.f32.mrf.mxu0
      %4490 = vmatprep.mubr.bf16.mxu0 0
      %4491 = vmatmul.mubr.bf16.gmra.mxu0 %v3308
      %v4492 = vpop.f32.mrf.mxu0
      %v4493 = vadd.f32 0.0, %v4492
      %v4494 = vpop.f32.mrf.mxu0
      %v4495 = vpop.f32.mrf.mxu0
      %v4496 = vadd.f32 0.0, %v4495
      %v4497 = vpop.f32.mrf.mxu0
      %4498 = vmatprep.mubr.bf16.mxu0 0
      %4499 = vmatmul.mubr.bf16.gmra.mxu0 %v3311
      %v4500 = vpop.f32.mrf.mxu0
      %v4501 = vadd.f32 0.0, %v4500
      %v4502 = vpop.f32.mrf.mxu0
      %v4503 = vpop.f32.mrf.mxu0
      %v4504 = vadd.f32 0.0, %v4503
      %v4505 = vpop.f32.mrf.mxu0
      %4506 = vmatprep.mubr.bf16.mxu0 0
      %4507 = vmatmul.mubr.bf16.gmra.mxu0 %v3314
      %v4508 = vpop.f32.mrf.mxu0
      %v4509 = vadd.f32 0.0, %v4508
      %v4510 = vpop.f32.mrf.mxu0
      %v4511 = vpop.f32.mrf.mxu0
      %v4512 = vadd.f32 0.0, %v4511
      %v4513 = vpop.f32.mrf.mxu0
      %4514 = vmatprep.mubr.bf16.mxu0 0
      %4515 = vmatmul.mubr.bf16.gmra.mxu0 %v3317
      %v4516 = vpop.f32.mrf.mxu0
      %v4517 = vadd.f32 0.0, %v4516
      %v4518 = vpop.f32.mrf.mxu0
      %v4519 = vpop.f32.mrf.mxu0
      %v4520 = vadd.f32 0.0, %v4519
      %v4521 = vpop.f32.mrf.mxu0
      %4522 = vmatprep.mubr.bf16.mxu0 0
      %4523 = vmatmul.mubr.bf16.gmra.mxu0 %v4031
      %v4524 = vpop.f32.mrf.mxu0
      %v4525 = vadd.f32 0.0, %v4524
      %v4526 = vpop.f32.mrf.mxu0
      %v4527 = vpop.f32.mrf.mxu0
      %v4528 = vadd.f32 0.0, %v4527
      %v4529 = vpop.f32.mrf.mxu0
      %4530 = vmatprep.mubr.bf16.mxu0 0
      %4531 = vmatmul.mubr.bf16.gmra.mxu0 %v4437
      %v4532 = vpop.f32.mrf.mxu0
      %v4533 = vadd.f32 0.0, %v4532
      %v4534 = vpop.f32.mrf.mxu0
      %v4535 = vpop.f32.mrf.mxu0
      %v4536 = vadd.f32 0.0, %v4535
      %v4537 = vpop.f32.mrf.mxu0
      %4538 = vdwg.mxu0
      %v4539 = vadd.f32 %v4413, %v4477
      %v4540 = vadd.f32 %v4414, %v4480
      %v4541 = vadd.f32 %v4415, %v4485
      %v4542 = vadd.f32 %v4416, %v4488
      %v4543 = vadd.f32 %v4417, %v4493
      %v4544 = vadd.f32 %v4418, %v4496
      %v4545 = vadd.f32 %v4419, %v4501
      %v4546 = vadd.f32 %v4420, %v4504
      %v4547 = vadd.f32 %v4421, %v4509
      %v4548 = vadd.f32 %v4422, %v4512
      %v4549 = vadd.f32 %v4423, %v4517
      %v4550 = vadd.f32 %v4424, %v4520
      %v4551 = vadd.f32 %v4425, %v4525
      %v4552 = vadd.f32 %v4426, %v4528
      %v4553 = vadd.f32 %v4427, %v4533
      %v4554 = vadd.f32 %v4428, %v4536
      %v4556 = vshrl.u32 %v3250, 16
      %v4558 = vrot.slane %v4556, 4
      %v4559 = vshll.u32 %v3250, 16
      %v4561 = vrot.slane %v4559, 5
      %v4562 = vor.u32 %v4558, %v4561
      %v4563 = vrot.slane %v4562, 4
      %v4565 = vshll.u32 %v3251, 16
      %v4567 = vrot.slane %v4565, 5
      %v4568 = vsel %vm1669, %v4563, %v4567
      %v4569 = vshrl.u32 %v3251, 16
      %v4571 = vrot.slane %v4569, 4
      %v4572 = vor.u32 %v4571, %v4567
      %v4573 = vrot.slane %v4572, 4
      %v4575 = vshll.u32 %v3252, 16
      %v4577 = vrot.slane %v4575, 5
      %v4578 = vsel %vm1669, %v4573, %v4577
      %s4579 = scalar_lea.vmem %s20, 32
      %v4580 = vld [vmem:[%s4579] sm:$0x3]
      %v4581 = vunpack.c.l.b16 %v4568
      %v4582 = vunpack.c.l.b16 %v4578
      %v4583 = vpack.c.b16 %v4582, %v4581
      %v4585 = vsel %vm1888, %v4583, 0
      %v4588 = vsel %vm1913, %v4580, 0
      %4590 = vmatprep.subr.bf16.mxu0 0
      %4591 = vmatpush1.bf16.msra.mxu0 0
      %4592 = vmatprep.subr.bf16.mxu0 0
      %4593 = vmatpush1.bf16.msra.mxu0 0
      %4594 = vmatprep.subr.bf16.mxu0 0
      %4595 = vmatpush1.bf16.msra.mxu0 0
      %4596 = vmatprep.subr.bf16.mxu0 0
      %4597 = vmatpush1.bf16.msra.mxu0 0
      %4598 = vmatprep.subr.bf16.mxu0 0
      %4599 = vmatpush1.bf16.msra.mxu0 0
      %4600 = vmatprep.subr.bf16.mxu0 0
      %4601 = vmatpush1.bf16.msra.mxu0 0
      %4602 = vmatprep.subr.bf16.mxu0 0
      %4603 = vmatpush1.bf16.msra.mxu0 0
      %4604 = vmatprep.subr.bf16.mxu0 0
      %4605 = vmatpush1.bf16.msra.mxu0 %v4588
      %4606 = vmatprep.subr.bf16.mxu0 0
      %4607 = vmatpush2.bf16.msra.mxu0 0
      %4608 = vmatprep.subr.bf16.mxu0 0
      %4609 = vmatpush2.bf16.msra.mxu0 0
      %4610 = vmatprep.subr.bf16.mxu0 0
      %4611 = vmatpush2.bf16.msra.mxu0 0
      %4612 = vmatprep.subr.bf16.mxu0 0
      %4613 = vmatpush2.bf16.msra.mxu0 0
      %4614 = vmatprep.subr.bf16.mxu0 0
      %4615 = vmatpush2.bf16.msra.mxu0 0
      %4616 = vmatprep.subr.bf16.mxu0 0
      %4617 = vmatpush2.bf16.msra.mxu0 0
      %4618 = vmatprep.subr.bf16.mxu0 0
      %4619 = vmatpush2.bf16.msra.mxu0 0
      %4620 = vmatprep.subr.bf16.mxu0 0
      %4621 = vmatpush2.bf16.msra.mxu0 0
      %4622 = vmatprep.mubr.bf16.mxu0 0
      %4623 = vmatmul.mubr.bf16.gmra.mxu0 %v3660
      %v4624 = vpop.f32.mrf.mxu0
      %v4625 = vadd.f32 0.0, %v4624
      %v4626 = vpop.f32.mrf.mxu0
      %v4627 = vpop.f32.mrf.mxu0
      %v4628 = vadd.f32 0.0, %v4627
      %v4629 = vpop.f32.mrf.mxu0
      %4630 = vmatprep.mubr.bf16.mxu0 0
      %4631 = vmatmul.mubr.bf16.gmra.mxu0 %v3663
      %v4632 = vpop.f32.mrf.mxu0
      %v4633 = vadd.f32 0.0, %v4632
      %v4634 = vpop.f32.mrf.mxu0
      %v4635 = vpop.f32.mrf.mxu0
      %v4636 = vadd.f32 0.0, %v4635
      %v4637 = vpop.f32.mrf.mxu0
      %4638 = vmatprep.mubr.bf16.mxu0 0
      %4639 = vmatmul.mubr.bf16.gmra.mxu0 %v3666
      %v4640 = vpop.f32.mrf.mxu0
      %v4641 = vadd.f32 0.0, %v4640
      %v4642 = vpop.f32.mrf.mxu0
      %v4643 = vpop.f32.mrf.mxu0
      %v4644 = vadd.f32 0.0, %v4643
      %v4645 = vpop.f32.mrf.mxu0
      %4646 = vmatprep.mubr.bf16.mxu0 0
      %4647 = vmatmul.mubr.bf16.gmra.mxu0 %v3669
      %v4648 = vpop.f32.mrf.mxu0
      %v4649 = vadd.f32 0.0, %v4648
      %v4650 = vpop.f32.mrf.mxu0
      %v4651 = vpop.f32.mrf.mxu0
      %v4652 = vadd.f32 0.0, %v4651
      %v4653 = vpop.f32.mrf.mxu0
      %4654 = vmatprep.mubr.bf16.mxu0 0
      %4655 = vmatmul.mubr.bf16.gmra.mxu0 %v3672
      %v4656 = vpop.f32.mrf.mxu0
      %v4657 = vadd.f32 0.0, %v4656
      %v4658 = vpop.f32.mrf.mxu0
      %v4659 = vpop.f32.mrf.mxu0
      %v4660 = vadd.f32 0.0, %v4659
      %v4661 = vpop.f32.mrf.mxu0
      %4662 = vmatprep.mubr.bf16.mxu0 0
      %4663 = vmatmul.mubr.bf16.gmra.mxu0 %v3675
      %v4664 = vpop.f32.mrf.mxu0
      %v4665 = vadd.f32 0.0, %v4664
      %v4666 = vpop.f32.mrf.mxu0
      %v4667 = vpop.f32.mrf.mxu0
      %v4668 = vadd.f32 0.0, %v4667
      %v4669 = vpop.f32.mrf.mxu0
      %4670 = vmatprep.mubr.bf16.mxu0 0
      %4671 = vmatmul.mubr.bf16.gmra.mxu0 %v4179
      %v4672 = vpop.f32.mrf.mxu0
      %v4673 = vadd.f32 0.0, %v4672
      %v4674 = vpop.f32.mrf.mxu0
      %v4675 = vpop.f32.mrf.mxu0
      %v4676 = vadd.f32 0.0, %v4675
      %v4677 = vpop.f32.mrf.mxu0
      %4678 = vmatprep.mubr.bf16.mxu0 0
      %4679 = vmatmul.mubr.bf16.gmra.mxu0 %v4585
      %v4680 = vpop.f32.mrf.mxu0
      %v4681 = vadd.f32 0.0, %v4680
      %v4682 = vpop.f32.mrf.mxu0
      %v4683 = vpop.f32.mrf.mxu0
      %v4684 = vadd.f32 0.0, %v4683
      %v4685 = vpop.f32.mrf.mxu0
      %4686 = vdwg.mxu0
      %v4687 = vadd.f32 %v4539, %v4625
      %v4688 = vadd.f32 %v4540, %v4628
      %v4689 = vadd.f32 %v4541, %v4633
      %v4690 = vadd.f32 %v4542, %v4636
      %v4691 = vadd.f32 %v4543, %v4641
      %v4692 = vadd.f32 %v4544, %v4644
      %v4693 = vadd.f32 %v4545, %v4649
      %v4694 = vadd.f32 %v4546, %v4652
      %v4695 = vadd.f32 %v4547, %v4657
      %v4696 = vadd.f32 %v4548, %v4660
      %v4697 = vadd.f32 %v4549, %v4665
      %v4698 = vadd.f32 %v4550, %v4668
      %v4699 = vadd.f32 %v4551, %v4673
      %v4700 = vadd.f32 %v4552, %v4676
      %v4701 = vadd.f32 %v4553, %v4681
      %v4702 = vadd.f32 %v4554, %v4684
      %v4704 = vrot.slane %v3250, 5
      %v4705 = vrot.slane %v4704, 4
      %v4706 = vrot.slane %v3251, 5
      %v4707 = vsel %vm2188, %v4705, %v4706
      %v4708 = vrot.slane %v4706, 4
      %v4709 = vrot.slane %v3252, 5
      %v4710 = vsel %vm2188, %v4708, %v4709
      %s4711 = scalar_lea.vmem %s20, 34
      %v4712 = vld [vmem:[%s4711] sm:$0x3]
      %v4713 = vunpack.c.l.b16 %v4707
      %v4714 = vunpack.c.l.b16 %v4710
      %v4715 = vpack.c.b16 %v4714, %v4713
      %v4717 = vsel %vm1888, %v4715, 0
      %v4720 = vsel %vm1913, %v4712, 0
      %4722 = vmatprep.subr.bf16.mxu0 0
      %4723 = vmatpush1.bf16.msra.mxu0 0
      %4724 = vmatprep.subr.bf16.mxu0 0
      %4725 = vmatpush1.bf16.msra.mxu0 0
      %4726 = vmatprep.subr.bf16.mxu0 0
      %4727 = vmatpush1.bf16.msra.mxu0 0
      %4728 = vmatprep.subr.bf16.mxu0 0
      %4729 = vmatpush1.bf16.msra.mxu0 0
      %4730 = vmatprep.subr.bf16.mxu0 0
      %4731 = vmatpush1.bf16.msra.mxu0 0
      %4732 = vmatprep.subr.bf16.mxu0 0
      %4733 = vmatpush1.bf16.msra.mxu0 0
      %4734 = vmatprep.subr.bf16.mxu0 0
      %4735 = vmatpush1.bf16.msra.mxu0 0
      %4736 = vmatprep.subr.bf16.mxu0 0
      %4737 = vmatpush1.bf16.msra.mxu0 %v4720
      %4738 = vmatprep.subr.bf16.mxu0 0
      %4739 = vmatpush2.bf16.msra.mxu0 0
      %4740 = vmatprep.subr.bf16.mxu0 0
      %4741 = vmatpush2.bf16.msra.mxu0 0
      %4742 = vmatprep.subr.bf16.mxu0 0
      %4743 = vmatpush2.bf16.msra.mxu0 0
      %4744 = vmatprep.subr.bf16.mxu0 0
      %4745 = vmatpush2.bf16.msra.mxu0 0
      %4746 = vmatprep.subr.bf16.mxu0 0
      %4747 = vmatpush2.bf16.msra.mxu0 0
      %4748 = vmatprep.subr.bf16.mxu0 0
      %4749 = vmatpush2.bf16.msra.mxu0 0
      %4750 = vmatprep.subr.bf16.mxu0 0
      %4751 = vmatpush2.bf16.msra.mxu0 0
      %4752 = vmatprep.subr.bf16.mxu0 0
      %4753 = vmatpush2.bf16.msra.mxu0 0
      %4754 = vmatprep.mubr.bf16.mxu0 0
      %4755 = vmatmul.mubr.bf16.gmra.mxu0 %v3890
      %v4756 = vpop.f32.mrf.mxu0
      %v4757 = vadd.f32 0.0, %v4756
      %v4758 = vpop.f32.mrf.mxu0
      %v4759 = vpop.f32.mrf.mxu0
      %v4760 = vadd.f32 0.0, %v4759
      %v4761 = vpop.f32.mrf.mxu0
      %4762 = vmatprep.mubr.bf16.mxu0 0
      %4763 = vmatmul.mubr.bf16.gmra.mxu0 %v3893
      %v4764 = vpop.f32.mrf.mxu0
      %v4765 = vadd.f32 0.0, %v4764
      %v4766 = vpop.f32.mrf.mxu0
      %v4767 = vpop.f32.mrf.mxu0
      %v4768 = vadd.f32 0.0, %v4767
      %v4769 = vpop.f32.mrf.mxu0
      %4770 = vmatprep.mubr.bf16.mxu0 0
      %4771 = vmatmul.mubr.bf16.gmra.mxu0 %v3896
      %v4772 = vpop.f32.mrf.mxu0
      %v4773 = vadd.f32 0.0, %v4772
      %v4774 = vpop.f32.mrf.mxu0
      %v4775 = vpop.f32.mrf.mxu0
      %v4776 = vadd.f32 0.0, %v4775
      %v4777 = vpop.f32.mrf.mxu0
      %4778 = vmatprep.mubr.bf16.mxu0 0
      %4779 = vmatmul.mubr.bf16.gmra.mxu0 %v3899
      %v4780 = vpop.f32.mrf.mxu0
      %v4781 = vadd.f32 0.0, %v4780
      %v4782 = vpop.f32.mrf.mxu0
      %v4783 = vpop.f32.mrf.mxu0
      %v4784 = vadd.f32 0.0, %v4783
      %v4785 = vpop.f32.mrf.mxu0
      %4786 = vmatprep.mubr.bf16.mxu0 0
      %4787 = vmatmul.mubr.bf16.gmra.mxu0 %v3902
      %v4788 = vpop.f32.mrf.mxu0
      %v4789 = vadd.f32 0.0, %v4788
      %v4790 = vpop.f32.mrf.mxu0
      %v4791 = vpop.f32.mrf.mxu0
      %v4792 = vadd.f32 0.0, %v4791
      %v4793 = vpop.f32.mrf.mxu0
      %4794 = vmatprep.mubr.bf16.mxu0 0
      %4795 = vmatmul.mubr.bf16.gmra.mxu0 %v3905
      %v4796 = vpop.f32.mrf.mxu0
      %v4797 = vadd.f32 0.0, %v4796
      %v4798 = vpop.f32.mrf.mxu0
      %v4799 = vpop.f32.mrf.mxu0
      %v4800 = vadd.f32 0.0, %v4799
      %v4801 = vpop.f32.mrf.mxu0
      %4802 = vmatprep.mubr.bf16.mxu0 0
      %4803 = vmatmul.mubr.bf16.gmra.mxu0 %v4311
      %v4804 = vpop.f32.mrf.mxu0
      %v4805 = vadd.f32 0.0, %v4804
      %v4806 = vpop.f32.mrf.mxu0
      %v4807 = vpop.f32.mrf.mxu0
      %v4808 = vadd.f32 0.0, %v4807
      %v4809 = vpop.f32.mrf.mxu0
      %4810 = vmatprep.mubr.bf16.mxu0 0
      %4811 = vmatmul.mubr.bf16.gmra.mxu0 %v4717
      %v4812 = vpop.f32.mrf.mxu0
      %v4813 = vadd.f32 0.0, %v4812
      %v4814 = vpop.f32.mrf.mxu0
      %v4815 = vpop.f32.mrf.mxu0
      %v4816 = vadd.f32 0.0, %v4815
      %v4817 = vpop.f32.mrf.mxu0
      %4818 = vdwg.mxu0
      %v4819 = vadd.f32 %v4687, %v4757
      %v4820 = vadd.f32 %v4688, %v4760
      %v4821 = vadd.f32 %v4689, %v4765
      %v4822 = vadd.f32 %v4690, %v4768
      %v4823 = vadd.f32 %v4691, %v4773
      %v4824 = vadd.f32 %v4692, %v4776
      %v4825 = vadd.f32 %v4693, %v4781
      %v4826 = vadd.f32 %v4694, %v4784
      %v4827 = vadd.f32 %v4695, %v4789
      %v4828 = vadd.f32 %v4696, %v4792
      %v4829 = vadd.f32 %v4697, %v4797
      %v4830 = vadd.f32 %v4698, %v4800
      %v4831 = vadd.f32 %v4699, %v4805
      %v4832 = vadd.f32 %v4700, %v4808
      %v4833 = vadd.f32 %v4701, %v4813
      %v4834 = vadd.f32 %v4702, %v4816
      %v4835 = vld [vmem:[%s21] sm:$0x1]
      %v4837 = vlaneseq
      %v4838 = vshrl.u32 %v4837, 7
      %v4839 = vsub.s32 0, %v4838
      %v4840 = vrot.slane %v4835, %v4839
      %v4842 = vadd.f32 %v4819, %v4840
      %v4843 = vadd.f32 %v4820, %v4840
      %v4844 = vadd.f32 %v4821, %v4840
      %v4845 = vadd.f32 %v4822, %v4840
      %v4846 = vadd.f32 %v4823, %v4840
      %v4847 = vadd.f32 %v4824, %v4840
      %v4848 = vadd.f32 %v4825, %v4840
      %v4849 = vadd.f32 %v4826, %v4840
      %v4850 = vadd.f32 %v4827, %v4840
      %v4851 = vadd.f32 %v4828, %v4840
      %v4852 = vadd.f32 %v4829, %v4840
      %v4853 = vadd.f32 %v4830, %v4840
      %v4854 = vadd.f32 %v4831, %v4840
      %v4855 = vadd.f32 %v4832, %v4840
      %v4856 = vadd.f32 %v4833, %v4840
      %v4857 = vadd.f32 %v4834, %v4840
      %4858 = vst.msk [vmem:[%s1633] sm:$0xff] %vm1888, %v4842
      %4859 = vst.msk [vmem:[%s1633 + $0x8] sm:$0xff] %vm1888, %v4843
      %4860 = vst.msk [vmem:[%s1633 + $0x10] sm:$0xff] %vm1888, %v4844
      %4861 = vst.msk [vmem:[%s1633 + $0x18] sm:$0xff] %vm1888, %v4845
      %4862 = vst.msk [vmem:[%s1633 + $0x20] sm:$0xff] %vm1888, %v4846
      %4863 = vst.msk [vmem:[%s1633 + $0x28] sm:$0xff] %vm1888, %v4847
      %4864 = vst.msk [vmem:[%s1633 + $0x30] sm:$0xff] %vm1888, %v4848
      %4865 = vst.msk [vmem:[%s1633 + $0x38] sm:$0xff] %vm1888, %v4849
      %4866 = vst.msk [vmem:[%s1633 + $0x40] sm:$0xff] %vm1888, %v4850
      %4867 = vst.msk [vmem:[%s1633 + $0x48] sm:$0xff] %vm1888, %v4851
      %4868 = vst.msk [vmem:[%s1633 + $0x50] sm:$0xff] %vm1888, %v4852
      %4869 = vst.msk [vmem:[%s1633 + $0x58] sm:$0xff] %vm1888, %v4853
      %4870 = vst.msk [vmem:[%s1633 + $0x60] sm:$0xff] %vm1888, %v4854
      %4871 = vst.msk [vmem:[%s1633 + $0x68] sm:$0xff] %vm1888, %v4855
      %4872 = vst.msk [vmem:[%s1633 + $0x70] sm:$0xff] %vm1888, %v4856
      %4873 = vst.msk [vmem:[%s1633 + $0x78] sm:$0xff] %vm1888, %v4857
      %s4874 = smul.u32 8, %s38
      %p4875 = scmp.lt.s32.totalorder %s37, 1
      %s4876 = scalar_select %p4875, %s37, 1
      %p4877 = scmp.lt.s32.totalorder %s4874, 15
      %s4878 = scalar_select %p4877, %s4874, 15
      %s4879 = smul.addr %s4878, 2
      %s4880 = smul.addr %s4876, 32
      %s4881 = sadd.s32 %s4879, %s4880
      %s4882 = smul.addr %s4881, 8
      %s4883 = scalar_lea.vmem %s22, %s4882
      // Predicated region
      $region109: #{fam_forward_nhwc.1} parent=107 // pred_check
        %p4884 = pneg %p743
      $region110: #{fam_forward_nhwc.1} parent=107 // pred_check_branch
        %4886 = sbr.rel (%p4884) target = $region112
      $region111: #{fam_forward_nhwc.1} parent=107 // pred_region
        %s4887 = smul.u32 8, %s38
      $region112: #{fam_forward_nhwc.1} parent=107 // pred_fallthru
        _
    $region108: #{fam_forward_nhwc.1} parent=5 // pred_fallthru
      _
    %p4888 = scmp.le.s32.totalorder 2, %s28
    // Predicated region
    $region113: #{fam_forward_nhwc.1} parent=5 // pred_check
      %p4889 = pneg %p4888
    $region114: #{fam_forward_nhwc.1} parent=5 // pred_check_branch
      %4891 = sbr.rel (%p4889) target = $region116
    $region115: #{fam_forward_nhwc.1} parent=5 // pred_region
      %s4892 = ssub.s32 %s28, 2
      // Predicated region
      $region117: #{fam_forward_nhwc.1} parent=115 // pred_check
        %p4893 = pneg %p749
      $region118: #{fam_forward_nhwc.1} parent=115 // pred_check_branch
        %4895 = sbr.rel (%p4893) target = $region120
      $region119: #{fam_forward_nhwc.1} parent=115 // pred_region
        %s4896 = smul.u32 8, %s40
        %p4897 = scmp.lt.s32.totalorder %s39, 1
        %s4898 = scalar_select %p4897, %s39, 1
        %p4899 = scmp.lt.s32.totalorder %s4896, 15
        %s4900 = scalar_select %p4899, %s4896, 15
        %s4901 = smul.addr %s4900, 2
        %s4902 = smul.addr %s4898, 32
        %s4903 = sadd.s32 %s4901, %s4902
        %s4904 = smul.addr %s4903, 8
        %s4905 = scalar_lea.vmem %s22, %s4904
      $region120: #{fam_forward_nhwc.1} parent=115 // pred_fallthru
        _
    $region116: #{fam_forward_nhwc.1} parent=5 // pred_fallthru
      _
  $region6: #{fam_forward_nhwc.1} parent=0 // loop_footer
    %s32 = sadd.s32 1, %s28
  $region7: #{fam_forward_nhwc.1} parent=0 // loop_footer_branch
    %27 = sbr.rel target = $region3
  $region8: #{fam_forward_nhwc.1} parent=0 // loop_exit
    _

</llo_original>
